<compile_context>
chip_gen: v6e
topology: v6e:2x2x1
jax: 0.10.0
libtpu: 0.0.40
codegen_flags: <defaults>
</compile_context>

<pallas_src>
import functools

import jax
import jax.numpy as jnp
from jax.experimental import pallas as pl
from jax.experimental.pallas import tpu as pltpu


# ----------------------------------------------------------------------------
# Model constants
# ----------------------------------------------------------------------------

VOCAB = 64          # token vocabulary
HIDDEN = 32         # text-encoder hidden size
FFN = 64            # encoder feed-forward size
UP_RATE = 4         # fixed frames-per-token (length regulator)
DEC_CH = 32         # decoder channel width
UPSAMPLES = (2, 2)  # HiFi-GAN-style upsample factors
LEAK = 0.1          # leaky-ReLU slope

HPAD = 128          # every channel-like dim zero-padded to a full 128-lane width


# ----------------------------------------------------------------------------
# In-kernel helpers (values only, static shapes)
# ----------------------------------------------------------------------------

def _shift_taps(y, lseq):
    """prev/next rows of y with zero boundaries at every per-sequence edge.

    Batch elements are packed along rows in chunks of `lseq`; pltpu.roll is a
    cheap XLU sublane rotate, and the iota mask kills the wrap-around /
    cross-sequence rows so packed sequences never leak into each other.
    y: (L, C) f32 -> (prev, next) each (L, C) f32.
    """
    L = y.shape[0]
    row = jax.lax.broadcasted_iota(jnp.int32, y.shape, 0)
    pos = row % lseq
    prev = jnp.where(pos != 0, pltpu.roll(y, 1, axis=0), 0.0)       # y[l-1]
    nxt = jnp.where(pos != lseq - 1, pltpu.roll(y, L - 1, axis=0), 0.0)  # y[l+1]
    return prev, nxt


def _conv3(y, wp_ref, wc_ref, wn_ref, b_ref, lseq):
    """k=3 'same' conv as three K=128 bf16 matmuls accumulated in f32."""
    f32 = jnp.float32
    bf16 = jnp.bfloat16
    prev, nxt = _shift_taps(y, lseq)
    acc = jnp.dot(prev.astype(bf16), wp_ref[...], preferred_element_type=f32)
    acc = acc + jnp.dot(y.astype(bf16), wc_ref[...], preferred_element_type=f32)
    acc = acc + jnp.dot(nxt.astype(bf16), wn_ref[...], preferred_element_type=f32)
    return acc + b_ref[...]


# ----------------------------------------------------------------------------
# Fused VITS kernel (one grid step = Bblk packed batch elements)
# ----------------------------------------------------------------------------

def _vits_kernel(x_ref, w1_ref, b1_ref, w2_ref, b2_ref, pw_ref, pb_ref,
                 e0_ref, e1_ref, e2_ref,
                 d0p_ref, d0c_ref, d0n_ref, d0b_ref,
                 d1p_ref, d1c_ref, d1n_ref, d1b_ref,
                 owp_ref, owc_ref, own_ref, ob_ref,
                 wav_ref, *, lseq0, lseq1):
    f32 = jnp.float32
    bf16 = jnp.bfloat16

    x = x_ref[...]                                 # (Bblk*T, HPAD) f32, packed rows
    xb = x.astype(bf16)

    # ---- text-encoder FFN block (residual), bf16 MXU / f32 epilogue --------
    hmid = jnp.dot(xb, w1_ref[...], preferred_element_type=f32) + b1_ref[...]
    hmid = jnp.maximum(hmid, 0.0)
    h = jnp.dot(hmid.astype(bf16), w2_ref[...], preferred_element_type=f32)
    h = h + b2_ref[...] + x                        # (Bblk*T, HPAD)

    # ---- latent projection at token rate (commuted before the row repeat) --
    zl = jnp.dot(h.astype(bf16), pw_ref[...], preferred_element_type=f32) + pb_ref[...]

    # ---- fixed-rate length regulator: exact f32 0/1 expansion matmul -------
    z = jnp.dot(e0_ref[...], zl, preferred_element_type=f32)   # (Bblk*T*UP_RATE, HPAD)

    # ---- HiFi-GAN-style decoder stage 0 -------------------------------------
    y = jnp.dot(e1_ref[...], z, preferred_element_type=f32)    # x2 nearest upsample
    y = _conv3(y, d0p_ref, d0c_ref, d0n_ref, d0b_ref, lseq0)
    y = jnp.where(y > 0.0, y, LEAK * y)

    # ---- decoder stage 1 -----------------------------------------------------
    y = jnp.dot(e2_ref[...], y, preferred_element_type=f32)    # x2 nearest upsample
    y = _conv3(y, d1p_ref, d1c_ref, d1n_ref, d1b_ref, lseq1)
    y = jnp.where(y > 0.0, y, LEAK * y)

    # ---- final k=3 conv to 1 channel, emitted lane-dense as a (1, L) row -----
    prev, nxt = _shift_taps(y, lseq1)
    dn = (((1,), (1,)), ((), ()))                  # contract channel dims ("nt" matmul)
    res = jax.lax.dot_general(owp_ref[...], prev.astype(bf16), dn,
                              preferred_element_type=f32)
    res = res + jax.lax.dot_general(owc_ref[...], y.astype(bf16), dn,
                                    preferred_element_type=f32)
    res = res + jax.lax.dot_general(own_ref[...], nxt.astype(bf16), dn,
                                    preferred_element_type=f32)   # (8, L), row 0 real
    wav_ref[0] = jnp.tanh(res[0:1, :] + ob_ref[0, 0])


# ----------------------------------------------------------------------------
# Parameters + host-side packing (zero-pad channels to 128, bf16 MXU weights)
# ----------------------------------------------------------------------------

def init_params(key):
    ks = jax.random.split(key, 7)
    s = 0.1
    # TODO(synk): the HF stochastic duration predictor / monotonic alignment has
    # data-dependent output lengths; a fixed UP_RATE frames-per-token expansion
    # is used instead, so no duration-head parameters are kept.
    return {
        "emb": s * jax.random.normal(ks[0], (VOCAB, HIDDEN), jnp.float32),
        "enc_w1": s * jax.random.normal(ks[1], (HIDDEN, FFN), jnp.float32),
        "enc_b1": jnp.zeros((FFN,), jnp.float32),
        "enc_w2": s * jax.random.normal(ks[2], (FFN, HIDDEN), jnp.float32),
        "enc_b2": jnp.zeros((HIDDEN,), jnp.float32),
        "proj_w": s * jax.random.normal(ks[3], (HIDDEN, DEC_CH), jnp.float32),
        "proj_b": jnp.zeros((DEC_CH,), jnp.float32),
        "dec0_w": s * jax.random.normal(ks[4], (3, DEC_CH, DEC_CH), jnp.float32),
        "dec0_b": jnp.zeros((DEC_CH,), jnp.float32),
        "dec1_w": s * jax.random.normal(ks[5], (3, DEC_CH, DEC_CH), jnp.float32),
        "dec1_b": jnp.zeros((DEC_CH,), jnp.float32),
        "out_w": s * jax.random.normal(ks[6], (3, DEC_CH, 1), jnp.float32),
        "out_b": jnp.zeros((1,), jnp.float32),
    }


def _expansion(l_in, factor):
    """0/1 nearest-neighbour row-repeat matrix (l_in*factor, l_in), f32."""
    r = jnp.arange(l_in * factor, dtype=jnp.int32)[:, None]
    c = jnp.arange(l_in, dtype=jnp.int32)[None, :]
    return (c == r // factor).astype(jnp.float32)


def _pack_weights(p, bblk, T):
    bf = jnp.bfloat16

    def pad2(a):
        return jnp.pad(a, ((0, HPAD - a.shape[0]), (0, HPAD - a.shape[1]))).astype(bf)

    def padb(a):                                   # bias -> (1, HPAD) f32
        return jnp.pad(a.reshape(1, -1), ((0, 0), (0, HPAD - a.shape[0])))

    def conv_taps(w):                              # (3, Cin, Cout) -> 3 x (HPAD, HPAD)
        return [pad2(w[k]) for k in range(3)]

    def out_taps(w):                               # (3, Cin, 1) -> 3 x (8, HPAD)
        taps = []
        for k in range(3):
            row = jnp.pad(w[k, :, 0].reshape(1, -1), ((0, 7), (0, HPAD - w.shape[1])))
            taps.append(row.astype(bf))
        return taps

    m0 = bblk * T
    e0 = _expansion(m0, UP_RATE)
    e1 = _expansion(m0 * UP_RATE, UPSAMPLES[0])
    e2 = _expansion(m0 * UP_RATE * UPSAMPLES[0], UPSAMPLES[1])

    weights = [
        pad2(p["enc_w1"]), padb(p["enc_b1"]),
        pad2(p["enc_w2"]), padb(p["enc_b2"]),
        pad2(p["proj_w"]), padb(p["proj_b"]),
        e0, e1, e2,
        *conv_taps(p["dec0_w"]), padb(p["dec0_b"]),
        *conv_taps(p["dec1_w"]), padb(p["dec1_b"]),
        *out_taps(p["out_w"]),
    ]
    out_b = p["out_b"].reshape(1, 1)               # (1,1) f32 scalar, lives in SMEM
    return weights, out_b


# ----------------------------------------------------------------------------
# Forward
# ----------------------------------------------------------------------------

def vits_forward(params, token_ids, *, bblk=None):
    """token_ids: (B, T) int32 -> waveform (B, T * UP_RATE * prod(UPSAMPLES))."""
    B, T = token_ids.shape
    assert T % 8 == 0, "token length must be a multiple of the sublane tile (8)"

    if bblk is None:
        # Pack enough sequences per step to fill the MXU M dim (<= 256 rows),
        # but keep >= 2 grid steps when B allows so v7x megacore uses both TCs.
        divisors = [d for d in range(1, B + 1)
                    if B % d == 0 and (d == 1 or d * T <= 256)]
        two_step = [d for d in divisors if B // d >= 2]
        bblk = max(two_step) if two_step else max(divisors)
    assert B % bblk == 0
    grid = B // bblk

    samples = T * UP_RATE * UPSAMPLES[0] * UPSAMPLES[1]
    lf_blk = bblk * samples
    assert lf_blk % 128 == 0, "per-step waveform row must be lane dense"
    lseq0 = T * UP_RATE * UPSAMPLES[0]              # per-sequence length at stage 0
    lseq1 = T * UP_RATE * UPSAMPLES[0] * UPSAMPLES[1]  # per-sequence length at stage 1

    # Glue: embedding gather + channel pad + flatten to packed rows (host side,
    # so the kernel never reshapes).  TODO(synk): the real module tokenizes raw
    # strings with a HuggingFace tokenizer.
    x = jnp.take(params["emb"], token_ids, axis=0)            # (B, T, HIDDEN)
    x = jnp.pad(x, ((0, 0), (0, 0), (0, HPAD - HIDDEN)))      # (B, T, HPAD)
    x = x.reshape(B * T, HPAD)                                 # packed rows

    weights, out_b = _pack_weights(params, bblk, T)

    in_specs = [pl.BlockSpec((bblk * T, HPAD), lambda g: (g, 0))]
    # Constant-index weight blocks stay resident across the grid.  (If weights
    # grow, single-buffer them with pipeline_mode=pl.Buffered(1) to save VMEM.)
    in_specs += [pl.BlockSpec(w.shape, lambda g: (0, 0)) for w in weights]
    in_specs += [pl.BlockSpec(memory_space=pltpu.MemorySpace.SMEM)]  # out bias scalar

    out_shape = jax.ShapeDtypeStruct((grid, 1, lf_blk), jnp.float32)
    out_spec = pl.BlockSpec((1, 1, lf_blk), lambda g: (g, 0, 0))

    kernel = functools.partial(_vits_kernel, lseq0=lseq0, lseq1=lseq1)

    wav = pl.pallas_call(
        kernel,
        grid=(grid,),
        in_specs=in_specs,
        out_specs=out_spec,
        out_shape=out_shape,
        compiler_params=pltpu.CompilerParams(
            dimension_semantics=("parallel",)),
    )(x, *weights, out_b)

    # Each grid step emits its bblk sequences back-to-back on the lane axis.
    return wav[:, 0, :].reshape(B, samples)


if __name__ == "__main__":
    key = jax.random.PRNGKey(0)
    pkey, tkey = jax.random.split(key)
    params = init_params(pkey)

    B, T = 4, 8
    token_ids = jax.random.randint(tkey, (B, T), 0, VOCAB, dtype=jnp.int32)

    waveform = vits_forward(params, token_ids)
    waveform = jax.block_until_ready(waveform)

    expected_len = T * UP_RATE * UPSAMPLES[0] * UPSAMPLES[1]
    assert waveform.shape == (B, expected_len), waveform.shape
    assert waveform.dtype == jnp.float32
    assert bool(jnp.all(jnp.isfinite(waveform)))
    print("KERNEL_OK")
</pallas_src>

<mosaic_0001>
module attributes {stable_mosaic.version = 11 : i64} {
  func.func @_vits_kernel(%arg0: i32, %arg1: memref<16x128xf32, #tpu.memory_space<vmem>>, %arg2: memref<128x128xbf16, #tpu.memory_space<vmem>>, %arg3: memref<1x128xf32, #tpu.memory_space<vmem>>, %arg4: memref<128x128xbf16, #tpu.memory_space<vmem>>, %arg5: memref<1x128xf32, #tpu.memory_space<vmem>>, %arg6: memref<128x128xbf16, #tpu.memory_space<vmem>>, %arg7: memref<1x128xf32, #tpu.memory_space<vmem>>, %arg8: memref<64x16xf32, #tpu.memory_space<vmem>>, %arg9: memref<128x64xf32, #tpu.memory_space<vmem>>, %arg10: memref<256x128xf32, #tpu.memory_space<vmem>>, %arg11: memref<128x128xbf16, #tpu.memory_space<vmem>>, %arg12: memref<128x128xbf16, #tpu.memory_space<vmem>>, %arg13: memref<128x128xbf16, #tpu.memory_space<vmem>>, %arg14: memref<1x128xf32, #tpu.memory_space<vmem>>, %arg15: memref<128x128xbf16, #tpu.memory_space<vmem>>, %arg16: memref<128x128xbf16, #tpu.memory_space<vmem>>, %arg17: memref<128x128xbf16, #tpu.memory_space<vmem>>, %arg18: memref<1x128xf32, #tpu.memory_space<vmem>>, %arg19: memref<8x128xbf16, #tpu.memory_space<vmem>>, %arg20: memref<8x128xbf16, #tpu.memory_space<vmem>>, %arg21: memref<8x128xbf16, #tpu.memory_space<vmem>>, %arg22: memref<1x1xf32, #tpu.memory_space<smem>>, %arg23: memref<1x1x256xf32, #tpu.memory_space<vmem>>) attributes {dimension_semantics = [#tpu.dimension_semantics<parallel>], iteration_bounds = array<i64: 2>, scalar_prefetch = 0 : i64, scratch_operands = 0 : i64, tpu.core_type = #tpu.core_type<tc>, window_params = [{transform_indices = @transform_0, window_bounds = array<i64: 16, 128>}, {pipeline_mode = #tpu.pipeline_mode<synchronous>, transform_indices = @transform_1, window_bounds = array<i64: 128, 128>}, {pipeline_mode = #tpu.pipeline_mode<synchronous>, transform_indices = @transform_2, window_bounds = array<i64: 1, 128>}, {pipeline_mode = #tpu.pipeline_mode<synchronous>, transform_indices = @transform_3, window_bounds = array<i64: 128, 128>}, {pipeline_mode = #tpu.pipeline_mode<synchronous>, transform_indices = @transform_4, window_bounds = array<i64: 1, 128>}, {pipeline_mode = #tpu.pipeline_mode<synchronous>, transform_indices = @transform_5, window_bounds = array<i64: 128, 128>}, {pipeline_mode = #tpu.pipeline_mode<synchronous>, transform_indices = @transform_6, window_bounds = array<i64: 1, 128>}, {pipeline_mode = #tpu.pipeline_mode<synchronous>, transform_indices = @transform_7, window_bounds = array<i64: 64, 16>}, {pipeline_mode = #tpu.pipeline_mode<synchronous>, transform_indices = @transform_8, window_bounds = array<i64: 128, 64>}, {pipeline_mode = #tpu.pipeline_mode<synchronous>, transform_indices = @transform_9, window_bounds = array<i64: 256, 128>}, {pipeline_mode = #tpu.pipeline_mode<synchronous>, transform_indices = @transform_10, window_bounds = array<i64: 128, 128>}, {pipeline_mode = #tpu.pipeline_mode<synchronous>, transform_indices = @transform_11, window_bounds = array<i64: 128, 128>}, {pipeline_mode = #tpu.pipeline_mode<synchronous>, transform_indices = @transform_12, window_bounds = array<i64: 128, 128>}, {pipeline_mode = #tpu.pipeline_mode<synchronous>, transform_indices = @transform_13, window_bounds = array<i64: 1, 128>}, {pipeline_mode = #tpu.pipeline_mode<synchronous>, transform_indices = @transform_14, window_bounds = array<i64: 128, 128>}, {pipeline_mode = #tpu.pipeline_mode<synchronous>, transform_indices = @transform_15, window_bounds = array<i64: 128, 128>}, {pipeline_mode = #tpu.pipeline_mode<synchronous>, transform_indices = @transform_16, window_bounds = array<i64: 128, 128>}, {pipeline_mode = #tpu.pipeline_mode<synchronous>, transform_indices = @transform_17, window_bounds = array<i64: 1, 128>}, {pipeline_mode = #tpu.pipeline_mode<synchronous>, transform_indices = @transform_18, window_bounds = array<i64: 8, 128>}, {pipeline_mode = #tpu.pipeline_mode<synchronous>, transform_indices = @transform_19, window_bounds = array<i64: 8, 128>}, {pipeline_mode = #tpu.pipeline_mode<synchronous>, transform_indices = @transform_20, window_bounds = array<i64: 8, 128>}, {transform_indices = @transform_21, window_bounds = array<i64: 1, 1>}, {transform_indices = @transform_22, window_bounds = array<i64: 1, 1, 256>}]} {
    %c0 = arith.constant 0 : index
    %c0_0 = arith.constant 0 : index
    %0 = vector.load %arg1[%c0, %c0_0] : memref<16x128xf32, #tpu.memory_space<vmem>>, vector<16x128xf32>
    %1 = arith.truncf %0 : vector<16x128xf32> to vector<16x128xbf16>
    %c0_1 = arith.constant 0 : index
    %c0_2 = arith.constant 0 : index
    %2 = vector.load %arg2[%c0_1, %c0_2] : memref<128x128xbf16, #tpu.memory_space<vmem>>, vector<128x128xbf16>
    %cst = arith.constant dense<0.000000e+00> : vector<16x128xf32>
    %3 = tpu.matmul %1, %2, %cst {dimension_numbers = #tpu.dot_dimension_numbers<[1], [0], [0], [1], [0, 0, 1, 1], [], []>} : vector<16x128xbf16>, vector<128x128xbf16>, vector<16x128xf32> -> vector<16x128xf32>
    %c0_3 = arith.constant 0 : index
    %c0_4 = arith.constant 0 : index
    %4 = vector.load %arg3[%c0_3, %c0_4] : memref<1x128xf32, #tpu.memory_space<vmem>>, vector<1x128xf32>
    %5 = vector.broadcast %4 : vector<1x128xf32> to vector<16x128xf32>
    %6 = arith.addf %3, %5 : vector<16x128xf32>
    %cst_5 = arith.constant 0.000000e+00 : f32
    %7 = vector.broadcast %cst_5 : f32 to vector<16x128xf32>
    %8 = arith.maximumf %6, %7 : vector<16x128xf32>
    %9 = arith.truncf %8 : vector<16x128xf32> to vector<16x128xbf16>
    %c0_6 = arith.constant 0 : index
    %c0_7 = arith.constant 0 : index
    %10 = vector.load %arg4[%c0_6, %c0_7] : memref<128x128xbf16, #tpu.memory_space<vmem>>, vector<128x128xbf16>
    %cst_8 = arith.constant dense<0.000000e+00> : vector<16x128xf32>
    %11 = tpu.matmul %9, %10, %cst_8 {dimension_numbers = #tpu.dot_dimension_numbers<[1], [0], [0], [1], [0, 0, 1, 1], [], []>} : vector<16x128xbf16>, vector<128x128xbf16>, vector<16x128xf32> -> vector<16x128xf32>
    %c0_9 = arith.constant 0 : index
    %c0_10 = arith.constant 0 : index
    %12 = vector.load %arg5[%c0_9, %c0_10] : memref<1x128xf32, #tpu.memory_space<vmem>>, vector<1x128xf32>
    %13 = vector.broadcast %12 : vector<1x128xf32> to vector<16x128xf32>
    %14 = arith.addf %11, %13 : vector<16x128xf32>
    %15 = arith.addf %14, %0 : vector<16x128xf32>
    %16 = arith.truncf %15 : vector<16x128xf32> to vector<16x128xbf16>
    %c0_11 = arith.constant 0 : index
    %c0_12 = arith.constant 0 : index
    %17 = vector.load %arg6[%c0_11, %c0_12] : memref<128x128xbf16, #tpu.memory_space<vmem>>, vector<128x128xbf16>
    %cst_13 = arith.constant dense<0.000000e+00> : vector<16x128xf32>
    %18 = tpu.matmul %16, %17, %cst_13 {dimension_numbers = #tpu.dot_dimension_numbers<[1], [0], [0], [1], [0, 0, 1, 1], [], []>} : vector<16x128xbf16>, vector<128x128xbf16>, vector<16x128xf32> -> vector<16x128xf32>
    %c0_14 = arith.constant 0 : index
    %c0_15 = arith.constant 0 : index
    %19 = vector.load %arg7[%c0_14, %c0_15] : memref<1x128xf32, #tpu.memory_space<vmem>>, vector<1x128xf32>
    %20 = vector.broadcast %19 : vector<1x128xf32> to vector<16x128xf32>
    %21 = arith.addf %18, %20 : vector<16x128xf32>
    %c0_16 = arith.constant 0 : index
    %c0_17 = arith.constant 0 : index
    %22 = vector.load %arg8[%c0_16, %c0_17] : memref<64x16xf32, #tpu.memory_space<vmem>>, vector<64x16xf32>
    %cst_18 = arith.constant dense<0.000000e+00> : vector<64x128xf32>
    %23 = tpu.matmul %22, %21, %cst_18 {dimension_numbers = #tpu.dot_dimension_numbers<[1], [0], [0], [1], [0, 0, 1, 1], [], []>} : vector<64x16xf32>, vector<16x128xf32>, vector<64x128xf32> -> vector<64x128xf32>
    %c0_19 = arith.constant 0 : index
    %c0_20 = arith.constant 0 : index
    %24 = vector.load %arg9[%c0_19, %c0_20] : memref<128x64xf32, #tpu.memory_space<vmem>>, vector<128x64xf32>
    %cst_21 = arith.constant dense<0.000000e+00> : vector<128x128xf32>
    %25 = tpu.matmul %24, %23, %cst_21 {dimension_numbers = #tpu.dot_dimension_numbers<[1], [0], [0], [1], [0, 0, 1, 1], [], []>} : vector<128x64xf32>, vector<64x128xf32>, vector<128x128xf32> -> vector<128x128xf32>
    %26 = tpu.iota {dimensions = array<i32: 0>} : vector<128x128xi32>
    %c64_i32 = arith.constant 64 : i32
    %c0_i32 = arith.constant 0 : i32
    %27 = arith.cmpi eq, %c64_i32, %c0_i32 : i32
    %c1_i32 = arith.constant 1 : i32
    %28 = arith.select %27, %c1_i32, %c64_i32 : i32
    %29 = vector.broadcast %28 : i32 to vector<128x128xi32>
    %30 = arith.remsi %26, %29 : vector<128x128xi32>
    %c0_i32_22 = arith.constant 0 : i32
    %31 = vector.broadcast %c0_i32_22 : i32 to vector<128x128xi32>
    %32 = arith.cmpi ne, %30, %31 : vector<128x128xi32>
    %c0_i32_23 = arith.constant 0 : i32
    %33 = vector.broadcast %c0_i32_23 : i32 to vector<128x128xi32>
    %34 = arith.cmpi slt, %30, %33 : vector<128x128xi32>
    %c0_i32_24 = arith.constant 0 : i32
    %35 = arith.cmpi slt, %28, %c0_i32_24 : i32
    %36 = vector.broadcast %35 : i1 to vector<128x128xi1>
    %37 = vector.broadcast %36 : vector<128x128xi1> to vector<128x128xi1>
    %38 = arith.xori %34, %37 : vector<128x128xi1>
    %39 = arith.andi %38, %32 : vector<128x128xi1>
    %40 = vector.broadcast %28 : i32 to vector<128x128xi32>
    %41 = arith.addi %30, %40 : vector<128x128xi32>
    %42 = arith.select %39, %41, %30 : vector<128x128xi1>, vector<128x128xi32>
    %c0_i32_25 = arith.constant 0 : i32
    %43 = vector.broadcast %c0_i32_25 : i32 to vector<128x128xi32>
    %44 = arith.cmpi ne, %42, %43 : vector<128x128xi32>
    %c1_i32_26 = arith.constant 1 : i32
    %45 = tpu.dynamic_rotate %25 by %c1_i32_26 dim 0 : vector<128x128xf32>, i32 -> vector<128x128xf32>
    %cst_27 = arith.constant 0.000000e+00 : f32
    %46 = vector.broadcast %cst_27 : f32 to vector<128x128xf32>
    %47 = arith.select %44, %45, %46 : vector<128x128xi1>, vector<128x128xf32>
    %c63_i32 = arith.constant 63 : i32
    %48 = vector.broadcast %c63_i32 : i32 to vector<128x128xi32>
    %49 = arith.cmpi ne, %42, %48 : vector<128x128xi32>
    %c127_i32 = arith.constant 127 : i32
    %50 = tpu.dynamic_rotate %25 by %c127_i32 dim 0 : vector<128x128xf32>, i32 -> vector<128x128xf32>
    %cst_28 = arith.constant 0.000000e+00 : f32
    %51 = vector.broadcast %cst_28 : f32 to vector<128x128xf32>
    %52 = arith.select %49, %50, %51 : vector<128x128xi1>, vector<128x128xf32>
    %53 = arith.truncf %47 : vector<128x128xf32> to vector<128x128xbf16>
    %c0_29 = arith.constant 0 : index
    %c0_30 = arith.constant 0 : index
    %54 = vector.load %arg11[%c0_29, %c0_30] : memref<128x128xbf16, #tpu.memory_space<vmem>>, vector<128x128xbf16>
    %cst_31 = arith.constant dense<0.000000e+00> : vector<128x128xf32>
    %55 = tpu.matmul %53, %54, %cst_31 {dimension_numbers = #tpu.dot_dimension_numbers<[1], [0], [0], [1], [0, 0, 1, 1], [], []>} : vector<128x128xbf16>, vector<128x128xbf16>, vector<128x128xf32> -> vector<128x128xf32>
    %56 = arith.truncf %25 : vector<128x128xf32> to vector<128x128xbf16>
    %c0_32 = arith.constant 0 : index
    %c0_33 = arith.constant 0 : index
    %57 = vector.load %arg12[%c0_32, %c0_33] : memref<128x128xbf16, #tpu.memory_space<vmem>>, vector<128x128xbf16>
    %cst_34 = arith.constant dense<0.000000e+00> : vector<128x128xf32>
    %58 = tpu.matmul %56, %57, %cst_34 {dimension_numbers = #tpu.dot_dimension_numbers<[1], [0], [0], [1], [0, 0, 1, 1], [], []>} : vector<128x128xbf16>, vector<128x128xbf16>, vector<128x128xf32> -> vector<128x128xf32>
    %59 = arith.addf %55, %58 : vector<128x128xf32>
    %60 = arith.truncf %52 : vector<128x128xf32> to vector<128x128xbf16>
    %c0_35 = arith.constant 0 : index
    %c0_36 = arith.constant 0 : index
    %61 = vector.load %arg13[%c0_35, %c0_36] : memref<128x128xbf16, #tpu.memory_space<vmem>>, vector<128x128xbf16>
    %cst_37 = arith.constant dense<0.000000e+00> : vector<128x128xf32>
    %62 = tpu.matmul %60, %61, %cst_37 {dimension_numbers = #tpu.dot_dimension_numbers<[1], [0], [0], [1], [0, 0, 1, 1], [], []>} : vector<128x128xbf16>, vector<128x128xbf16>, vector<128x128xf32> -> vector<128x128xf32>
    %63 = arith.addf %59, %62 : vector<128x128xf32>
    %c0_38 = arith.constant 0 : index
    %c0_39 = arith.constant 0 : index
    %64 = vector.load %arg14[%c0_38, %c0_39] : memref<1x128xf32, #tpu.memory_space<vmem>>, vector<1x128xf32>
    %65 = vector.broadcast %64 : vector<1x128xf32> to vector<128x128xf32>
    %66 = arith.addf %63, %65 : vector<128x128xf32>
    %cst_40 = arith.constant 0.000000e+00 : f32
    %67 = vector.broadcast %cst_40 : f32 to vector<128x128xf32>
    %68 = arith.cmpf ogt, %66, %67 : vector<128x128xf32>
    %cst_41 = arith.constant 1.000000e-01 : f32
    %69 = vector.broadcast %cst_41 : f32 to vector<128x128xf32>
    %70 = arith.mulf %69, %66 : vector<128x128xf32>
    %71 = arith.select %68, %66, %70 : vector<128x128xi1>, vector<128x128xf32>
    %c0_42 = arith.constant 0 : index
    %c0_43 = arith.constant 0 : index
    %72 = vector.load %arg10[%c0_42, %c0_43] : memref<256x128xf32, #tpu.memory_space<vmem>>, vector<256x128xf32>
    %cst_44 = arith.constant dense<0.000000e+00> : vector<256x128xf32>
    %73 = tpu.matmul %72, %71, %cst_44 {dimension_numbers = #tpu.dot_dimension_numbers<[1], [0], [0], [1], [0, 0, 1, 1], [], []>} : vector<256x128xf32>, vector<128x128xf32>, vector<256x128xf32> -> vector<256x128xf32>
    %74 = tpu.iota {dimensions = array<i32: 0>} : vector<256x128xi32>
    %c128_i32 = arith.constant 128 : i32
    %c0_i32_45 = arith.constant 0 : i32
    %75 = arith.cmpi eq, %c128_i32, %c0_i32_45 : i32
    %c1_i32_46 = arith.constant 1 : i32
    %76 = arith.select %75, %c1_i32_46, %c128_i32 : i32
    %77 = vector.broadcast %76 : i32 to vector<256x128xi32>
    %78 = arith.remsi %74, %77 : vector<256x128xi32>
    %c0_i32_47 = arith.constant 0 : i32
    %79 = vector.broadcast %c0_i32_47 : i32 to vector<256x128xi32>
    %80 = arith.cmpi ne, %78, %79 : vector<256x128xi32>
    %c0_i32_48 = arith.constant 0 : i32
    %81 = vector.broadcast %c0_i32_48 : i32 to vector<256x128xi32>
    %82 = arith.cmpi slt, %78, %81 : vector<256x128xi32>
    %c0_i32_49 = arith.constant 0 : i32
    %83 = arith.cmpi slt, %76, %c0_i32_49 : i32
    %84 = vector.broadcast %83 : i1 to vector<256x128xi1>
    %85 = vector.broadcast %84 : vector<256x128xi1> to vector<256x128xi1>
    %86 = arith.xori %82, %85 : vector<256x128xi1>
    %87 = arith.andi %86, %80 : vector<256x128xi1>
    %88 = vector.broadcast %76 : i32 to vector<256x128xi32>
    %89 = arith.addi %78, %88 : vector<256x128xi32>
    %90 = arith.select %87, %89, %78 : vector<256x128xi1>, vector<256x128xi32>
    %c0_i32_50 = arith.constant 0 : i32
    %91 = vector.broadcast %c0_i32_50 : i32 to vector<256x128xi32>
    %92 = arith.cmpi ne, %90, %91 : vector<256x128xi32>
    %c1_i32_51 = arith.constant 1 : i32
    %93 = tpu.dynamic_rotate %73 by %c1_i32_51 dim 0 : vector<256x128xf32>, i32 -> vector<256x128xf32>
    %cst_52 = arith.constant 0.000000e+00 : f32
    %94 = vector.broadcast %cst_52 : f32 to vector<256x128xf32>
    %95 = arith.select %92, %93, %94 : vector<256x128xi1>, vector<256x128xf32>
    %c127_i32_53 = arith.constant 127 : i32
    %96 = vector.broadcast %c127_i32_53 : i32 to vector<256x128xi32>
    %97 = arith.cmpi ne, %90, %96 : vector<256x128xi32>
    %c255_i32 = arith.constant 255 : i32
    %98 = tpu.dynamic_rotate %73 by %c255_i32 dim 0 : vector<256x128xf32>, i32 -> vector<256x128xf32>
    %cst_54 = arith.constant 0.000000e+00 : f32
    %99 = vector.broadcast %cst_54 : f32 to vector<256x128xf32>
    %100 = arith.select %97, %98, %99 : vector<256x128xi1>, vector<256x128xf32>
    %101 = arith.truncf %95 : vector<256x128xf32> to vector<256x128xbf16>
    %c0_55 = arith.constant 0 : index
    %c0_56 = arith.constant 0 : index
    %102 = vector.load %arg15[%c0_55, %c0_56] : memref<128x128xbf16, #tpu.memory_space<vmem>>, vector<128x128xbf16>
    %cst_57 = arith.constant dense<0.000000e+00> : vector<256x128xf32>
    %103 = tpu.matmul %101, %102, %cst_57 {dimension_numbers = #tpu.dot_dimension_numbers<[1], [0], [0], [1], [0, 0, 1, 1], [], []>} : vector<256x128xbf16>, vector<128x128xbf16>, vector<256x128xf32> -> vector<256x128xf32>
    %104 = arith.truncf %73 : vector<256x128xf32> to vector<256x128xbf16>
    %c0_58 = arith.constant 0 : index
    %c0_59 = arith.constant 0 : index
    %105 = vector.load %arg16[%c0_58, %c0_59] : memref<128x128xbf16, #tpu.memory_space<vmem>>, vector<128x128xbf16>
    %cst_60 = arith.constant dense<0.000000e+00> : vector<256x128xf32>
    %106 = tpu.matmul %104, %105, %cst_60 {dimension_numbers = #tpu.dot_dimension_numbers<[1], [0], [0], [1], [0, 0, 1, 1], [], []>} : vector<256x128xbf16>, vector<128x128xbf16>, vector<256x128xf32> -> vector<256x128xf32>
    %107 = arith.addf %103, %106 : vector<256x128xf32>
    %108 = arith.truncf %100 : vector<256x128xf32> to vector<256x128xbf16>
    %c0_61 = arith.constant 0 : index
    %c0_62 = arith.constant 0 : index
    %109 = vector.load %arg17[%c0_61, %c0_62] : memref<128x128xbf16, #tpu.memory_space<vmem>>, vector<128x128xbf16>
    %cst_63 = arith.constant dense<0.000000e+00> : vector<256x128xf32>
    %110 = tpu.matmul %108, %109, %cst_63 {dimension_numbers = #tpu.dot_dimension_numbers<[1], [0], [0], [1], [0, 0, 1, 1], [], []>} : vector<256x128xbf16>, vector<128x128xbf16>, vector<256x128xf32> -> vector<256x128xf32>
    %111 = arith.addf %107, %110 : vector<256x128xf32>
    %c0_64 = arith.constant 0 : index
    %c0_65 = arith.constant 0 : index
    %112 = vector.load %arg18[%c0_64, %c0_65] : memref<1x128xf32, #tpu.memory_space<vmem>>, vector<1x128xf32>
    %113 = vector.broadcast %112 : vector<1x128xf32> to vector<256x128xf32>
    %114 = arith.addf %111, %113 : vector<256x128xf32>
    %cst_66 = arith.constant 0.000000e+00 : f32
    %115 = vector.broadcast %cst_66 : f32 to vector<256x128xf32>
    %116 = arith.cmpf ogt, %114, %115 : vector<256x128xf32>
    %cst_67 = arith.constant 1.000000e-01 : f32
    %117 = vector.broadcast %cst_67 : f32 to vector<256x128xf32>
    %118 = arith.mulf %117, %114 : vector<256x128xf32>
    %119 = arith.select %116, %114, %118 : vector<256x128xi1>, vector<256x128xf32>
    %120 = tpu.iota {dimensions = array<i32: 0>} : vector<256x128xi32>
    %c128_i32_68 = arith.constant 128 : i32
    %c0_i32_69 = arith.constant 0 : i32
    %121 = arith.cmpi eq, %c128_i32_68, %c0_i32_69 : i32
    %c1_i32_70 = arith.constant 1 : i32
    %122 = arith.select %121, %c1_i32_70, %c128_i32_68 : i32
    %123 = vector.broadcast %122 : i32 to vector<256x128xi32>
    %124 = arith.remsi %120, %123 : vector<256x128xi32>
    %c0_i32_71 = arith.constant 0 : i32
    %125 = vector.broadcast %c0_i32_71 : i32 to vector<256x128xi32>
    %126 = arith.cmpi ne, %124, %125 : vector<256x128xi32>
    %c0_i32_72 = arith.constant 0 : i32
    %127 = vector.broadcast %c0_i32_72 : i32 to vector<256x128xi32>
    %128 = arith.cmpi slt, %124, %127 : vector<256x128xi32>
    %c0_i32_73 = arith.constant 0 : i32
    %129 = arith.cmpi slt, %122, %c0_i32_73 : i32
    %130 = vector.broadcast %129 : i1 to vector<256x128xi1>
    %131 = vector.broadcast %130 : vector<256x128xi1> to vector<256x128xi1>
    %132 = arith.xori %128, %131 : vector<256x128xi1>
    %133 = arith.andi %132, %126 : vector<256x128xi1>
    %134 = vector.broadcast %122 : i32 to vector<256x128xi32>
    %135 = arith.addi %124, %134 : vector<256x128xi32>
    %136 = arith.select %133, %135, %124 : vector<256x128xi1>, vector<256x128xi32>
    %c0_i32_74 = arith.constant 0 : i32
    %137 = vector.broadcast %c0_i32_74 : i32 to vector<256x128xi32>
    %138 = arith.cmpi ne, %136, %137 : vector<256x128xi32>
    %c1_i32_75 = arith.constant 1 : i32
    %139 = tpu.dynamic_rotate %119 by %c1_i32_75 dim 0 : vector<256x128xf32>, i32 -> vector<256x128xf32>
    %cst_76 = arith.constant 0.000000e+00 : f32
    %140 = vector.broadcast %cst_76 : f32 to vector<256x128xf32>
    %141 = arith.select %138, %139, %140 : vector<256x128xi1>, vector<256x128xf32>
    %c127_i32_77 = arith.constant 127 : i32
    %142 = vector.broadcast %c127_i32_77 : i32 to vector<256x128xi32>
    %143 = arith.cmpi ne, %136, %142 : vector<256x128xi32>
    %c255_i32_78 = arith.constant 255 : i32
    %144 = tpu.dynamic_rotate %119 by %c255_i32_78 dim 0 : vector<256x128xf32>, i32 -> vector<256x128xf32>
    %cst_79 = arith.constant 0.000000e+00 : f32
    %145 = vector.broadcast %cst_79 : f32 to vector<256x128xf32>
    %146 = arith.select %143, %144, %145 : vector<256x128xi1>, vector<256x128xf32>
    %c0_80 = arith.constant 0 : index
    %c0_81 = arith.constant 0 : index
    %147 = vector.load %arg19[%c0_80, %c0_81] : memref<8x128xbf16, #tpu.memory_space<vmem>>, vector<8x128xbf16>
    %148 = arith.truncf %141 : vector<256x128xf32> to vector<256x128xbf16>
    %cst_82 = arith.constant dense<0.000000e+00> : vector<8x256xf32>
    %149 = tpu.matmul %147, %148, %cst_82 {dimension_numbers = #tpu.dot_dimension_numbers<[1], [1], [0], [0], [0, 0, 1, 0], [], []>} : vector<8x128xbf16>, vector<256x128xbf16>, vector<8x256xf32> -> vector<8x256xf32>
    %c0_83 = arith.constant 0 : index
    %c0_84 = arith.constant 0 : index
    %150 = vector.load %arg20[%c0_83, %c0_84] : memref<8x128xbf16, #tpu.memory_space<vmem>>, vector<8x128xbf16>
    %151 = arith.truncf %119 : vector<256x128xf32> to vector<256x128xbf16>
    %cst_85 = arith.constant dense<0.000000e+00> : vector<8x256xf32>
    %152 = tpu.matmul %150, %151, %cst_85 {dimension_numbers = #tpu.dot_dimension_numbers<[1], [1], [0], [0], [0, 0, 1, 0], [], []>} : vector<8x128xbf16>, vector<256x128xbf16>, vector<8x256xf32> -> vector<8x256xf32>
    %153 = arith.addf %149, %152 : vector<8x256xf32>
    %c0_86 = arith.constant 0 : index
    %c0_87 = arith.constant 0 : index
    %154 = vector.load %arg21[%c0_86, %c0_87] : memref<8x128xbf16, #tpu.memory_space<vmem>>, vector<8x128xbf16>
    %155 = arith.truncf %146 : vector<256x128xf32> to vector<256x128xbf16>
    %cst_88 = arith.constant dense<0.000000e+00> : vector<8x256xf32>
    %156 = tpu.matmul %154, %155, %cst_88 {dimension_numbers = #tpu.dot_dimension_numbers<[1], [1], [0], [0], [0, 0, 1, 0], [], []>} : vector<8x128xbf16>, vector<256x128xbf16>, vector<8x256xf32> -> vector<8x256xf32>
    %157 = arith.addf %153, %156 : vector<8x256xf32>
    %158 = vector.extract_strided_slice %157 {offsets = [0, 0], sizes = [1, 256], strides = [1, 1]} : vector<8x256xf32> to vector<1x256xf32>
    %c0_89 = arith.constant 0 : index
    %c0_90 = arith.constant 0 : index
    %159 = memref.load %arg22[%c0_89, %c0_90] : memref<1x1xf32, #tpu.memory_space<smem>>
    %160 = vector.broadcast %159 : f32 to vector<1x256xf32>
    %161 = arith.addf %158, %160 : vector<1x256xf32>
    %162 = math.tanh %161 : vector<1x256xf32>
    %c0_91 = arith.constant 0 : index
    %c0_92 = arith.constant 0 : index
    %c0_93 = arith.constant 0 : index
    %163 = vector.load %arg23[%c0_91, %c0_92, %c0_93] : memref<1x1x256xf32, #tpu.memory_space<vmem>>, vector<1x1x256xf32>
    %164 = vector.shape_cast %163 : vector<1x1x256xf32> to vector<1x256xf32>
    %165 = vector.shape_cast %162 : vector<1x256xf32> to vector<1x1x256xf32>
    tpu.vector_store %arg23[%c0_91, %c0_92, %c0_93], %165 {strides = array<i32>} : memref<1x1x256xf32, #tpu.memory_space<vmem>>, vector<1x1x256xf32>,
    return
  }
  func.func @transform_0(%arg0: i32) -> (i32, i32) {
    %c0_i32 = arith.constant 0 : i32
    %c0_i32_0 = arith.constant 0 : i32
    return %arg0, %c0_i32 : i32, i32
  }
  func.func @transform_1(%arg0: i32) -> (i32, i32) {
    %c0_i32 = arith.constant 0 : i32
    %c0_i32_0 = arith.constant 0 : i32
    %c0_i32_1 = arith.constant 0 : i32
    return %c0_i32, %c0_i32_0 : i32, i32
  }
  func.func @transform_2(%arg0: i32) -> (i32, i32) {
    %c0_i32 = arith.constant 0 : i32
    %c0_i32_0 = arith.constant 0 : i32
    %c0_i32_1 = arith.constant 0 : i32
    return %c0_i32, %c0_i32_0 : i32, i32
  }
  func.func @transform_3(%arg0: i32) -> (i32, i32) {
    %c0_i32 = arith.constant 0 : i32
    %c0_i32_0 = arith.constant 0 : i32
    %c0_i32_1 = arith.constant 0 : i32
    return %c0_i32, %c0_i32_0 : i32, i32
  }
  func.func @transform_4(%arg0: i32) -> (i32, i32) {
    %c0_i32 = arith.constant 0 : i32
    %c0_i32_0 = arith.constant 0 : i32
    %c0_i32_1 = arith.constant 0 : i32
    return %c0_i32, %c0_i32_0 : i32, i32
  }
  func.func @transform_5(%arg0: i32) -> (i32, i32) {
    %c0_i32 = arith.constant 0 : i32
    %c0_i32_0 = arith.constant 0 : i32
    %c0_i32_1 = arith.constant 0 : i32
    return %c0_i32, %c0_i32_0 : i32, i32
  }
  func.func @transform_6(%arg0: i32) -> (i32, i32) {
    %c0_i32 = arith.constant 0 : i32
    %c0_i32_0 = arith.constant 0 : i32
    %c0_i32_1 = arith.constant 0 : i32
    return %c0_i32, %c0_i32_0 : i32, i32
  }
  func.func @transform_7(%arg0: i32) -> (i32, i32) {
    %c0_i32 = arith.constant 0 : i32
    %c0_i32_0 = arith.constant 0 : i32
    %c0_i32_1 = arith.constant 0 : i32
    return %c0_i32, %c0_i32_0 : i32, i32
  }
  func.func @transform_8(%arg0: i32) -> (i32, i32) {
    %c0_i32 = arith.constant 0 : i32
    %c0_i32_0 = arith.constant 0 : i32
    %c0_i32_1 = arith.constant 0 : i32
    return %c0_i32, %c0_i32_0 : i32, i32
  }
  func.func @transform_9(%arg0: i32) -> (i32, i32) {
    %c0_i32 = arith.constant 0 : i32
    %c0_i32_0 = arith.constant 0 : i32
    %c0_i32_1 = arith.constant 0 : i32
    return %c0_i32, %c0_i32_0 : i32, i32
  }
  func.func @transform_10(%arg0: i32) -> (i32, i32) {
    %c0_i32 = arith.constant 0 : i32
    %c0_i32_0 = arith.constant 0 : i32
    %c0_i32_1 = arith.constant 0 : i32
    return %c0_i32, %c0_i32_0 : i32, i32
  }
  func.func @transform_11(%arg0: i32) -> (i32, i32) {
    %c0_i32 = arith.constant 0 : i32
    %c0_i32_0 = arith.constant 0 : i32
    %c0_i32_1 = arith.constant 0 : i32
    return %c0_i32, %c0_i32_0 : i32, i32
  }
  func.func @transform_12(%arg0: i32) -> (i32, i32) {
    %c0_i32 = arith.constant 0 : i32
    %c0_i32_0 = arith.constant 0 : i32
    %c0_i32_1 = arith.constant 0 : i32
    return %c0_i32, %c0_i32_0 : i32, i32
  }
  func.func @transform_13(%arg0: i32) -> (i32, i32) {
    %c0_i32 = arith.constant 0 : i32
    %c0_i32_0 = arith.constant 0 : i32
    %c0_i32_1 = arith.constant 0 : i32
    return %c0_i32, %c0_i32_0 : i32, i32
  }
  func.func @transform_14(%arg0: i32) -> (i32, i32) {
    %c0_i32 = arith.constant 0 : i32
    %c0_i32_0 = arith.constant 0 : i32
    %c0_i32_1 = arith.constant 0 : i32
    return %c0_i32, %c0_i32_0 : i32, i32
  }
  func.func @transform_15(%arg0: i32) -> (i32, i32) {
    %c0_i32 = arith.constant 0 : i32
    %c0_i32_0 = arith.constant 0 : i32
    %c0_i32_1 = arith.constant 0 : i32
    return %c0_i32, %c0_i32_0 : i32, i32
  }
  func.func @transform_16(%arg0: i32) -> (i32, i32) {
    %c0_i32 = arith.constant 0 : i32
    %c0_i32_0 = arith.constant 0 : i32
    %c0_i32_1 = arith.constant 0 : i32
    return %c0_i32, %c0_i32_0 : i32, i32
  }
  func.func @transform_17(%arg0: i32) -> (i32, i32) {
    %c0_i32 = arith.constant 0 : i32
    %c0_i32_0 = arith.constant 0 : i32
    %c0_i32_1 = arith.constant 0 : i32
    return %c0_i32, %c0_i32_0 : i32, i32
  }
  func.func @transform_18(%arg0: i32) -> (i32, i32) {
    %c0_i32 = arith.constant 0 : i32
    %c0_i32_0 = arith.constant 0 : i32
    %c0_i32_1 = arith.constant 0 : i32
    return %c0_i32, %c0_i32_0 : i32, i32
  }
  func.func @transform_19(%arg0: i32) -> (i32, i32) {
    %c0_i32 = arith.constant 0 : i32
    %c0_i32_0 = arith.constant 0 : i32
    %c0_i32_1 = arith.constant 0 : i32
    return %c0_i32, %c0_i32_0 : i32, i32
  }
  func.func @transform_20(%arg0: i32) -> (i32, i32) {
    %c0_i32 = arith.constant 0 : i32
    %c0_i32_0 = arith.constant 0 : i32
    %c0_i32_1 = arith.constant 0 : i32
    return %c0_i32, %c0_i32_0 : i32, i32
  }
  func.func @transform_21(%arg0: i32) -> (i32, i32) {
    %c0_i32 = arith.constant 0 : i32
    %c0_i32_0 = arith.constant 0 : i32
    %c0_i32_1 = arith.constant 0 : i32
    return %c0_i32, %c0_i32_0 : i32, i32
  }
  func.func @transform_22(%arg0: i32) -> (i32, i32, i32) {
    %c0_i32 = arith.constant 0 : i32
    %c0_i32_0 = arith.constant 0 : i32
    %c0_i32_1 = arith.constant 0 : i32
    return %arg0, %c0_i32, %c0_i32_0 : i32, i32, i32
  }
}

</mosaic_0001>

<llo_original>
// kernel: tpu_custom_call.1
$region0: #{tpu_custom_call.1}
  #allocation0 [shape = 'u32[]', space=smem, size = 0x4, offset = 0x4, fixed_abs, tag = 'smem constant byte address 0x4 - core index']
  #allocation1 [shape = 'u32[144,128]{1,0:T(1,128)}', space=vmem, size = 0x12000, scoped, tag = 'internal scratch']
  #allocation2 [shape = 'f32[1,1]{1,0:T(1,128)S(6)}', space=smem, size = 0x200, scoped, tag = 'scoped memory for tpu_custom_call.1']
  %s0 = inlined_call_operand.vmem [shape: f32[32,128], index: 0, kind: input, shape index: {}]
  %s1 = inlined_call_operand.hbm [shape: bf16[128,128], index: 1, kind: input, shape index: {}]
  %s2 = inlined_call_operand.vmem [shape: f32[1,128], index: 2, kind: input, shape index: {}]
  %s3 = inlined_call_operand.hbm [shape: bf16[128,128], index: 3, kind: input, shape index: {}]
  %s4 = inlined_call_operand.hbm [shape: f32[1,128], index: 4, kind: input, shape index: {}]
  %s5 = inlined_call_operand.hbm [shape: bf16[128,128], index: 5, kind: input, shape index: {}]
  %s6 = inlined_call_operand.hbm [shape: f32[1,128], index: 6, kind: input, shape index: {}]
  %s7 = inlined_call_operand.vmem [shape: f32[64,16], index: 7, kind: input, shape index: {}]
  %s8 = inlined_call_operand.vmem [shape: f32[128,64], index: 8, kind: input, shape index: {}]
  %s9 = inlined_call_operand.vmem [shape: f32[256,128], index: 9, kind: input, shape index: {}]
  %s10 = inlined_call_operand.hbm [shape: bf16[128,128], index: 10, kind: input, shape index: {}]
  %s11 = inlined_call_operand.hbm [shape: bf16[128,128], index: 11, kind: input, shape index: {}]
  %s12 = inlined_call_operand.hbm [shape: bf16[128,128], index: 12, kind: input, shape index: {}]
  %s13 = inlined_call_operand.hbm [shape: f32[1,128], index: 13, kind: input, shape index: {}]
  %s14 = inlined_call_operand.hbm [shape: bf16[128,128], index: 14, kind: input, shape index: {}]
  %s15 = inlined_call_operand.hbm [shape: bf16[128,128], index: 15, kind: input, shape index: {}]
  %s16 = inlined_call_operand.hbm [shape: bf16[128,128], index: 16, kind: input, shape index: {}]
  %s17 = inlined_call_operand.vmem [shape: f32[1,128], index: 17, kind: input, shape index: {}]
  %s18 = inlined_call_operand.vmem [shape: bf16[8,128], index: 18, kind: input, shape index: {}]
  %s19 = inlined_call_operand.vmem [shape: bf16[8,128], index: 19, kind: input, shape index: {}]
  %s20 = inlined_call_operand.vmem [shape: bf16[8,128], index: 20, kind: input, shape index: {}]
  %s21 = inlined_call_operand.<no memory space> [shape: f32[1,1], index: 21, kind: input, shape index: {}]
  %s22 = inlined_call_operand.hbm [shape: f32[2,1,256], index: 22, kind: output, shape index: {}]
  %s23 = sld [smem:[#allocation0]]
  $region169: #{tpu_custom_call.1} parent=0
    _
  %s25 = ssub.s32 1, %s23
  %s26 = scalar_select 0, %s25, %s23
  %27 = sst [smem:[#allocation2]] %s21
  $region1: #{tpu_custom_call.1} parent=0
    #allocation3 [shape = 'u8[32768]{0}', space=vmem, size = 0x8000, scoped, tag = 'input window, operand 1, single buffered']
    #allocation4 [shape = 's32[2]{0}', space=sflag, size = 0x8, scoped, tag = 'scoped memory for tpu_custom_call.1']
    #allocation5 [shape = 's32[2]{0}', space=sflag, size = 0x8, scoped, tag = 'scoped memory for tpu_custom_call.1']
    #allocation6 [shape = 'u8[32768]{0}', space=vmem, size = 0x8000, scoped, tag = 'input window, operand 3, single buffered']
    #allocation7 [shape = 's32[1]{0}', space=sflag, size = 0x4, scoped, tag = 'scoped memory for tpu_custom_call.1']
    #allocation8 [shape = 'u8[512]{0}', space=vmem, size = 0x400, scoped, tag = 'input window, operand 4, single buffered']
    #allocation9 [shape = 'u8[32768]{0}', space=vmem, size = 0x8000, scoped, tag = 'input window, operand 5, single buffered']
    #allocation10 [shape = 's32[1]{0}', space=sflag, size = 0x4, scoped, tag = 'scoped memory for tpu_custom_call.1']
    #allocation11 [shape = 'u8[512]{0}', space=vmem, size = 0x400, scoped, tag = 'input window, operand 6, single buffered']
    #allocation12 [shape = 'u8[32768]{0}', space=vmem, size = 0x8000, scoped, tag = 'input window, operand 10, single buffered']
    #allocation13 [shape = 's32[1]{0}', space=sflag, size = 0x4, scoped, tag = 'scoped memory for tpu_custom_call.1']
    #allocation14 [shape = 'u8[32768]{0}', space=vmem, size = 0x8000, scoped, tag = 'input window, operand 11, single buffered']
    #allocation15 [shape = 'u8[32768]{0}', space=vmem, size = 0x8000, scoped, tag = 'input window, operand 12, single buffered']
    #allocation16 [shape = 's32[1]{0}', space=sflag, size = 0x4, scoped, tag = 'scoped memory for tpu_custom_call.1']
    #allocation17 [shape = 'u8[512]{0}', space=vmem, size = 0x400, scoped, tag = 'input window, operand 13, single buffered']
    #allocation18 [shape = 'u8[32768]{0}', space=vmem, size = 0x8000, scoped, tag = 'input window, operand 14, single buffered']
    #allocation19 [shape = 's32[1]{0}', space=sflag, size = 0x4, scoped, tag = 'scoped memory for tpu_custom_call.1']
    #allocation20 [shape = 'u8[32768]{0}', space=vmem, size = 0x8000, scoped, tag = 'input window, operand 15, single buffered']
    #allocation21 [shape = 'u8[32768]{0}', space=vmem, size = 0x8000, scoped, tag = 'input window, operand 16, single buffered']
    #allocation22 [shape = 's32[1]{0}', space=sflag, size = 0x4, scoped, tag = 'scoped memory for tpu_custom_call.1']
    #allocation23 [shape = 'u8[2048]{0}', space=vmem, size = 0x800, scoped, tag = 'output window, operand 0']
    %28 = vsyncpa [#allocation4], 0
    %29 = vsyncpa [#allocation7], 0
    %30 = vsyncpa [#allocation10], 0
    %31 = vsyncpa [#allocation13], 0
    %32 = vsyncpa [#allocation16], 0
    %33 = vsyncpa [#allocation19], 0
    %34 = vsyncpa [#allocation22], 0
    %35 = vsyncpa [#allocation5], 0
    %s36 = scalar_lea.sflag [#allocation5], 1
    %37 = vsyncpa %s36, 0
    loop: start=0, step=1, limit=4
    $region2: #{tpu_custom_call.1} parent=1 // loop_pre_header
      _
    $region3: #{tpu_custom_call.1} parent=1 // loop_header
      %s39 = sphi 0, %s43
      %p40 = scmp.ge.s32.totalorder %s39, 4
      %s49 = sphi 0, %s51
      %s52 = sphi 0, %s49
      %s53 = sphi 0, %s52
      %s69 = sphi 0, %s53
      %s73 = sphi 0, %s73
      %s75 = sphi 0, %s73
      %s76 = sphi 0, %s75
      %s90 = sphi 0, %s76
      %s94 = sphi 0, %s94
      %s96 = sphi 0, %s94
      %s97 = sphi 0, %s96
      %s111 = sphi 0, %s97
      %s115 = sphi 0, %s115
      %s117 = sphi 0, %s115
      %s118 = sphi 0, %s117
      %s132 = sphi 0, %s118
      %s136 = sphi 0, %s136
      %s138 = sphi 0, %s136
      %s139 = sphi 0, %s138
      %s153 = sphi 0, %s139
      %s157 = sphi 0, %s157
      %s159 = sphi 0, %s157
      %s160 = sphi 0, %s159
      %s174 = sphi 0, %s160
      %s178 = sphi 0, %s178
      %s180 = sphi 0, %s178
      %s181 = sphi 0, %s180
      %s195 = sphi 0, %s181
      %s199 = sphi 0, %s199
      %s201 = sphi 0, %s199
      %s202 = sphi 0, %s201
      %s216 = sphi 0, %s202
      %s220 = sphi 0, %s220
      %s222 = sphi 0, %s220
      %s223 = sphi 0, %s222
      %s237 = sphi 0, %s223
      %s241 = sphi 0, %s241
      %s243 = sphi 0, %s241
      %s244 = sphi 0, %s243
      %s258 = sphi 0, %s244
      %s262 = sphi 0, %s262
      %s264 = sphi 0, %s262
      %s265 = sphi 0, %s264
      %s279 = sphi 0, %s265
      %s283 = sphi 0, %s283
      %s285 = sphi 0, %s283
      %s286 = sphi 0, %s285
      %s300 = sphi 0, %s286
      %s304 = sphi 0, %s304
      %s306 = sphi 0, %s304
      %s307 = sphi 0, %s306
      %s321 = sphi 0, %s307
      %s325 = sphi 0, %s325
      %s327 = sphi 0, %s325
      %s328 = sphi 0, %s327
      %s342 = sphi 0, %s328
      %s346 = sphi 0, %s346
      %s348 = sphi 0, %s346
      %s349 = sphi 0, %s348
      %s363 = sphi 0, %s349
      %s367 = sphi 0, %s367
      %s369 = sphi 0, %s367
      %s370 = sphi 0, %s369
      %s384 = sphi 0, %s370
      %s388 = sphi 0, %s388
      %s390 = sphi 0, %s388
      %s391 = sphi 0, %s390
      %s405 = sphi 0, %s391
      %s409 = sphi 0, %s409
      %s411 = sphi 0, %s409
      %s412 = sphi 0, %s411
      %s426 = sphi 0, %s412
      %s430 = sphi 0, %s430
      %s432 = sphi 0, %s430
      %s433 = sphi 0, %s432
      %s447 = sphi 0, %s433
      %s451 = sphi 0, %s451
      %s453 = sphi 0, %s451
      %s454 = sphi 0, %s453
      %s468 = sphi 0, %s454
      %s472 = sphi 0, %s472
      %s474 = sphi 0, %s472
      %s475 = sphi 0, %s474
      %s489 = sphi 0, %s475
      %s493 = sphi 0, %s493
      %s495 = sphi 0, %s493
      %s496 = sphi 0, %s495
      %s510 = sphi 0, %s496
      %s516 = sphi 0, %s518
      %s519 = sphi 0, %s516
      %s520 = sphi 0, %s519
      %s536 = sphi 0, %s520
    $region4: #{tpu_custom_call.1} parent=1 // loop_header_branch
      %42 = sbr.rel (%p40) target = $region8
    $region5: #{tpu_custom_call.1} parent=1 // loop_body
      %s44 = ssub.s32 %s39, 1
      %s45 = ssub.s32 %s39, 2
      %s46 = sadd.s32 %s39, 1
      %s47 = ssub.s32 %s39, %s46
      %p48 = scmp.eq.s32.totalorder %s47, 0
      %s50 = sadd.s32 %s49, 1
      %s51 = scalar_select %p48, %s49, %s50
      %p54 = pneg %p48
      %p55 = scmp.eq.s32.totalorder %s39, 1
      %p56 = por %p54, %p55
      %p57 = scmp.ne.s32.totalorder %s49, %s52
      %p58 = scmp.eq.s32.totalorder %s39, 0
      %p59 = por %p57, %p58
      %p60 = scmp.ne.s32.totalorder %s49, %s52
      %p61 = scmp.eq.s32.totalorder %s44, 1
      %p62 = por %p60, %p61
      %p63 = scmp.ne.s32.totalorder %s52, %s53
      %p64 = scmp.eq.s32.totalorder %s44, 0
      %p65 = por %p63, %p64
      %p66 = scmp.ne.s32.totalorder %s52, %s53
      %p67 = scmp.eq.s32.totalorder %s45, 1
      %p68 = por %p66, %p67
      %p70 = scmp.ne.s32.totalorder %s53, %s69
      %p71 = scmp.eq.s32.totalorder %s45, 0
      %p72 = por %p70, %p71
      %s74 = sadd.s32 %s73, 1
      %p77 = scmp.eq.s32.totalorder %s39, 1
      %p78 = scmp.ne.s32.totalorder %s73, %s75
      %p79 = scmp.eq.s32.totalorder %s39, 0
      %p80 = por %p78, %p79
      %p81 = scmp.ne.s32.totalorder %s73, %s75
      %p82 = scmp.eq.s32.totalorder %s44, 1
      %p83 = por %p81, %p82
      %p84 = scmp.ne.s32.totalorder %s75, %s76
      %p85 = scmp.eq.s32.totalorder %s44, 0
      %p86 = por %p84, %p85
      %p87 = scmp.ne.s32.totalorder %s75, %s76
      %p88 = scmp.eq.s32.totalorder %s45, 1
      %p89 = por %p87, %p88
      %p91 = scmp.ne.s32.totalorder %s76, %s90
      %p92 = scmp.eq.s32.totalorder %s45, 0
      %p93 = por %p91, %p92
      %s95 = sadd.s32 %s94, 1
      %p98 = scmp.eq.s32.totalorder %s39, 1
      %p99 = scmp.ne.s32.totalorder %s94, %s96
      %p100 = scmp.eq.s32.totalorder %s39, 0
      %p101 = por %p99, %p100
      %p102 = scmp.ne.s32.totalorder %s94, %s96
      %p103 = scmp.eq.s32.totalorder %s44, 1
      %p104 = por %p102, %p103
      %p105 = scmp.ne.s32.totalorder %s96, %s97
      %p106 = scmp.eq.s32.totalorder %s44, 0
      %p107 = por %p105, %p106
      %p108 = scmp.ne.s32.totalorder %s96, %s97
      %p109 = scmp.eq.s32.totalorder %s45, 1
      %p110 = por %p108, %p109
      %p112 = scmp.ne.s32.totalorder %s97, %s111
      %p113 = scmp.eq.s32.totalorder %s45, 0
      %p114 = por %p112, %p113
      %s116 = sadd.s32 %s115, 1
      %p119 = scmp.eq.s32.totalorder %s39, 1
      %p120 = scmp.ne.s32.totalorder %s115, %s117
      %p121 = scmp.eq.s32.totalorder %s39, 0
      %p122 = por %p120, %p121
      %p123 = scmp.ne.s32.totalorder %s115, %s117
      %p124 = scmp.eq.s32.totalorder %s44, 1
      %p125 = por %p123, %p124
      %p126 = scmp.ne.s32.totalorder %s117, %s118
      %p127 = scmp.eq.s32.totalorder %s44, 0
      %p128 = por %p126, %p127
      %p129 = scmp.ne.s32.totalorder %s117, %s118
      %p130 = scmp.eq.s32.totalorder %s45, 1
      %p131 = por %p129, %p130
      %p133 = scmp.ne.s32.totalorder %s118, %s132
      %p134 = scmp.eq.s32.totalorder %s45, 0
      %p135 = por %p133, %p134
      %s137 = sadd.s32 %s136, 1
      %p140 = scmp.eq.s32.totalorder %s39, 1
      %p141 = scmp.ne.s32.totalorder %s136, %s138
      %p142 = scmp.eq.s32.totalorder %s39, 0
      %p143 = por %p141, %p142
      %p144 = scmp.ne.s32.totalorder %s136, %s138
      %p145 = scmp.eq.s32.totalorder %s44, 1
      %p146 = por %p144, %p145
      %p147 = scmp.ne.s32.totalorder %s138, %s139
      %p148 = scmp.eq.s32.totalorder %s44, 0
      %p149 = por %p147, %p148
      %p150 = scmp.ne.s32.totalorder %s138, %s139
      %p151 = scmp.eq.s32.totalorder %s45, 1
      %p152 = por %p150, %p151
      %p154 = scmp.ne.s32.totalorder %s139, %s153
      %p155 = scmp.eq.s32.totalorder %s45, 0
      %p156 = por %p154, %p155
      %s158 = sadd.s32 %s157, 1
      %p161 = scmp.eq.s32.totalorder %s39, 1
      %p162 = scmp.ne.s32.totalorder %s157, %s159
      %p163 = scmp.eq.s32.totalorder %s39, 0
      %p164 = por %p162, %p163
      %p165 = scmp.ne.s32.totalorder %s157, %s159
      %p166 = scmp.eq.s32.totalorder %s44, 1
      %p167 = por %p165, %p166
      %p168 = scmp.ne.s32.totalorder %s159, %s160
      %p169 = scmp.eq.s32.totalorder %s44, 0
      %p170 = por %p168, %p169
      %p171 = scmp.ne.s32.totalorder %s159, %s160
      %p172 = scmp.eq.s32.totalorder %s45, 1
      %p173 = por %p171, %p172
      %p175 = scmp.ne.s32.totalorder %s160, %s174
      %p176 = scmp.eq.s32.totalorder %s45, 0
      %p177 = por %p175, %p176
      %s179 = sadd.s32 %s178, 1
      %p182 = scmp.eq.s32.totalorder %s39, 1
      %p183 = scmp.ne.s32.totalorder %s178, %s180
      %p184 = scmp.eq.s32.totalorder %s39, 0
      %p185 = por %p183, %p184
      %p186 = scmp.ne.s32.totalorder %s178, %s180
      %p187 = scmp.eq.s32.totalorder %s44, 1
      %p188 = por %p186, %p187
      %p189 = scmp.ne.s32.totalorder %s180, %s181
      %p190 = scmp.eq.s32.totalorder %s44, 0
      %p191 = por %p189, %p190
      %p192 = scmp.ne.s32.totalorder %s180, %s181
      %p193 = scmp.eq.s32.totalorder %s45, 1
      %p194 = por %p192, %p193
      %p196 = scmp.ne.s32.totalorder %s181, %s195
      %p197 = scmp.eq.s32.totalorder %s45, 0
      %p198 = por %p196, %p197
      %s200 = sadd.s32 %s199, 1
      %p203 = scmp.eq.s32.totalorder %s39, 1
      %p204 = scmp.ne.s32.totalorder %s199, %s201
      %p205 = scmp.eq.s32.totalorder %s39, 0
      %p206 = por %p204, %p205
      %p207 = scmp.ne.s32.totalorder %s199, %s201
      %p208 = scmp.eq.s32.totalorder %s44, 1
      %p209 = por %p207, %p208
      %p210 = scmp.ne.s32.totalorder %s201, %s202
      %p211 = scmp.eq.s32.totalorder %s44, 0
      %p212 = por %p210, %p211
      %p213 = scmp.ne.s32.totalorder %s201, %s202
      %p214 = scmp.eq.s32.totalorder %s45, 1
      %p215 = por %p213, %p214
      %p217 = scmp.ne.s32.totalorder %s202, %s216
      %p218 = scmp.eq.s32.totalorder %s45, 0
      %p219 = por %p217, %p218
      %s221 = sadd.s32 %s220, 1
      %p224 = scmp.eq.s32.totalorder %s39, 1
      %p225 = scmp.ne.s32.totalorder %s220, %s222
      %p226 = scmp.eq.s32.totalorder %s39, 0
      %p227 = por %p225, %p226
      %p228 = scmp.ne.s32.totalorder %s220, %s222
      %p229 = scmp.eq.s32.totalorder %s44, 1
      %p230 = por %p228, %p229
      %p231 = scmp.ne.s32.totalorder %s222, %s223
      %p232 = scmp.eq.s32.totalorder %s44, 0
      %p233 = por %p231, %p232
      %p234 = scmp.ne.s32.totalorder %s222, %s223
      %p235 = scmp.eq.s32.totalorder %s45, 1
      %p236 = por %p234, %p235
      %p238 = scmp.ne.s32.totalorder %s223, %s237
      %p239 = scmp.eq.s32.totalorder %s45, 0
      %p240 = por %p238, %p239
      %s242 = sadd.s32 %s241, 1
      %p245 = scmp.eq.s32.totalorder %s39, 1
      %p246 = scmp.ne.s32.totalorder %s241, %s243
      %p247 = scmp.eq.s32.totalorder %s39, 0
      %p248 = por %p246, %p247
      %p249 = scmp.ne.s32.totalorder %s241, %s243
      %p250 = scmp.eq.s32.totalorder %s44, 1
      %p251 = por %p249, %p250
      %p252 = scmp.ne.s32.totalorder %s243, %s244
      %p253 = scmp.eq.s32.totalorder %s44, 0
      %p254 = por %p252, %p253
      %p255 = scmp.ne.s32.totalorder %s243, %s244
      %p256 = scmp.eq.s32.totalorder %s45, 1
      %p257 = por %p255, %p256
      %p259 = scmp.ne.s32.totalorder %s244, %s258
      %p260 = scmp.eq.s32.totalorder %s45, 0
      %p261 = por %p259, %p260
      %s263 = sadd.s32 %s262, 1
      %p266 = scmp.eq.s32.totalorder %s39, 1
      %p267 = scmp.ne.s32.totalorder %s262, %s264
      %p268 = scmp.eq.s32.totalorder %s39, 0
      %p269 = por %p267, %p268
      %p270 = scmp.ne.s32.totalorder %s262, %s264
      %p271 = scmp.eq.s32.totalorder %s44, 1
      %p272 = por %p270, %p271
      %p273 = scmp.ne.s32.totalorder %s264, %s265
      %p274 = scmp.eq.s32.totalorder %s44, 0
      %p275 = por %p273, %p274
      %p276 = scmp.ne.s32.totalorder %s264, %s265
      %p277 = scmp.eq.s32.totalorder %s45, 1
      %p278 = por %p276, %p277
      %p280 = scmp.ne.s32.totalorder %s265, %s279
      %p281 = scmp.eq.s32.totalorder %s45, 0
      %p282 = por %p280, %p281
      %s284 = sadd.s32 %s283, 1
      %p287 = scmp.eq.s32.totalorder %s39, 1
      %p288 = scmp.ne.s32.totalorder %s283, %s285
      %p289 = scmp.eq.s32.totalorder %s39, 0
      %p290 = por %p288, %p289
      %p291 = scmp.ne.s32.totalorder %s283, %s285
      %p292 = scmp.eq.s32.totalorder %s44, 1
      %p293 = por %p291, %p292
      %p294 = scmp.ne.s32.totalorder %s285, %s286
      %p295 = scmp.eq.s32.totalorder %s44, 0
      %p296 = por %p294, %p295
      %p297 = scmp.ne.s32.totalorder %s285, %s286
      %p298 = scmp.eq.s32.totalorder %s45, 1
      %p299 = por %p297, %p298
      %p301 = scmp.ne.s32.totalorder %s286, %s300
      %p302 = scmp.eq.s32.totalorder %s45, 0
      %p303 = por %p301, %p302
      %s305 = sadd.s32 %s304, 1
      %p308 = scmp.eq.s32.totalorder %s39, 1
      %p309 = scmp.ne.s32.totalorder %s304, %s306
      %p310 = scmp.eq.s32.totalorder %s39, 0
      %p311 = por %p309, %p310
      %p312 = scmp.ne.s32.totalorder %s304, %s306
      %p313 = scmp.eq.s32.totalorder %s44, 1
      %p314 = por %p312, %p313
      %p315 = scmp.ne.s32.totalorder %s306, %s307
      %p316 = scmp.eq.s32.totalorder %s44, 0
      %p317 = por %p315, %p316
      %p318 = scmp.ne.s32.totalorder %s306, %s307
      %p319 = scmp.eq.s32.totalorder %s45, 1
      %p320 = por %p318, %p319
      %p322 = scmp.ne.s32.totalorder %s307, %s321
      %p323 = scmp.eq.s32.totalorder %s45, 0
      %p324 = por %p322, %p323
      %s326 = sadd.s32 %s325, 1
      %p329 = scmp.eq.s32.totalorder %s39, 1
      %p330 = scmp.ne.s32.totalorder %s325, %s327
      %p331 = scmp.eq.s32.totalorder %s39, 0
      %p332 = por %p330, %p331
      %p333 = scmp.ne.s32.totalorder %s325, %s327
      %p334 = scmp.eq.s32.totalorder %s44, 1
      %p335 = por %p333, %p334
      %p336 = scmp.ne.s32.totalorder %s327, %s328
      %p337 = scmp.eq.s32.totalorder %s44, 0
      %p338 = por %p336, %p337
      %p339 = scmp.ne.s32.totalorder %s327, %s328
      %p340 = scmp.eq.s32.totalorder %s45, 1
      %p341 = por %p339, %p340
      %p343 = scmp.ne.s32.totalorder %s328, %s342
      %p344 = scmp.eq.s32.totalorder %s45, 0
      %p345 = por %p343, %p344
      %s347 = sadd.s32 %s346, 1
      %p350 = scmp.eq.s32.totalorder %s39, 1
      %p351 = scmp.ne.s32.totalorder %s346, %s348
      %p352 = scmp.eq.s32.totalorder %s39, 0
      %p353 = por %p351, %p352
      %p354 = scmp.ne.s32.totalorder %s346, %s348
      %p355 = scmp.eq.s32.totalorder %s44, 1
      %p356 = por %p354, %p355
      %p357 = scmp.ne.s32.totalorder %s348, %s349
      %p358 = scmp.eq.s32.totalorder %s44, 0
      %p359 = por %p357, %p358
      %p360 = scmp.ne.s32.totalorder %s348, %s349
      %p361 = scmp.eq.s32.totalorder %s45, 1
      %p362 = por %p360, %p361
      %p364 = scmp.ne.s32.totalorder %s349, %s363
      %p365 = scmp.eq.s32.totalorder %s45, 0
      %p366 = por %p364, %p365
      %s368 = sadd.s32 %s367, 1
      %p371 = scmp.eq.s32.totalorder %s39, 1
      %p372 = scmp.ne.s32.totalorder %s367, %s369
      %p373 = scmp.eq.s32.totalorder %s39, 0
      %p374 = por %p372, %p373
      %p375 = scmp.ne.s32.totalorder %s367, %s369
      %p376 = scmp.eq.s32.totalorder %s44, 1
      %p377 = por %p375, %p376
      %p378 = scmp.ne.s32.totalorder %s369, %s370
      %p379 = scmp.eq.s32.totalorder %s44, 0
      %p380 = por %p378, %p379
      %p381 = scmp.ne.s32.totalorder %s369, %s370
      %p382 = scmp.eq.s32.totalorder %s45, 1
      %p383 = por %p381, %p382
      %p385 = scmp.ne.s32.totalorder %s370, %s384
      %p386 = scmp.eq.s32.totalorder %s45, 0
      %p387 = por %p385, %p386
      %s389 = sadd.s32 %s388, 1
      %p392 = scmp.eq.s32.totalorder %s39, 1
      %p393 = scmp.ne.s32.totalorder %s388, %s390
      %p394 = scmp.eq.s32.totalorder %s39, 0
      %p395 = por %p393, %p394
      %p396 = scmp.ne.s32.totalorder %s388, %s390
      %p397 = scmp.eq.s32.totalorder %s44, 1
      %p398 = por %p396, %p397
      %p399 = scmp.ne.s32.totalorder %s390, %s391
      %p400 = scmp.eq.s32.totalorder %s44, 0
      %p401 = por %p399, %p400
      %p402 = scmp.ne.s32.totalorder %s390, %s391
      %p403 = scmp.eq.s32.totalorder %s45, 1
      %p404 = por %p402, %p403
      %p406 = scmp.ne.s32.totalorder %s391, %s405
      %p407 = scmp.eq.s32.totalorder %s45, 0
      %p408 = por %p406, %p407
      %s410 = sadd.s32 %s409, 1
      %p413 = scmp.eq.s32.totalorder %s39, 1
      %p414 = scmp.ne.s32.totalorder %s409, %s411
      %p415 = scmp.eq.s32.totalorder %s39, 0
      %p416 = por %p414, %p415
      %p417 = scmp.ne.s32.totalorder %s409, %s411
      %p418 = scmp.eq.s32.totalorder %s44, 1
      %p419 = por %p417, %p418
      %p420 = scmp.ne.s32.totalorder %s411, %s412
      %p421 = scmp.eq.s32.totalorder %s44, 0
      %p422 = por %p420, %p421
      %p423 = scmp.ne.s32.totalorder %s411, %s412
      %p424 = scmp.eq.s32.totalorder %s45, 1
      %p425 = por %p423, %p424
      %p427 = scmp.ne.s32.totalorder %s412, %s426
      %p428 = scmp.eq.s32.totalorder %s45, 0
      %p429 = por %p427, %p428
      %s431 = sadd.s32 %s430, 1
      %p434 = scmp.eq.s32.totalorder %s39, 1
      %p435 = scmp.ne.s32.totalorder %s430, %s432
      %p436 = scmp.eq.s32.totalorder %s39, 0
      %p437 = por %p435, %p436
      %p438 = scmp.ne.s32.totalorder %s430, %s432
      %p439 = scmp.eq.s32.totalorder %s44, 1
      %p440 = por %p438, %p439
      %p441 = scmp.ne.s32.totalorder %s432, %s433
      %p442 = scmp.eq.s32.totalorder %s44, 0
      %p443 = por %p441, %p442
      %p444 = scmp.ne.s32.totalorder %s432, %s433
      %p445 = scmp.eq.s32.totalorder %s45, 1
      %p446 = por %p444, %p445
      %p448 = scmp.ne.s32.totalorder %s433, %s447
      %p449 = scmp.eq.s32.totalorder %s45, 0
      %p450 = por %p448, %p449
      %s452 = sadd.s32 %s451, 1
      %p455 = scmp.eq.s32.totalorder %s39, 1
      %p456 = scmp.ne.s32.totalorder %s451, %s453
      %p457 = scmp.eq.s32.totalorder %s39, 0
      %p458 = por %p456, %p457
      %p459 = scmp.ne.s32.totalorder %s451, %s453
      %p460 = scmp.eq.s32.totalorder %s44, 1
      %p461 = por %p459, %p460
      %p462 = scmp.ne.s32.totalorder %s453, %s454
      %p463 = scmp.eq.s32.totalorder %s44, 0
      %p464 = por %p462, %p463
      %p465 = scmp.ne.s32.totalorder %s453, %s454
      %p466 = scmp.eq.s32.totalorder %s45, 1
      %p467 = por %p465, %p466
      %p469 = scmp.ne.s32.totalorder %s454, %s468
      %p470 = scmp.eq.s32.totalorder %s45, 0
      %p471 = por %p469, %p470
      %s473 = sadd.s32 %s472, 1
      %p476 = scmp.eq.s32.totalorder %s39, 1
      %p477 = scmp.ne.s32.totalorder %s472, %s474
      %p478 = scmp.eq.s32.totalorder %s39, 0
      %p479 = por %p477, %p478
      %p480 = scmp.ne.s32.totalorder %s472, %s474
      %p481 = scmp.eq.s32.totalorder %s44, 1
      %p482 = por %p480, %p481
      %p483 = scmp.ne.s32.totalorder %s474, %s475
      %p484 = scmp.eq.s32.totalorder %s44, 0
      %p485 = por %p483, %p484
      %p486 = scmp.ne.s32.totalorder %s474, %s475
      %p487 = scmp.eq.s32.totalorder %s45, 1
      %p488 = por %p486, %p487
      %p490 = scmp.ne.s32.totalorder %s475, %s489
      %p491 = scmp.eq.s32.totalorder %s45, 0
      %p492 = por %p490, %p491
      %s494 = sadd.s32 %s493, 1
      %p497 = scmp.eq.s32.totalorder %s39, 1
      %p498 = scmp.ne.s32.totalorder %s493, %s495
      %p499 = scmp.eq.s32.totalorder %s39, 0
      %p500 = por %p498, %p499
      %p501 = scmp.ne.s32.totalorder %s493, %s495
      %p502 = scmp.eq.s32.totalorder %s44, 1
      %p503 = por %p501, %p502
      %p504 = scmp.ne.s32.totalorder %s495, %s496
      %p505 = scmp.eq.s32.totalorder %s44, 0
      %p506 = por %p504, %p505
      %p507 = scmp.ne.s32.totalorder %s495, %s496
      %p508 = scmp.eq.s32.totalorder %s45, 1
      %p509 = por %p507, %p508
      %p511 = scmp.ne.s32.totalorder %s496, %s510
      %p512 = scmp.eq.s32.totalorder %s45, 0
      %p513 = por %p511, %p512
      %s514 = ssub.s32 %s39, %s46
      %p515 = scmp.eq.s32.totalorder %s514, 0
      %s517 = sadd.s32 %s516, 1
      %s518 = scalar_select %p515, %s516, %s517
      %p521 = pneg %p515
      %p522 = scmp.eq.s32.totalorder %s39, 1
      %p523 = por %p521, %p522
      %p524 = scmp.ne.s32.totalorder %s516, %s519
      %p525 = scmp.eq.s32.totalorder %s39, 0
      %p526 = por %p524, %p525
      %p527 = scmp.ne.s32.totalorder %s516, %s519
      %p528 = scmp.eq.s32.totalorder %s44, 1
      %p529 = por %p527, %p528
      %p530 = scmp.ne.s32.totalorder %s519, %s520
      %p531 = scmp.eq.s32.totalorder %s44, 0
      %p532 = por %p530, %p531
      %p533 = scmp.ne.s32.totalorder %s519, %s520
      %p534 = scmp.eq.s32.totalorder %s45, 1
      %p535 = por %p533, %p534
      %p537 = scmp.ne.s32.totalorder %s520, %s536
      %p538 = scmp.eq.s32.totalorder %s45, 0
      %p539 = por %p537, %p538
      %p540 = scmp.le.s32.totalorder 1, %s39
      %p541 = scmp.lt.s32.totalorder %s39, 3
      %p542 = pnand %p540, %p541
      %p543 = pneg %p542
      // Predicated region
      $region9: #{tpu_custom_call.1} parent=5 // pred_check
        _
      $region10: #{tpu_custom_call.1} parent=5 // pred_check_branch
        %545 = sbr.rel (%p542) target = $region12
      $region11: #{tpu_custom_call.1} parent=5 // pred_region
        %s546 = ssub.s32 %s39, 1
        // Predicated region
        $region13: #{tpu_custom_call.1} parent=11 // pred_check
          %p547 = pneg %p86
        $region14: #{tpu_custom_call.1} parent=11 // pred_check_branch
          %549 = sbr.rel (%p547) target = $region16
        $region15: #{tpu_custom_call.1} parent=11 // pred_region
          %s551 = ssub.s32 1024, 1024
          %552 = vsyncadd [#allocation4], %s551
          %s553 = sshll.u32 [#allocation3], 4
          %s554 = int_to_ptr.vmem [resolvable:$true] %s553
          %559 = dma.hbm_to_vmem [thread:$0]  %s1, 1024, %s554, [#allocation4], 64, 64, 4
        $region16: #{tpu_custom_call.1} parent=11 // pred_fallthru
          _
        // Predicated region
        $region17: #{tpu_custom_call.1} parent=11 // pred_check
          %p560 = pneg %p107
        $region18: #{tpu_custom_call.1} parent=11 // pred_check_branch
          %562 = sbr.rel (%p560) target = $region20
        $region19: #{tpu_custom_call.1} parent=11 // pred_region
          _
        $region20: #{tpu_custom_call.1} parent=11 // pred_fallthru
          _
        // Predicated region
        $region21: #{tpu_custom_call.1} parent=11 // pred_check
          %p563 = pneg %p128
        $region22: #{tpu_custom_call.1} parent=11 // pred_check_branch
          %565 = sbr.rel (%p563) target = $region24
        $region23: #{tpu_custom_call.1} parent=11 // pred_region
          %s567 = ssub.s32 1024, 1024
          %568 = vsyncadd [#allocation7], %s567
          %s569 = sshll.u32 [#allocation6], 4
          %s570 = int_to_ptr.vmem [resolvable:$true] %s569
          %575 = dma.hbm_to_vmem [thread:$0]  %s3, 1024, %s570, [#allocation7], 64, 64, 4
        $region24: #{tpu_custom_call.1} parent=11 // pred_fallthru
          _
        // Predicated region
        $region25: #{tpu_custom_call.1} parent=11 // pred_check
          %p576 = pneg %p149
        $region26: #{tpu_custom_call.1} parent=11 // pred_check_branch
          %578 = sbr.rel (%p576) target = $region28
        $region27: #{tpu_custom_call.1} parent=11 // pred_region
          %s580 = ssub.s32 16, 16
          %581 = vsyncadd [#allocation7], %s580
          %s583 = sshll.u32 [#allocation8], 4
          %s584 = int_to_ptr.vmem [resolvable:$true] %s583
          %586 = dma.hbm_to_vmem [thread:$0]  %s4, 16, %s584, [#allocation7]
        $region28: #{tpu_custom_call.1} parent=11 // pred_fallthru
          _
        // Predicated region
        $region29: #{tpu_custom_call.1} parent=11 // pred_check
          %p587 = pneg %p170
        $region30: #{tpu_custom_call.1} parent=11 // pred_check_branch
          %589 = sbr.rel (%p587) target = $region32
        $region31: #{tpu_custom_call.1} parent=11 // pred_region
          %s591 = ssub.s32 1024, 1024
          %592 = vsyncadd [#allocation10], %s591
          %s593 = sshll.u32 [#allocation9], 4
          %s594 = int_to_ptr.vmem [resolvable:$true] %s593
          %599 = dma.hbm_to_vmem [thread:$0]  %s5, 1024, %s594, [#allocation10], 64, 64, 4
        $region32: #{tpu_custom_call.1} parent=11 // pred_fallthru
          _
        // Predicated region
        $region33: #{tpu_custom_call.1} parent=11 // pred_check
          %p600 = pneg %p191
        $region34: #{tpu_custom_call.1} parent=11 // pred_check_branch
          %602 = sbr.rel (%p600) target = $region36
        $region35: #{tpu_custom_call.1} parent=11 // pred_region
          %s604 = ssub.s32 16, 16
          %605 = vsyncadd [#allocation10], %s604
          %s607 = sshll.u32 [#allocation11], 4
          %s608 = int_to_ptr.vmem [resolvable:$true] %s607
          %610 = dma.hbm_to_vmem [thread:$0]  %s6, 16, %s608, [#allocation10]
        $region36: #{tpu_custom_call.1} parent=11 // pred_fallthru
          _
        // Predicated region
        $region37: #{tpu_custom_call.1} parent=11 // pred_check
          %p611 = pneg %p212
        $region38: #{tpu_custom_call.1} parent=11 // pred_check_branch
          %613 = sbr.rel (%p611) target = $region40
        $region39: #{tpu_custom_call.1} parent=11 // pred_region
          _
        $region40: #{tpu_custom_call.1} parent=11 // pred_fallthru
          _
        // Predicated region
        $region41: #{tpu_custom_call.1} parent=11 // pred_check
          %p614 = pneg %p233
        $region42: #{tpu_custom_call.1} parent=11 // pred_check_branch
          %616 = sbr.rel (%p614) target = $region44
        $region43: #{tpu_custom_call.1} parent=11 // pred_region
          _
        $region44: #{tpu_custom_call.1} parent=11 // pred_fallthru
          _
        // Predicated region
        $region45: #{tpu_custom_call.1} parent=11 // pred_check
          %p617 = pneg %p254
        $region46: #{tpu_custom_call.1} parent=11 // pred_check_branch
          %619 = sbr.rel (%p617) target = $region48
        $region47: #{tpu_custom_call.1} parent=11 // pred_region
          _
        $region48: #{tpu_custom_call.1} parent=11 // pred_fallthru
          _
        // Predicated region
        $region49: #{tpu_custom_call.1} parent=11 // pred_check
          %p620 = pneg %p275
        $region50: #{tpu_custom_call.1} parent=11 // pred_check_branch
          %622 = sbr.rel (%p620) target = $region52
        $region51: #{tpu_custom_call.1} parent=11 // pred_region
          %s624 = ssub.s32 1024, 1024
          %625 = vsyncadd [#allocation13], %s624
          %s626 = sshll.u32 [#allocation12], 4
          %s627 = int_to_ptr.vmem [resolvable:$true] %s626
          %632 = dma.hbm_to_vmem [thread:$0]  %s10, 1024, %s627, [#allocation13], 64, 64, 4
        $region52: #{tpu_custom_call.1} parent=11 // pred_fallthru
          _
        // Predicated region
        $region53: #{tpu_custom_call.1} parent=11 // pred_check
          %p633 = pneg %p296
        $region54: #{tpu_custom_call.1} parent=11 // pred_check_branch
          %635 = sbr.rel (%p633) target = $region56
        $region55: #{tpu_custom_call.1} parent=11 // pred_region
          %s637 = ssub.s32 1024, 1024
          %638 = vsyncadd [#allocation13], %s637
          %s639 = sshll.u32 [#allocation14], 4
          %s640 = int_to_ptr.vmem [resolvable:$true] %s639
          %645 = dma.hbm_to_vmem [thread:$0]  %s11, 1024, %s640, [#allocation13], 64, 64, 4
        $region56: #{tpu_custom_call.1} parent=11 // pred_fallthru
          _
        // Predicated region
        $region57: #{tpu_custom_call.1} parent=11 // pred_check
          %p646 = pneg %p317
        $region58: #{tpu_custom_call.1} parent=11 // pred_check_branch
          %648 = sbr.rel (%p646) target = $region60
        $region59: #{tpu_custom_call.1} parent=11 // pred_region
          %s650 = ssub.s32 1024, 1024
          %651 = vsyncadd [#allocation16], %s650
          %s652 = sshll.u32 [#allocation15], 4
          %s653 = int_to_ptr.vmem [resolvable:$true] %s652
          %658 = dma.hbm_to_vmem [thread:$0]  %s12, 1024, %s653, [#allocation16], 64, 64, 4
        $region60: #{tpu_custom_call.1} parent=11 // pred_fallthru
          _
        // Predicated region
        $region61: #{tpu_custom_call.1} parent=11 // pred_check
          %p659 = pneg %p338
        $region62: #{tpu_custom_call.1} parent=11 // pred_check_branch
          %661 = sbr.rel (%p659) target = $region64
        $region63: #{tpu_custom_call.1} parent=11 // pred_region
          %s663 = ssub.s32 16, 16
          %664 = vsyncadd [#allocation16], %s663
          %s666 = sshll.u32 [#allocation17], 4
          %s667 = int_to_ptr.vmem [resolvable:$true] %s666
          %669 = dma.hbm_to_vmem [thread:$0]  %s13, 16, %s667, [#allocation16]
        $region64: #{tpu_custom_call.1} parent=11 // pred_fallthru
          _
        // Predicated region
        $region65: #{tpu_custom_call.1} parent=11 // pred_check
          %p670 = pneg %p359
        $region66: #{tpu_custom_call.1} parent=11 // pred_check_branch
          %672 = sbr.rel (%p670) target = $region68
        $region67: #{tpu_custom_call.1} parent=11 // pred_region
          %s674 = ssub.s32 1024, 1024
          %675 = vsyncadd [#allocation19], %s674
          %s676 = sshll.u32 [#allocation18], 4
          %s677 = int_to_ptr.vmem [resolvable:$true] %s676
          %682 = dma.hbm_to_vmem [thread:$0]  %s14, 1024, %s677, [#allocation19], 64, 64, 4
        $region68: #{tpu_custom_call.1} parent=11 // pred_fallthru
          _
        // Predicated region
        $region69: #{tpu_custom_call.1} parent=11 // pred_check
          %p683 = pneg %p380
        $region70: #{tpu_custom_call.1} parent=11 // pred_check_branch
          %685 = sbr.rel (%p683) target = $region72
        $region71: #{tpu_custom_call.1} parent=11 // pred_region
          %s687 = ssub.s32 1024, 1024
          %688 = vsyncadd [#allocation19], %s687
          %s689 = sshll.u32 [#allocation20], 4
          %s690 = int_to_ptr.vmem [resolvable:$true] %s689
          %695 = dma.hbm_to_vmem [thread:$0]  %s15, 1024, %s690, [#allocation19], 64, 64, 4
        $region72: #{tpu_custom_call.1} parent=11 // pred_fallthru
          _
        // Predicated region
        $region73: #{tpu_custom_call.1} parent=11 // pred_check
          %p696 = pneg %p401
        $region74: #{tpu_custom_call.1} parent=11 // pred_check_branch
          %698 = sbr.rel (%p696) target = $region76
        $region75: #{tpu_custom_call.1} parent=11 // pred_region
          %s700 = ssub.s32 1024, 1024
          %701 = vsyncadd [#allocation22], %s700
          %s702 = sshll.u32 [#allocation21], 4
          %s703 = int_to_ptr.vmem [resolvable:$true] %s702
          %708 = dma.hbm_to_vmem [thread:$0]  %s16, 1024, %s703, [#allocation22], 64, 64, 4
        $region76: #{tpu_custom_call.1} parent=11 // pred_fallthru
          _
        // Predicated region
        $region77: #{tpu_custom_call.1} parent=11 // pred_check
          %p709 = pneg %p422
        $region78: #{tpu_custom_call.1} parent=11 // pred_check_branch
          %711 = sbr.rel (%p709) target = $region80
        $region79: #{tpu_custom_call.1} parent=11 // pred_region
          _
        $region80: #{tpu_custom_call.1} parent=11 // pred_fallthru
          _
        // Predicated region
        $region81: #{tpu_custom_call.1} parent=11 // pred_check
          %p712 = pneg %p443
        $region82: #{tpu_custom_call.1} parent=11 // pred_check_branch
          %714 = sbr.rel (%p712) target = $region84
        $region83: #{tpu_custom_call.1} parent=11 // pred_region
          _
        $region84: #{tpu_custom_call.1} parent=11 // pred_fallthru
          _
        // Predicated region
        $region85: #{tpu_custom_call.1} parent=11 // pred_check
          %p715 = pneg %p464
        $region86: #{tpu_custom_call.1} parent=11 // pred_check_branch
          %717 = sbr.rel (%p715) target = $region88
        $region87: #{tpu_custom_call.1} parent=11 // pred_region
          _
        $region88: #{tpu_custom_call.1} parent=11 // pred_fallthru
          _
        // Predicated region
        $region89: #{tpu_custom_call.1} parent=11 // pred_check
          %p718 = pneg %p485
        $region90: #{tpu_custom_call.1} parent=11 // pred_check_branch
          %720 = sbr.rel (%p718) target = $region92
        $region91: #{tpu_custom_call.1} parent=11 // pred_region
          _
        $region92: #{tpu_custom_call.1} parent=11 // pred_fallthru
          _
        // Predicated region
        $region93: #{tpu_custom_call.1} parent=11 // pred_check
          %p721 = pneg %p506
        $region94: #{tpu_custom_call.1} parent=11 // pred_check_branch
          %723 = sbr.rel (%p721) target = $region96
        $region95: #{tpu_custom_call.1} parent=11 // pred_region
          _
        $region96: #{tpu_custom_call.1} parent=11 // pred_fallthru
          _
      $region12: #{tpu_custom_call.1} parent=5 // pred_fallthru
        _
      %p724 = scmp.lt.s32.totalorder %s39, 2
      // Predicated region
      $region97: #{tpu_custom_call.1} parent=5 // pred_check
        %p725 = pneg %p724
      $region98: #{tpu_custom_call.1} parent=5 // pred_check_branch
        %727 = sbr.rel (%p725) target = $region100
      $region99: #{tpu_custom_call.1} parent=5 // pred_region
        // Predicated region
        $region101: #{tpu_custom_call.1} parent=99 // pred_check
          %p728 = pneg %p59
        $region102: #{tpu_custom_call.1} parent=99 // pred_check_branch
          %730 = sbr.rel (%p728) target = $region104
        $region103: #{tpu_custom_call.1} parent=99 // pred_region
          %s731 = smul.u32 2, %s39
          %p732 = scmp.lt.s32.totalorder %s731, 3
          %s733 = scalar_select %p732, %s731, 3
          %s734 = smul.addr %s733, 8
          %s735 = scalar_lea.vmem %s0, %s734
          %s736 = smul.u32 2, %s39
        $region104: #{tpu_custom_call.1} parent=99 // pred_fallthru
          _
      $region100: #{tpu_custom_call.1} parent=5 // pred_fallthru
        _
      %p737 = scmp.le.s32.totalorder 1, %s39
      %p738 = scmp.lt.s32.totalorder %s39, 3
      %p739 = pnand %p737, %p738
      %p740 = pneg %p739
      // Predicated region
      $region105: #{tpu_custom_call.1} parent=5 // pred_check
        _
      $region106: #{tpu_custom_call.1} parent=5 // pred_check_branch
        %742 = sbr.rel (%p739) target = $region108
      $region107: #{tpu_custom_call.1} parent=5 // pred_region
        %s743 = ssub.s32 %s39, 1
        // Predicated region
        $region109: #{tpu_custom_call.1} parent=107 // pred_check
          %p744 = pneg %p86
        $region110: #{tpu_custom_call.1} parent=107 // pred_check_branch
          %746 = sbr.rel (%p744) target = $region112
        $region111: #{tpu_custom_call.1} parent=107 // pred_region
          %747 = dma.done [#allocation4], 1024
        $region112: #{tpu_custom_call.1} parent=107 // pred_fallthru
          _
        // Predicated region
        $region113: #{tpu_custom_call.1} parent=107 // pred_check
          %p748 = pneg %p128
        $region114: #{tpu_custom_call.1} parent=107 // pred_check_branch
          %750 = sbr.rel (%p748) target = $region116
        $region115: #{tpu_custom_call.1} parent=107 // pred_region
          %751 = dma.done [#allocation7], 1024
        $region116: #{tpu_custom_call.1} parent=107 // pred_fallthru
          _
        // Predicated region
        $region117: #{tpu_custom_call.1} parent=107 // pred_check
          %p752 = pneg %p149
        $region118: #{tpu_custom_call.1} parent=107 // pred_check_branch
          %754 = sbr.rel (%p752) target = $region120
        $region119: #{tpu_custom_call.1} parent=107 // pred_region
          %755 = dma.done [#allocation7], 16
        $region120: #{tpu_custom_call.1} parent=107 // pred_fallthru
          _
        // Predicated region
        $region121: #{tpu_custom_call.1} parent=107 // pred_check
          %p756 = pneg %p170
        $region122: #{tpu_custom_call.1} parent=107 // pred_check_branch
          %758 = sbr.rel (%p756) target = $region124
        $region123: #{tpu_custom_call.1} parent=107 // pred_region
          %759 = dma.done [#allocation10], 1024
        $region124: #{tpu_custom_call.1} parent=107 // pred_fallthru
          _
        // Predicated region
        $region125: #{tpu_custom_call.1} parent=107 // pred_check
          %p760 = pneg %p191
        $region126: #{tpu_custom_call.1} parent=107 // pred_check_branch
          %762 = sbr.rel (%p760) target = $region128
        $region127: #{tpu_custom_call.1} parent=107 // pred_region
          %763 = dma.done [#allocation10], 16
        $region128: #{tpu_custom_call.1} parent=107 // pred_fallthru
          _
        // Predicated region
        $region129: #{tpu_custom_call.1} parent=107 // pred_check
          %p764 = pneg %p275
        $region130: #{tpu_custom_call.1} parent=107 // pred_check_branch
          %766 = sbr.rel (%p764) target = $region132
        $region131: #{tpu_custom_call.1} parent=107 // pred_region
          %767 = dma.done [#allocation13], 1024
        $region132: #{tpu_custom_call.1} parent=107 // pred_fallthru
          _
        // Predicated region
        $region133: #{tpu_custom_call.1} parent=107 // pred_check
          %p768 = pneg %p296
        $region134: #{tpu_custom_call.1} parent=107 // pred_check_branch
          %770 = sbr.rel (%p768) target = $region136
        $region135: #{tpu_custom_call.1} parent=107 // pred_region
          %771 = dma.done [#allocation13], 1024
        $region136: #{tpu_custom_call.1} parent=107 // pred_fallthru
          _
        // Predicated region
        $region137: #{tpu_custom_call.1} parent=107 // pred_check
          %p772 = pneg %p317
        $region138: #{tpu_custom_call.1} parent=107 // pred_check_branch
          %774 = sbr.rel (%p772) target = $region140
        $region139: #{tpu_custom_call.1} parent=107 // pred_region
          %775 = dma.done [#allocation16], 1024
        $region140: #{tpu_custom_call.1} parent=107 // pred_fallthru
          _
        // Predicated region
        $region141: #{tpu_custom_call.1} parent=107 // pred_check
          %p776 = pneg %p338
        $region142: #{tpu_custom_call.1} parent=107 // pred_check_branch
          %778 = sbr.rel (%p776) target = $region144
        $region143: #{tpu_custom_call.1} parent=107 // pred_region
          %779 = dma.done [#allocation16], 16
        $region144: #{tpu_custom_call.1} parent=107 // pred_fallthru
          _
        // Predicated region
        $region145: #{tpu_custom_call.1} parent=107 // pred_check
          %p780 = pneg %p359
        $region146: #{tpu_custom_call.1} parent=107 // pred_check_branch
          %782 = sbr.rel (%p780) target = $region148
        $region147: #{tpu_custom_call.1} parent=107 // pred_region
          %783 = dma.done [#allocation19], 1024
        $region148: #{tpu_custom_call.1} parent=107 // pred_fallthru
          _
        // Predicated region
        $region149: #{tpu_custom_call.1} parent=107 // pred_check
          %p784 = pneg %p380
        $region150: #{tpu_custom_call.1} parent=107 // pred_check_branch
          %786 = sbr.rel (%p784) target = $region152
        $region151: #{tpu_custom_call.1} parent=107 // pred_region
          %787 = dma.done [#allocation19], 1024
        $region152: #{tpu_custom_call.1} parent=107 // pred_fallthru
          _
        // Predicated region
        $region153: #{tpu_custom_call.1} parent=107 // pred_check
          %p788 = pneg %p401
        $region154: #{tpu_custom_call.1} parent=107 // pred_check_branch
          %790 = sbr.rel (%p788) target = $region156
        $region155: #{tpu_custom_call.1} parent=107 // pred_region
          %791 = dma.done [#allocation22], 1024
        $region156: #{tpu_custom_call.1} parent=107 // pred_fallthru
          _
        %s792 = smul.u32 2, %s44
        %p793 = scmp.lt.s32.totalorder %s792, 3
        %s794 = scalar_select %p793, %s792, 3
        %s795 = smul.addr %s794, 8
        %s796 = scalar_lea.vmem %s0, %s795
        %p797 = pneg %p65
        %p798 = pneg %p62
        %p799 = pneg %p86
        %p800 = pneg %p83
        %p801 = pneg %p107
        %p802 = pneg %p104
        %p803 = pneg %p128
        %p804 = pneg %p125
        %p805 = pneg %p149
        %p806 = pneg %p146
        %p807 = pneg %p170
        %p808 = pneg %p167
        %p809 = pneg %p191
        %p810 = pneg %p188
        %p811 = pneg %p212
        %p812 = pneg %p209
        %p813 = pneg %p233
        %p814 = pneg %p230
        %p815 = pneg %p254
        %p816 = pneg %p251
        %p817 = pneg %p275
        %p818 = pneg %p272
        %p819 = pneg %p296
        %p820 = pneg %p293
        %p821 = pneg %p317
        %p822 = pneg %p314
        %p823 = pneg %p338
        %p824 = pneg %p335
        %p825 = pneg %p359
        %p826 = pneg %p356
        %p827 = pneg %p380
        %p828 = pneg %p377
        %p829 = pneg %p401
        %p830 = pneg %p398
        %p831 = pneg %p422
        %p832 = pneg %p419
        %p833 = pneg %p443
        %p834 = pneg %p440
        %p835 = pneg %p464
        %p836 = pneg %p461
        %p837 = pneg %p485
        %p838 = pneg %p482
        %p839 = pneg %p506
        %p840 = pneg %p503
        %p841 = pneg %p532
        %p842 = pneg %p529
        %s843 = sand.u32 %s519, 1
        %s844 = scalar_lea.sflag [#allocation5], %s843
        %s845 = sand.u32 %s519, 1
        %s846 = smul.addr %s845, 2
        %s847 = scalar_lea.vmem [#allocation23], %s846
        %s848 = smul.u32 2, %s44
        %p849 = scmp.lt.s32.totalorder %s848, 3
        %s850 = scalar_select %p849, %s848, 3
        %s851 = smul.addr %s850, 8
        %s852 = scalar_lea.vmem %s0, %s851
        %s853 = smul.u32 2, %s44
        %v855 = vld [vmem:[%s852] sm:$0xff]
        %v856 = vld [vmem:[%s852 + $0x8] sm:$0xff]
        %v857 = vpack.c.bf16 %v856, %v855
        %v858 = vld [vmem:[#allocation3] sm:$0xf]
        %v859 = vld [vmem:[#allocation3 + $0x4] sm:$0xf]
        %v860 = vld [vmem:[#allocation3 + $0x8] sm:$0xf]
        %v861 = vld [vmem:[#allocation3 + $0xc] sm:$0xf]
        %v862 = vld [vmem:[#allocation3 + $0x10] sm:$0xf]
        %v863 = vld [vmem:[#allocation3 + $0x14] sm:$0xf]
        %v864 = vld [vmem:[#allocation3 + $0x18] sm:$0xf]
        %v865 = vld [vmem:[#allocation3 + $0x1c] sm:$0xf]
        %v866 = vld [vmem:[#allocation3 + $0x20] sm:$0xf]
        %v867 = vld [vmem:[#allocation3 + $0x24] sm:$0xf]
        %v868 = vld [vmem:[#allocation3 + $0x28] sm:$0xf]
        %v869 = vld [vmem:[#allocation3 + $0x2c] sm:$0xf]
        %v870 = vld [vmem:[#allocation3 + $0x30] sm:$0xf]
        %v871 = vld [vmem:[#allocation3 + $0x34] sm:$0xf]
        %v872 = vld [vmem:[#allocation3 + $0x38] sm:$0xf]
        %v873 = vld [vmem:[#allocation3 + $0x3c] sm:$0xf]
        %v874 = vld [vmem:[%s2] sm:$0x1]
        %v876 = vlaneseq
        %v877 = vshrl.u32 %v876, 7
        %v878 = vsub.s32 0, %v877
        %v879 = vrot.slane %v874, %v878
        %v897 = vunpack.c.l.b16 %v858
        %v898 = vunpack.c.l.b16 %v859
        %v899 = vunpack.c.l.b16 %v860
        %v900 = vunpack.c.l.b16 %v861
        %v901 = vunpack.c.l.b16 %v862
        %v902 = vunpack.c.l.b16 %v863
        %v903 = vunpack.c.l.b16 %v864
        %v904 = vunpack.c.l.b16 %v865
        %v905 = vunpack.c.l.b16 %v866
        %v906 = vunpack.c.l.b16 %v867
        %v907 = vunpack.c.l.b16 %v868
        %v908 = vunpack.c.l.b16 %v869
        %v909 = vunpack.c.l.b16 %v870
        %v910 = vunpack.c.l.b16 %v871
        %v911 = vunpack.c.l.b16 %v872
        %v912 = vunpack.c.l.b16 %v873
        %v913 = vpack.c.b16 %v898, %v897
        %v914 = vpack.c.b16 %v900, %v899
        %v915 = vpack.c.b16 %v902, %v901
        %v916 = vpack.c.b16 %v904, %v903
        %v917 = vpack.c.b16 %v906, %v905
        %v918 = vpack.c.b16 %v908, %v907
        %v919 = vpack.c.b16 %v910, %v909
        %v920 = vpack.c.b16 %v912, %v911
        %929 = vmatprep.subr.bf16.mxu0 0
        %930 = vmatpush1.bf16.msra.mxu0 %v920
        %931 = vmatprep.subr.bf16.mxu0 0
        %932 = vmatpush1.bf16.msra.mxu0 %v919
        %933 = vmatprep.subr.bf16.mxu0 0
        %934 = vmatpush1.bf16.msra.mxu0 %v918
        %935 = vmatprep.subr.bf16.mxu0 0
        %936 = vmatpush1.bf16.msra.mxu0 %v917
        %937 = vmatprep.subr.bf16.mxu0 0
        %938 = vmatpush1.bf16.msra.mxu0 %v916
        %939 = vmatprep.subr.bf16.mxu0 0
        %940 = vmatpush1.bf16.msra.mxu0 %v915
        %941 = vmatprep.subr.bf16.mxu0 0
        %942 = vmatpush1.bf16.msra.mxu0 %v914
        %943 = vmatprep.subr.bf16.mxu0 0
        %944 = vmatpush1.bf16.msra.mxu0 %v913
        %945 = vmatprep.subr.bf16.mxu0 0
        %946 = vmatpush2.bf16.msra.mxu0 0
        %947 = vmatprep.subr.bf16.mxu0 0
        %948 = vmatpush2.bf16.msra.mxu0 0
        %949 = vmatprep.subr.bf16.mxu0 0
        %950 = vmatpush2.bf16.msra.mxu0 0
        %951 = vmatprep.subr.bf16.mxu0 0
        %952 = vmatpush2.bf16.msra.mxu0 0
        %953 = vmatprep.subr.bf16.mxu0 0
        %954 = vmatpush2.bf16.msra.mxu0 0
        %955 = vmatprep.subr.bf16.mxu0 0
        %956 = vmatpush2.bf16.msra.mxu0 0
        %957 = vmatprep.subr.bf16.mxu0 0
        %958 = vmatpush2.bf16.msra.mxu0 0
        %959 = vmatprep.subr.bf16.mxu0 0
        %960 = vmatpush2.bf16.msra.mxu0 0
        %961 = vmatprep.mubr.bf16.mxu0 0
        %962 = vmatmul.mubr.bf16.gmra.mxu0 %v857
        %v963 = vpop.f32.mrf.mxu0
        %v964 = vadd.f32 %v879, %v963
        %v965 = vpop.f32.mrf.mxu0
        %v966 = vpop.f32.mrf.mxu0
        %v967 = vadd.f32 %v879, %v966
        %v968 = vpop.f32.mrf.mxu0
        %969 = vdwg.mxu0
        %v970 = vmax.f32 %v964, 0.0
        %v971 = vmax.f32 %v967, 0.0
        %v972 = vpack.c.bf16 %v971, %v970
        %v973 = vld [vmem:[#allocation6] sm:$0xf]
        %v974 = vld [vmem:[#allocation6 + $0x4] sm:$0xf]
        %v975 = vld [vmem:[#allocation6 + $0x8] sm:$0xf]
        %v976 = vld [vmem:[#allocation6 + $0xc] sm:$0xf]
        %v977 = vld [vmem:[#allocation6 + $0x10] sm:$0xf]
        %v978 = vld [vmem:[#allocation6 + $0x14] sm:$0xf]
        %v979 = vld [vmem:[#allocation6 + $0x18] sm:$0xf]
        %v980 = vld [vmem:[#allocation6 + $0x1c] sm:$0xf]
        %v981 = vld [vmem:[#allocation6 + $0x20] sm:$0xf]
        %v982 = vld [vmem:[#allocation6 + $0x24] sm:$0xf]
        %v983 = vld [vmem:[#allocation6 + $0x28] sm:$0xf]
        %v984 = vld [vmem:[#allocation6 + $0x2c] sm:$0xf]
        %v985 = vld [vmem:[#allocation6 + $0x30] sm:$0xf]
        %v986 = vld [vmem:[#allocation6 + $0x34] sm:$0xf]
        %v987 = vld [vmem:[#allocation6 + $0x38] sm:$0xf]
        %v988 = vld [vmem:[#allocation6 + $0x3c] sm:$0xf]
        %v989 = vld [vmem:[#allocation8] sm:$0x1]
        %v991 = vlaneseq
        %v992 = vshrl.u32 %v991, 7
        %v993 = vsub.s32 0, %v992
        %v994 = vrot.slane %v989, %v993
        %v1012 = vunpack.c.l.b16 %v973
        %v1013 = vunpack.c.l.b16 %v974
        %v1014 = vunpack.c.l.b16 %v975
        %v1015 = vunpack.c.l.b16 %v976
        %v1016 = vunpack.c.l.b16 %v977
        %v1017 = vunpack.c.l.b16 %v978
        %v1018 = vunpack.c.l.b16 %v979
        %v1019 = vunpack.c.l.b16 %v980
        %v1020 = vunpack.c.l.b16 %v981
        %v1021 = vunpack.c.l.b16 %v982
        %v1022 = vunpack.c.l.b16 %v983
        %v1023 = vunpack.c.l.b16 %v984
        %v1024 = vunpack.c.l.b16 %v985
        %v1025 = vunpack.c.l.b16 %v986
        %v1026 = vunpack.c.l.b16 %v987
        %v1027 = vunpack.c.l.b16 %v988
        %v1028 = vpack.c.b16 %v1013, %v1012
        %v1029 = vpack.c.b16 %v1015, %v1014
        %v1030 = vpack.c.b16 %v1017, %v1016
        %v1031 = vpack.c.b16 %v1019, %v1018
        %v1032 = vpack.c.b16 %v1021, %v1020
        %v1033 = vpack.c.b16 %v1023, %v1022
        %v1034 = vpack.c.b16 %v1025, %v1024
        %v1035 = vpack.c.b16 %v1027, %v1026
        %1044 = vmatprep.subr.bf16.mxu0 0
        %1045 = vmatpush1.bf16.msra.mxu0 %v1035
        %1046 = vmatprep.subr.bf16.mxu0 0
        %1047 = vmatpush1.bf16.msra.mxu0 %v1034
        %1048 = vmatprep.subr.bf16.mxu0 0
        %1049 = vmatpush1.bf16.msra.mxu0 %v1033
        %1050 = vmatprep.subr.bf16.mxu0 0
        %1051 = vmatpush1.bf16.msra.mxu0 %v1032
        %1052 = vmatprep.subr.bf16.mxu0 0
        %1053 = vmatpush1.bf16.msra.mxu0 %v1031
        %1054 = vmatprep.subr.bf16.mxu0 0
        %1055 = vmatpush1.bf16.msra.mxu0 %v1030
        %1056 = vmatprep.subr.bf16.mxu0 0
        %1057 = vmatpush1.bf16.msra.mxu0 %v1029
        %1058 = vmatprep.subr.bf16.mxu0 0
        %1059 = vmatpush1.bf16.msra.mxu0 %v1028
        %1060 = vmatprep.subr.bf16.mxu0 0
        %1061 = vmatpush2.bf16.msra.mxu0 0
        %1062 = vmatprep.subr.bf16.mxu0 0
        %1063 = vmatpush2.bf16.msra.mxu0 0
        %1064 = vmatprep.subr.bf16.mxu0 0
        %1065 = vmatpush2.bf16.msra.mxu0 0
        %1066 = vmatprep.subr.bf16.mxu0 0
        %1067 = vmatpush2.bf16.msra.mxu0 0
        %1068 = vmatprep.subr.bf16.mxu0 0
        %1069 = vmatpush2.bf16.msra.mxu0 0
        %1070 = vmatprep.subr.bf16.mxu0 0
        %1071 = vmatpush2.bf16.msra.mxu0 0
        %1072 = vmatprep.subr.bf16.mxu0 0
        %1073 = vmatpush2.bf16.msra.mxu0 0
        %1074 = vmatprep.subr.bf16.mxu0 0
        %1075 = vmatpush2.bf16.msra.mxu0 0
        %1076 = vmatprep.mubr.bf16.mxu0 0
        %1077 = vmatmul.mubr.bf16.gmra.mxu0 %v972
        %v1078 = vpop.f32.mrf.mxu0
        %v1079 = vadd.f32 %v994, %v1078
        %v1080 = vpop.f32.mrf.mxu0
        %v1081 = vpop.f32.mrf.mxu0
        %v1082 = vadd.f32 %v994, %v1081
        %v1083 = vpop.f32.mrf.mxu0
        %1084 = vdwg.mxu0
        %v1085 = vadd.f32 %v1079, %v855
        %v1086 = vadd.f32 %v1082, %v856
        %v1087 = vpack.c.bf16 %v1086, %v1085
        %v1088 = vld [vmem:[#allocation9] sm:$0xf]
        %v1089 = vld [vmem:[#allocation9 + $0x4] sm:$0xf]
        %v1090 = vld [vmem:[#allocation9 + $0x8] sm:$0xf]
        %v1091 = vld [vmem:[#allocation9 + $0xc] sm:$0xf]
        %v1092 = vld [vmem:[#allocation9 + $0x10] sm:$0xf]
        %v1093 = vld [vmem:[#allocation9 + $0x14] sm:$0xf]
        %v1094 = vld [vmem:[#allocation9 + $0x18] sm:$0xf]
        %v1095 = vld [vmem:[#allocation9 + $0x1c] sm:$0xf]
        %v1096 = vld [vmem:[#allocation9 + $0x20] sm:$0xf]
        %v1097 = vld [vmem:[#allocation9 + $0x24] sm:$0xf]
        %v1098 = vld [vmem:[#allocation9 + $0x28] sm:$0xf]
        %v1099 = vld [vmem:[#allocation9 + $0x2c] sm:$0xf]
        %v1100 = vld [vmem:[#allocation9 + $0x30] sm:$0xf]
        %v1101 = vld [vmem:[#allocation9 + $0x34] sm:$0xf]
        %v1102 = vld [vmem:[#allocation9 + $0x38] sm:$0xf]
        %v1103 = vld [vmem:[#allocation9 + $0x3c] sm:$0xf]
        %v1104 = vld [vmem:[#allocation11] sm:$0x1]
        %v1106 = vlaneseq
        %v1107 = vshrl.u32 %v1106, 7
        %v1108 = vsub.s32 0, %v1107
        %v1109 = vrot.slane %v1104, %v1108
        %v1127 = vunpack.c.l.b16 %v1088
        %v1128 = vunpack.c.l.b16 %v1089
        %v1129 = vunpack.c.l.b16 %v1090
        %v1130 = vunpack.c.l.b16 %v1091
        %v1131 = vunpack.c.l.b16 %v1092
        %v1132 = vunpack.c.l.b16 %v1093
        %v1133 = vunpack.c.l.b16 %v1094
        %v1134 = vunpack.c.l.b16 %v1095
        %v1135 = vunpack.c.l.b16 %v1096
        %v1136 = vunpack.c.l.b16 %v1097
        %v1137 = vunpack.c.l.b16 %v1098
        %v1138 = vunpack.c.l.b16 %v1099
        %v1139 = vunpack.c.l.b16 %v1100
        %v1140 = vunpack.c.l.b16 %v1101
        %v1141 = vunpack.c.l.b16 %v1102
        %v1142 = vunpack.c.l.b16 %v1103
        %v1143 = vpack.c.b16 %v1128, %v1127
        %v1144 = vpack.c.b16 %v1130, %v1129
        %v1145 = vpack.c.b16 %v1132, %v1131
        %v1146 = vpack.c.b16 %v1134, %v1133
        %v1147 = vpack.c.b16 %v1136, %v1135
        %v1148 = vpack.c.b16 %v1138, %v1137
        %v1149 = vpack.c.b16 %v1140, %v1139
        %v1150 = vpack.c.b16 %v1142, %v1141
        %1159 = vmatprep.subr.bf16.mxu0 0
        %1160 = vmatpush1.bf16.msra.mxu0 %v1150
        %1161 = vmatprep.subr.bf16.mxu0 0
        %1162 = vmatpush1.bf16.msra.mxu0 %v1149
        %1163 = vmatprep.subr.bf16.mxu0 0
        %1164 = vmatpush1.bf16.msra.mxu0 %v1148
        %1165 = vmatprep.subr.bf16.mxu0 0
        %1166 = vmatpush1.bf16.msra.mxu0 %v1147
        %1167 = vmatprep.subr.bf16.mxu0 0
        %1168 = vmatpush1.bf16.msra.mxu0 %v1146
        %1169 = vmatprep.subr.bf16.mxu0 0
        %1170 = vmatpush1.bf16.msra.mxu0 %v1145
        %1171 = vmatprep.subr.bf16.mxu0 0
        %1172 = vmatpush1.bf16.msra.mxu0 %v1144
        %1173 = vmatprep.subr.bf16.mxu0 0
        %1174 = vmatpush1.bf16.msra.mxu0 %v1143
        %1175 = vmatprep.subr.bf16.mxu0 0
        %1176 = vmatpush2.bf16.msra.mxu0 0
        %1177 = vmatprep.subr.bf16.mxu0 0
        %1178 = vmatpush2.bf16.msra.mxu0 0
        %1179 = vmatprep.subr.bf16.mxu0 0
        %1180 = vmatpush2.bf16.msra.mxu0 0
        %1181 = vmatprep.subr.bf16.mxu0 0
        %1182 = vmatpush2.bf16.msra.mxu0 0
        %1183 = vmatprep.subr.bf16.mxu0 0
        %1184 = vmatpush2.bf16.msra.mxu0 0
        %1185 = vmatprep.subr.bf16.mxu0 0
        %1186 = vmatpush2.bf16.msra.mxu0 0
        %1187 = vmatprep.subr.bf16.mxu0 0
        %1188 = vmatpush2.bf16.msra.mxu0 0
        %1189 = vmatprep.subr.bf16.mxu0 0
        %1190 = vmatpush2.bf16.msra.mxu0 0
        %1191 = vmatprep.mubr.bf16.mxu0 0
        %1192 = vmatmul.mubr.bf16.gmra.mxu0 %v1087
        %v1193 = vpop.f32.mrf.mxu0
        %v1194 = vadd.f32 %v1109, %v1193
        %v1195 = vpop.f32.mrf.mxu0
        %v1196 = vpop.f32.mrf.mxu0
        %v1197 = vadd.f32 %v1109, %v1196
        %v1198 = vpop.f32.mrf.mxu0
        %1199 = vdwg.mxu0
        %v1200 = vld [vmem:[%s7] sm:$0xff]
        %v1201 = vld [vmem:[%s7 + $0x8] sm:$0xff]
        %v1202 = vld [vmem:[%s7 + $0x10] sm:$0xff]
        %v1203 = vld [vmem:[%s7 + $0x18] sm:$0xff]
        %v1204 = vld [vmem:[%s7 + $0x20] sm:$0xff]
        %v1205 = vld [vmem:[%s7 + $0x28] sm:$0xff]
        %v1206 = vld [vmem:[%s7 + $0x30] sm:$0xff]
        %v1207 = vld [vmem:[%s7 + $0x38] sm:$0xff]
        %vm1208 = vcmask 130048
        %v1210 = vsel %vm1208, %v1200, 0
        %v1213 = vsel %vm1208, %v1201, 0
        %v1216 = vsel %vm1208, %v1202, 0
        %v1219 = vsel %vm1208, %v1203, 0
        %v1222 = vsel %vm1208, %v1204, 0
        %v1225 = vsel %vm1208, %v1205, 0
        %v1228 = vsel %vm1208, %v1206, 0
        %v1231 = vsel %vm1208, %v1207, 0
        %1233 = vmatprep.subr.mxu0 0.0
        %1234 = vmatpush1.msra.mxu0 0.0
        %1235 = vmatprep.subr.mxu0 0.0
        %1236 = vmatpush1.msra.mxu0 0.0
        %1237 = vmatprep.subr.mxu0 0.0
        %1238 = vmatpush1.msra.mxu0 0.0
        %1239 = vmatprep.subr.mxu0 0.0
        %1240 = vmatpush1.msra.mxu0 0.0
        %1241 = vmatprep.subr.mxu0 0.0
        %1242 = vmatpush1.msra.mxu0 0.0
        %1243 = vmatprep.subr.mxu0 0.0
        %1244 = vmatpush1.msra.mxu0 0.0
        %1245 = vmatprep.subr.mxu0 0.0
        %1246 = vmatpush1.msra.mxu0 0.0
        %1247 = vmatprep.subr.mxu0 0.0
        %1248 = vmatpush1.msra.mxu0 0.0
        %1249 = vmatprep.subr.mxu0 0.0
        %1250 = vmatpush1.msra.mxu0 0.0
        %1251 = vmatprep.subr.mxu0 0.0
        %1252 = vmatpush1.msra.mxu0 0.0
        %1253 = vmatprep.subr.mxu0 0.0
        %1254 = vmatpush1.msra.mxu0 0.0
        %1255 = vmatprep.subr.mxu0 0.0
        %1256 = vmatpush1.msra.mxu0 0.0
        %1257 = vmatprep.subr.mxu0 0.0
        %1258 = vmatpush1.msra.mxu0 0.0
        %1259 = vmatprep.subr.mxu0 0.0
        %1260 = vmatpush1.msra.mxu0 0.0
        %1261 = vmatprep.subr.mxu0 0.0
        %1262 = vmatpush1.msra.mxu0 %v1197
        %1263 = vmatprep.subr.mxu0 0.0
        %1264 = vmatpush1.msra.mxu0 %v1194
        %1265 = vmatprep.subr.mxu0 0.0
        %1266 = vmatpush2.msra.mxu0 0.0
        %1267 = vmatprep.subr.mxu0 0.0
        %1268 = vmatpush2.msra.mxu0 0.0
        %1269 = vmatprep.subr.mxu0 0.0
        %1270 = vmatpush2.msra.mxu0 0.0
        %1271 = vmatprep.subr.mxu0 0.0
        %1272 = vmatpush2.msra.mxu0 0.0
        %1273 = vmatprep.subr.mxu0 0.0
        %1274 = vmatpush2.msra.mxu0 0.0
        %1275 = vmatprep.subr.mxu0 0.0
        %1276 = vmatpush2.msra.mxu0 0.0
        %1277 = vmatprep.subr.mxu0 0.0
        %1278 = vmatpush2.msra.mxu0 0.0
        %1279 = vmatprep.subr.mxu0 0.0
        %1280 = vmatpush2.msra.mxu0 0.0
        %1281 = vmatprep.subr.mxu0 0.0
        %1282 = vmatpush2.msra.mxu0 0.0
        %1283 = vmatprep.subr.mxu0 0.0
        %1284 = vmatpush2.msra.mxu0 0.0
        %1285 = vmatprep.subr.mxu0 0.0
        %1286 = vmatpush2.msra.mxu0 0.0
        %1287 = vmatprep.subr.mxu0 0.0
        %1288 = vmatpush2.msra.mxu0 0.0
        %1289 = vmatprep.subr.mxu0 0.0
        %1290 = vmatpush2.msra.mxu0 0.0
        %1291 = vmatprep.subr.mxu0 0.0
        %1292 = vmatpush2.msra.mxu0 0.0
        %1293 = vmatprep.subr.mxu0 0.0
        %1294 = vmatpush2.msra.mxu0 0.0
        %1295 = vmatprep.subr.mxu0 0.0
        %1296 = vmatpush2.msra.mxu0 0.0
        %1297 = vmatprep.mubr.f32.mxu0 0.0
        %1298 = vmatmul.mubr.f32.gmra.mxu0 %v1210
        %v1299 = vpop.f32.mrf.mxu0
        %v1300 = vadd.f32 0.0, %v1299
        %v1301 = vpop.f32.mrf.mxu0
        %1302 = vmatprep.mubr.f32.mxu0 0.0
        %1303 = vmatmul.mubr.f32.gmra.mxu0 %v1213
        %v1304 = vpop.f32.mrf.mxu0
        %v1305 = vadd.f32 0.0, %v1304
        %v1306 = vpop.f32.mrf.mxu0
        %1307 = vmatprep.mubr.f32.mxu0 0.0
        %1308 = vmatmul.mubr.f32.gmra.mxu0 %v1216
        %v1309 = vpop.f32.mrf.mxu0
        %v1310 = vadd.f32 0.0, %v1309
        %v1311 = vpop.f32.mrf.mxu0
        %1312 = vmatprep.mubr.f32.mxu0 0.0
        %1313 = vmatmul.mubr.f32.gmra.mxu0 %v1219
        %v1314 = vpop.f32.mrf.mxu0
        %v1315 = vadd.f32 0.0, %v1314
        %v1316 = vpop.f32.mrf.mxu0
        %1317 = vmatprep.mubr.f32.mxu0 0.0
        %1318 = vmatmul.mubr.f32.gmra.mxu0 %v1222
        %v1319 = vpop.f32.mrf.mxu0
        %v1320 = vadd.f32 0.0, %v1319
        %v1321 = vpop.f32.mrf.mxu0
        %1322 = vmatprep.mubr.f32.mxu0 0.0
        %1323 = vmatmul.mubr.f32.gmra.mxu0 %v1225
        %v1324 = vpop.f32.mrf.mxu0
        %v1325 = vadd.f32 0.0, %v1324
        %v1326 = vpop.f32.mrf.mxu0
        %1327 = vmatprep.mubr.f32.mxu0 0.0
        %1328 = vmatmul.mubr.f32.gmra.mxu0 %v1228
        %v1329 = vpop.f32.mrf.mxu0
        %v1330 = vadd.f32 0.0, %v1329
        %v1331 = vpop.f32.mrf.mxu0
        %1332 = vmatprep.mubr.f32.mxu0 0.0
        %1333 = vmatmul.mubr.f32.gmra.mxu0 %v1231
        %v1334 = vpop.f32.mrf.mxu0
        %v1335 = vadd.f32 0.0, %v1334
        %v1336 = vpop.f32.mrf.mxu0
        %1337 = vdwg.mxu0
        %v1338 = vld [vmem:[%s8] sm:$0xff]
        %v1339 = vld [vmem:[%s8 + $0x8] sm:$0xff]
        %v1340 = vld [vmem:[%s8 + $0x10] sm:$0xff]
        %v1341 = vld [vmem:[%s8 + $0x18] sm:$0xff]
        %v1342 = vld [vmem:[%s8 + $0x20] sm:$0xff]
        %v1343 = vld [vmem:[%s8 + $0x28] sm:$0xff]
        %v1344 = vld [vmem:[%s8 + $0x30] sm:$0xff]
        %v1345 = vld [vmem:[%s8 + $0x38] sm:$0xff]
        %v1346 = vld [vmem:[%s8 + $0x40] sm:$0xff]
        %v1347 = vld [vmem:[%s8 + $0x48] sm:$0xff]
        %v1348 = vld [vmem:[%s8 + $0x50] sm:$0xff]
        %v1349 = vld [vmem:[%s8 + $0x58] sm:$0xff]
        %v1350 = vld [vmem:[%s8 + $0x60] sm:$0xff]
        %v1351 = vld [vmem:[%s8 + $0x68] sm:$0xff]
        %v1352 = vld [vmem:[%s8 + $0x70] sm:$0xff]
        %v1353 = vld [vmem:[%s8 + $0x78] sm:$0xff]
        %vm1354 = vcmask 523264
        %v1356 = vsel %vm1354, %v1338, 0
        %v1359 = vsel %vm1354, %v1339, 0
        %v1362 = vsel %vm1354, %v1340, 0
        %v1365 = vsel %vm1354, %v1341, 0
        %v1368 = vsel %vm1354, %v1342, 0
        %v1371 = vsel %vm1354, %v1343, 0
        %v1374 = vsel %vm1354, %v1344, 0
        %v1377 = vsel %vm1354, %v1345, 0
        %v1380 = vsel %vm1354, %v1346, 0
        %v1383 = vsel %vm1354, %v1347, 0
        %v1386 = vsel %vm1354, %v1348, 0
        %v1389 = vsel %vm1354, %v1349, 0
        %v1392 = vsel %vm1354, %v1350, 0
        %v1395 = vsel %vm1354, %v1351, 0
        %v1398 = vsel %vm1354, %v1352, 0
        %v1401 = vsel %vm1354, %v1353, 0
        %1403 = vmatprep.subr.mxu0 0.0
        %1404 = vmatpush1.msra.mxu0 0.0
        %1405 = vmatprep.subr.mxu0 0.0
        %1406 = vmatpush1.msra.mxu0 0.0
        %1407 = vmatprep.subr.mxu0 0.0
        %1408 = vmatpush1.msra.mxu0 0.0
        %1409 = vmatprep.subr.mxu0 0.0
        %1410 = vmatpush1.msra.mxu0 0.0
        %1411 = vmatprep.subr.mxu0 0.0
        %1412 = vmatpush1.msra.mxu0 0.0
        %1413 = vmatprep.subr.mxu0 0.0
        %1414 = vmatpush1.msra.mxu0 0.0
        %1415 = vmatprep.subr.mxu0 0.0
        %1416 = vmatpush1.msra.mxu0 0.0
        %1417 = vmatprep.subr.mxu0 0.0
        %1418 = vmatpush1.msra.mxu0 0.0
        %1419 = vmatprep.subr.mxu0 0.0
        %1420 = vmatpush1.msra.mxu0 %v1335
        %1421 = vmatprep.subr.mxu0 0.0
        %1422 = vmatpush1.msra.mxu0 %v1330
        %1423 = vmatprep.subr.mxu0 0.0
        %1424 = vmatpush1.msra.mxu0 %v1325
        %1425 = vmatprep.subr.mxu0 0.0
        %1426 = vmatpush1.msra.mxu0 %v1320
        %1427 = vmatprep.subr.mxu0 0.0
        %1428 = vmatpush1.msra.mxu0 %v1315
        %1429 = vmatprep.subr.mxu0 0.0
        %1430 = vmatpush1.msra.mxu0 %v1310
        %1431 = vmatprep.subr.mxu0 0.0
        %1432 = vmatpush1.msra.mxu0 %v1305
        %1433 = vmatprep.subr.mxu0 0.0
        %1434 = vmatpush1.msra.mxu0 %v1300
        %1435 = vmatprep.subr.mxu0 0.0
        %1436 = vmatpush2.msra.mxu0 0.0
        %1437 = vmatprep.subr.mxu0 0.0
        %1438 = vmatpush2.msra.mxu0 0.0
        %1439 = vmatprep.subr.mxu0 0.0
        %1440 = vmatpush2.msra.mxu0 0.0
        %1441 = vmatprep.subr.mxu0 0.0
        %1442 = vmatpush2.msra.mxu0 0.0
        %1443 = vmatprep.subr.mxu0 0.0
        %1444 = vmatpush2.msra.mxu0 0.0
        %1445 = vmatprep.subr.mxu0 0.0
        %1446 = vmatpush2.msra.mxu0 0.0
        %1447 = vmatprep.subr.mxu0 0.0
        %1448 = vmatpush2.msra.mxu0 0.0
        %1449 = vmatprep.subr.mxu0 0.0
        %1450 = vmatpush2.msra.mxu0 0.0
        %1451 = vmatprep.subr.mxu0 0.0
        %1452 = vmatpush2.msra.mxu0 0.0
        %1453 = vmatprep.subr.mxu0 0.0
        %1454 = vmatpush2.msra.mxu0 0.0
        %1455 = vmatprep.subr.mxu0 0.0
        %1456 = vmatpush2.msra.mxu0 0.0
        %1457 = vmatprep.subr.mxu0 0.0
        %1458 = vmatpush2.msra.mxu0 0.0
        %1459 = vmatprep.subr.mxu0 0.0
        %1460 = vmatpush2.msra.mxu0 0.0
        %1461 = vmatprep.subr.mxu0 0.0
        %1462 = vmatpush2.msra.mxu0 0.0
        %1463 = vmatprep.subr.mxu0 0.0
        %1464 = vmatpush2.msra.mxu0 0.0
        %1465 = vmatprep.subr.mxu0 0.0
        %1466 = vmatpush2.msra.mxu0 0.0
        %1467 = vmatprep.mubr.f32.mxu0 0.0
        %1468 = vmatmul.mubr.f32.gmra.mxu0 %v1356
        %v1469 = vpop.f32.mrf.mxu0
        %v1470 = vadd.f32 0.0, %v1469
        %v1471 = vpop.f32.mrf.mxu0
        %1472 = vmatprep.mubr.f32.mxu0 0.0
        %1473 = vmatmul.mubr.f32.gmra.mxu0 %v1359
        %v1474 = vpop.f32.mrf.mxu0
        %v1475 = vadd.f32 0.0, %v1474
        %v1476 = vpop.f32.mrf.mxu0
        %1477 = vmatprep.mubr.f32.mxu0 0.0
        %1478 = vmatmul.mubr.f32.gmra.mxu0 %v1362
        %v1479 = vpop.f32.mrf.mxu0
        %v1480 = vadd.f32 0.0, %v1479
        %v1481 = vpop.f32.mrf.mxu0
        %1482 = vmatprep.mubr.f32.mxu0 0.0
        %1483 = vmatmul.mubr.f32.gmra.mxu0 %v1365
        %v1484 = vpop.f32.mrf.mxu0
        %v1485 = vadd.f32 0.0, %v1484
        %v1486 = vpop.f32.mrf.mxu0
        %1487 = vmatprep.mubr.f32.mxu0 0.0
        %1488 = vmatmul.mubr.f32.gmra.mxu0 %v1368
        %v1489 = vpop.f32.mrf.mxu0
        %v1490 = vadd.f32 0.0, %v1489
        %v1491 = vpop.f32.mrf.mxu0
        %1492 = vmatprep.mubr.f32.mxu0 0.0
        %1493 = vmatmul.mubr.f32.gmra.mxu0 %v1371
        %v1494 = vpop.f32.mrf.mxu0
        %v1495 = vadd.f32 0.0, %v1494
        %v1496 = vpop.f32.mrf.mxu0
        %1497 = vmatprep.mubr.f32.mxu0 0.0
        %1498 = vmatmul.mubr.f32.gmra.mxu0 %v1374
        %v1499 = vpop.f32.mrf.mxu0
        %v1500 = vadd.f32 0.0, %v1499
        %v1501 = vpop.f32.mrf.mxu0
        %1502 = vmatprep.mubr.f32.mxu0 0.0
        %1503 = vmatmul.mubr.f32.gmra.mxu0 %v1377
        %v1504 = vpop.f32.mrf.mxu0
        %v1505 = vadd.f32 0.0, %v1504
        %v1506 = vpop.f32.mrf.mxu0
        %1507 = vmatprep.mubr.f32.mxu0 0.0
        %1508 = vmatmul.mubr.f32.gmra.mxu0 %v1380
        %v1509 = vpop.f32.mrf.mxu0
        %v1510 = vadd.f32 0.0, %v1509
        %v1511 = vpop.f32.mrf.mxu0
        %1512 = vmatprep.mubr.f32.mxu0 0.0
        %1513 = vmatmul.mubr.f32.gmra.mxu0 %v1383
        %v1514 = vpop.f32.mrf.mxu0
        %v1515 = vadd.f32 0.0, %v1514
        %v1516 = vpop.f32.mrf.mxu0
        %1517 = vmatprep.mubr.f32.mxu0 0.0
        %1518 = vmatmul.mubr.f32.gmra.mxu0 %v1386
        %v1519 = vpop.f32.mrf.mxu0
        %v1520 = vadd.f32 0.0, %v1519
        %v1521 = vpop.f32.mrf.mxu0
        %1522 = vmatprep.mubr.f32.mxu0 0.0
        %1523 = vmatmul.mubr.f32.gmra.mxu0 %v1389
        %v1524 = vpop.f32.mrf.mxu0
        %v1525 = vadd.f32 0.0, %v1524
        %v1526 = vpop.f32.mrf.mxu0
        %1527 = vmatprep.mubr.f32.mxu0 0.0
        %1528 = vmatmul.mubr.f32.gmra.mxu0 %v1392
        %v1529 = vpop.f32.mrf.mxu0
        %v1530 = vadd.f32 0.0, %v1529
        %v1531 = vpop.f32.mrf.mxu0
        %1532 = vmatprep.mubr.f32.mxu0 0.0
        %1533 = vmatmul.mubr.f32.gmra.mxu0 %v1395
        %v1534 = vpop.f32.mrf.mxu0
        %v1535 = vadd.f32 0.0, %v1534
        %v1536 = vpop.f32.mrf.mxu0
        %1537 = vmatprep.mubr.f32.mxu0 0.0
        %1538 = vmatmul.mubr.f32.gmra.mxu0 %v1398
        %v1539 = vpop.f32.mrf.mxu0
        %v1540 = vadd.f32 0.0, %v1539
        %v1541 = vpop.f32.mrf.mxu0
        %1542 = vmatprep.mubr.f32.mxu0 0.0
        %1543 = vmatmul.mubr.f32.gmra.mxu0 %v1401
        %v1544 = vpop.f32.mrf.mxu0
        %v1545 = vadd.f32 0.0, %v1544
        %v1546 = vpop.f32.mrf.mxu0
        %1547 = vdwg.mxu0
        %v1548 = vlaneseq
        %v1549 = vshrl.u32 %v1548, 7
        %v1550 = vadd.s32 %v1549, 8
        %v1551 = vadd.s32 %v1549, 16
        %v1552 = vadd.s32 %v1549, 24
        %v1553 = vadd.s32 %v1549, 32
        %v1554 = vadd.s32 %v1549, 40
        %v1555 = vadd.s32 %v1549, 48
        %v1556 = vadd.s32 %v1549, 56
        %v1557 = vadd.s32 %v1549, 64
        %v1558 = vadd.s32 %v1549, 72
        %v1559 = vadd.s32 %v1549, 80
        %v1560 = vadd.s32 %v1549, 88
        %v1561 = vadd.s32 %v1549, 96
        %v1562 = vadd.s32 %v1549, 104
        %v1563 = vadd.s32 %v1549, 112
        %v1564 = vadd.s32 %v1549, 120
        %vm1565 = vcmp.lt.s32.totalorder %v1549, 0
        %v1566 = vsub.s32 0, %v1549
        %v1567 = vsel %vm1565, %v1566, %v1549
        %v1568 = vshrl.u32 %v1567, 6
        %v1569 = vand.u32 %v1567, 63
        %v1570 = vsub.s32 0, %v1569
        %v1571 = vsel %vm1565, %v1570, %v1569
        %vm1572 = vcmp.lt.s32.totalorder %v1550, 0
        %v1573 = vsub.s32 0, %v1550
        %v1574 = vsel %vm1572, %v1573, %v1550
        %v1575 = vshrl.u32 %v1574, 6
        %v1576 = vand.u32 %v1574, 63
        %v1577 = vsub.s32 0, %v1576
        %v1578 = vsel %vm1572, %v1577, %v1576
        %vm1579 = vcmp.lt.s32.totalorder %v1551, 0
        %v1580 = vsub.s32 0, %v1551
        %v1581 = vsel %vm1579, %v1580, %v1551
        %v1582 = vshrl.u32 %v1581, 6
        %v1583 = vand.u32 %v1581, 63
        %v1584 = vsub.s32 0, %v1583
        %v1585 = vsel %vm1579, %v1584, %v1583
        %vm1586 = vcmp.lt.s32.totalorder %v1552, 0
        %v1587 = vsub.s32 0, %v1552
        %v1588 = vsel %vm1586, %v1587, %v1552
        %v1589 = vshrl.u32 %v1588, 6
        %v1590 = vand.u32 %v1588, 63
        %v1591 = vsub.s32 0, %v1590
        %v1592 = vsel %vm1586, %v1591, %v1590
        %vm1593 = vcmp.lt.s32.totalorder %v1553, 0
        %v1594 = vsub.s32 0, %v1553
        %v1595 = vsel %vm1593, %v1594, %v1553
        %v1596 = vshrl.u32 %v1595, 6
        %v1597 = vand.u32 %v1595, 63
        %v1598 = vsub.s32 0, %v1597
        %v1599 = vsel %vm1593, %v1598, %v1597
        %vm1600 = vcmp.lt.s32.totalorder %v1554, 0
        %v1601 = vsub.s32 0, %v1554
        %v1602 = vsel %vm1600, %v1601, %v1554
        %v1603 = vshrl.u32 %v1602, 6
        %v1604 = vand.u32 %v1602, 63
        %v1605 = vsub.s32 0, %v1604
        %v1606 = vsel %vm1600, %v1605, %v1604
        %vm1607 = vcmp.lt.s32.totalorder %v1555, 0
        %v1608 = vsub.s32 0, %v1555
        %v1609 = vsel %vm1607, %v1608, %v1555
        %v1610 = vshrl.u32 %v1609, 6
        %v1611 = vand.u32 %v1609, 63
        %v1612 = vsub.s32 0, %v1611
        %v1613 = vsel %vm1607, %v1612, %v1611
        %vm1614 = vcmp.lt.s32.totalorder %v1556, 0
        %v1615 = vsub.s32 0, %v1556
        %v1616 = vsel %vm1614, %v1615, %v1556
        %v1617 = vshrl.u32 %v1616, 6
        %v1618 = vand.u32 %v1616, 63
        %v1619 = vsub.s32 0, %v1618
        %v1620 = vsel %vm1614, %v1619, %v1618
        %vm1621 = vcmp.lt.s32.totalorder %v1557, 0
        %v1622 = vsub.s32 0, %v1557
        %v1623 = vsel %vm1621, %v1622, %v1557
        %v1624 = vshrl.u32 %v1623, 6
        %v1625 = vand.u32 %v1623, 63
        %v1626 = vsub.s32 0, %v1625
        %v1627 = vsel %vm1621, %v1626, %v1625
        %vm1628 = vcmp.lt.s32.totalorder %v1558, 0
        %v1629 = vsub.s32 0, %v1558
        %v1630 = vsel %vm1628, %v1629, %v1558
        %v1631 = vshrl.u32 %v1630, 6
        %v1632 = vand.u32 %v1630, 63
        %v1633 = vsub.s32 0, %v1632
        %v1634 = vsel %vm1628, %v1633, %v1632
        %vm1635 = vcmp.lt.s32.totalorder %v1559, 0
        %v1636 = vsub.s32 0, %v1559
        %v1637 = vsel %vm1635, %v1636, %v1559
        %v1638 = vshrl.u32 %v1637, 6
        %v1639 = vand.u32 %v1637, 63
        %v1640 = vsub.s32 0, %v1639
        %v1641 = vsel %vm1635, %v1640, %v1639
        %vm1642 = vcmp.lt.s32.totalorder %v1560, 0
        %v1643 = vsub.s32 0, %v1560
        %v1644 = vsel %vm1642, %v1643, %v1560
        %v1645 = vshrl.u32 %v1644, 6
        %v1646 = vand.u32 %v1644, 63
        %v1647 = vsub.s32 0, %v1646
        %v1648 = vsel %vm1642, %v1647, %v1646
        %vm1649 = vcmp.lt.s32.totalorder %v1561, 0
        %v1650 = vsub.s32 0, %v1561
        %v1651 = vsel %vm1649, %v1650, %v1561
        %v1652 = vshrl.u32 %v1651, 6
        %v1653 = vand.u32 %v1651, 63
        %v1654 = vsub.s32 0, %v1653
        %v1655 = vsel %vm1649, %v1654, %v1653
        %vm1656 = vcmp.lt.s32.totalorder %v1562, 0
        %v1657 = vsub.s32 0, %v1562
        %v1658 = vsel %vm1656, %v1657, %v1562
        %v1659 = vshrl.u32 %v1658, 6
        %v1660 = vand.u32 %v1658, 63
        %v1661 = vsub.s32 0, %v1660
        %v1662 = vsel %vm1656, %v1661, %v1660
        %vm1663 = vcmp.lt.s32.totalorder %v1563, 0
        %v1664 = vsub.s32 0, %v1563
        %v1665 = vsel %vm1663, %v1664, %v1563
        %v1666 = vshrl.u32 %v1665, 6
        %v1667 = vand.u32 %v1665, 63
        %v1668 = vsub.s32 0, %v1667
        %v1669 = vsel %vm1663, %v1668, %v1667
        %vm1670 = vcmp.lt.s32.totalorder %v1564, 0
        %v1671 = vsub.s32 0, %v1564
        %v1672 = vsel %vm1670, %v1671, %v1564
        %v1673 = vshrl.u32 %v1672, 6
        %v1674 = vand.u32 %v1672, 63
        %v1675 = vsub.s32 0, %v1674
        %v1676 = vsel %vm1670, %v1675, %v1674
        %vm1677 = vcmp.ne.s32.totalorder %v1571, 0
        %vm1678 = vcmp.ne.s32.totalorder %v1578, 0
        %vm1679 = vcmp.ne.s32.totalorder %v1585, 0
        %vm1680 = vcmp.ne.s32.totalorder %v1592, 0
        %vm1681 = vcmp.ne.s32.totalorder %v1599, 0
        %vm1682 = vcmp.ne.s32.totalorder %v1606, 0
        %vm1683 = vcmp.ne.s32.totalorder %v1613, 0
        %vm1684 = vcmp.ne.s32.totalorder %v1620, 0
        %vm1685 = vcmp.ne.s32.totalorder %v1627, 0
        %vm1686 = vcmp.ne.s32.totalorder %v1634, 0
        %vm1687 = vcmp.ne.s32.totalorder %v1641, 0
        %vm1688 = vcmp.ne.s32.totalorder %v1648, 0
        %vm1689 = vcmp.ne.s32.totalorder %v1655, 0
        %vm1690 = vcmp.ne.s32.totalorder %v1662, 0
        %vm1691 = vcmp.ne.s32.totalorder %v1669, 0
        %vm1692 = vcmp.ne.s32.totalorder %v1676, 0
        %vm1693 = vcmp.lt.s32.totalorder %v1571, 0
        %vm1694 = vcmp.lt.s32.totalorder %v1578, 0
        %vm1695 = vcmp.lt.s32.totalorder %v1585, 0
        %vm1696 = vcmp.lt.s32.totalorder %v1592, 0
        %vm1697 = vcmp.lt.s32.totalorder %v1599, 0
        %vm1698 = vcmp.lt.s32.totalorder %v1606, 0
        %vm1699 = vcmp.lt.s32.totalorder %v1613, 0
        %vm1700 = vcmp.lt.s32.totalorder %v1620, 0
        %vm1701 = vcmp.lt.s32.totalorder %v1627, 0
        %vm1702 = vcmp.lt.s32.totalorder %v1634, 0
        %vm1703 = vcmp.lt.s32.totalorder %v1641, 0
        %vm1704 = vcmp.lt.s32.totalorder %v1648, 0
        %vm1705 = vcmp.lt.s32.totalorder %v1655, 0
        %vm1706 = vcmp.lt.s32.totalorder %v1662, 0
        %vm1707 = vcmp.lt.s32.totalorder %v1669, 0
        %vm1708 = vcmp.lt.s32.totalorder %v1676, 0
        %vm1709 = vmand %vm1693, %vm1677
        %vm1710 = vmand %vm1694, %vm1678
        %vm1711 = vmand %vm1695, %vm1679
        %vm1712 = vmand %vm1696, %vm1680
        %vm1713 = vmand %vm1697, %vm1681
        %vm1714 = vmand %vm1698, %vm1682
        %vm1715 = vmand %vm1699, %vm1683
        %vm1716 = vmand %vm1700, %vm1684
        %vm1717 = vmand %vm1701, %vm1685
        %vm1718 = vmand %vm1702, %vm1686
        %vm1719 = vmand %vm1703, %vm1687
        %vm1720 = vmand %vm1704, %vm1688
        %vm1721 = vmand %vm1705, %vm1689
        %vm1722 = vmand %vm1706, %vm1690
        %vm1723 = vmand %vm1707, %vm1691
        %vm1724 = vmand %vm1708, %vm1692
        %v1725 = vadd.s32 %v1571, 64
        %v1726 = vadd.s32 %v1578, 64
        %v1727 = vadd.s32 %v1585, 64
        %v1728 = vadd.s32 %v1592, 64
        %v1729 = vadd.s32 %v1599, 64
        %v1730 = vadd.s32 %v1606, 64
        %v1731 = vadd.s32 %v1613, 64
        %v1732 = vadd.s32 %v1620, 64
        %v1733 = vadd.s32 %v1627, 64
        %v1734 = vadd.s32 %v1634, 64
        %v1735 = vadd.s32 %v1641, 64
        %v1736 = vadd.s32 %v1648, 64
        %v1737 = vadd.s32 %v1655, 64
        %v1738 = vadd.s32 %v1662, 64
        %v1739 = vadd.s32 %v1669, 64
        %v1740 = vadd.s32 %v1676, 64
        %v1741 = vsel %vm1709, %v1725, %v1571
        %v1742 = vsel %vm1710, %v1726, %v1578
        %v1743 = vsel %vm1711, %v1727, %v1585
        %v1744 = vsel %vm1712, %v1728, %v1592
        %v1745 = vsel %vm1713, %v1729, %v1599
        %v1746 = vsel %vm1714, %v1730, %v1606
        %v1747 = vsel %vm1715, %v1731, %v1613
        %v1748 = vsel %vm1716, %v1732, %v1620
        %v1749 = vsel %vm1717, %v1733, %v1627
        %v1750 = vsel %vm1718, %v1734, %v1634
        %v1751 = vsel %vm1719, %v1735, %v1641
        %v1752 = vsel %vm1720, %v1736, %v1648
        %v1753 = vsel %vm1721, %v1737, %v1655
        %v1754 = vsel %vm1722, %v1738, %v1662
        %v1755 = vsel %vm1723, %v1739, %v1669
        %v1756 = vsel %vm1724, %v1740, %v1676
        %vm1757 = vcmp.ne.s32.totalorder %v1741, 0
        %vm1758 = vcmp.ne.s32.totalorder %v1742, 0
        %vm1759 = vcmp.ne.s32.totalorder %v1743, 0
        %vm1760 = vcmp.ne.s32.totalorder %v1744, 0
        %vm1761 = vcmp.ne.s32.totalorder %v1745, 0
        %vm1762 = vcmp.ne.s32.totalorder %v1746, 0
        %vm1763 = vcmp.ne.s32.totalorder %v1747, 0
        %vm1764 = vcmp.ne.s32.totalorder %v1748, 0
        %vm1765 = vcmp.ne.s32.totalorder %v1749, 0
        %vm1766 = vcmp.ne.s32.totalorder %v1750, 0
        %vm1767 = vcmp.ne.s32.totalorder %v1751, 0
        %vm1768 = vcmp.ne.s32.totalorder %v1752, 0
        %vm1769 = vcmp.ne.s32.totalorder %v1753, 0
        %vm1770 = vcmp.ne.s32.totalorder %v1754, 0
        %vm1771 = vcmp.ne.s32.totalorder %v1755, 0
        %vm1772 = vcmp.ne.s32.totalorder %v1756, 0
        %v1773 = vrot.slane %v1470, 7
        %v1774 = vrot.slane %v1475, 7
        %v1775 = vrot.slane %v1480, 7
        %v1776 = vrot.slane %v1485, 7
        %v1777 = vrot.slane %v1490, 7
        %v1778 = vrot.slane %v1495, 7
        %v1779 = vrot.slane %v1500, 7
        %v1780 = vrot.slane %v1505, 7
        %v1781 = vrot.slane %v1510, 7
        %v1782 = vrot.slane %v1515, 7
        %v1783 = vrot.slane %v1520, 7
        %v1784 = vrot.slane %v1525, 7
        %v1785 = vrot.slane %v1530, 7
        %v1786 = vrot.slane %v1535, 7
        %v1787 = vrot.slane %v1540, 7
        %v1788 = vrot.slane %v1545, 7
        %vm1789 = vcmp.lt.s32.totalorder %v1549, 1
        %v1790 = vsel %vm1789, %v1787, %v1788
        %v1791 = vsel %vm1789, %v1786, %v1787
        %v1792 = vsel %vm1789, %v1785, %v1786
        %v1793 = vsel %vm1789, %v1784, %v1785
        %v1794 = vsel %vm1789, %v1783, %v1784
        %v1795 = vsel %vm1789, %v1782, %v1783
        %v1796 = vsel %vm1789, %v1781, %v1782
        %v1797 = vsel %vm1789, %v1780, %v1781
        %v1798 = vsel %vm1789, %v1779, %v1780
        %v1799 = vsel %vm1789, %v1778, %v1779
        %v1800 = vsel %vm1789, %v1777, %v1778
        %v1801 = vsel %vm1789, %v1776, %v1777
        %v1802 = vsel %vm1789, %v1775, %v1776
        %v1803 = vsel %vm1789, %v1774, %v1775
        %v1804 = vsel %vm1789, %v1773, %v1774
        %v1805 = vsel %vm1789, %v1788, %v1773
        %v1806 = vsel %vm1757, %v1805, 0.0
        %v1807 = vsel %vm1758, %v1804, 0.0
        %v1808 = vsel %vm1759, %v1803, 0.0
        %v1809 = vsel %vm1760, %v1802, 0.0
        %v1810 = vsel %vm1761, %v1801, 0.0
        %v1811 = vsel %vm1762, %v1800, 0.0
        %v1812 = vsel %vm1763, %v1799, 0.0
        %v1813 = vsel %vm1764, %v1798, 0.0
        %v1814 = vsel %vm1765, %v1797, 0.0
        %v1815 = vsel %vm1766, %v1796, 0.0
        %v1816 = vsel %vm1767, %v1795, 0.0
        %v1817 = vsel %vm1768, %v1794, 0.0
        %v1818 = vsel %vm1769, %v1793, 0.0
        %v1819 = vsel %vm1770, %v1792, 0.0
        %v1820 = vsel %vm1771, %v1791, 0.0
        %v1821 = vsel %vm1772, %v1790, 0.0
        %vm1822 = vcmp.ne.s32.totalorder %v1741, 63
        %vm1823 = vcmp.ne.s32.totalorder %v1742, 63
        %vm1824 = vcmp.ne.s32.totalorder %v1743, 63
        %vm1825 = vcmp.ne.s32.totalorder %v1744, 63
        %vm1826 = vcmp.ne.s32.totalorder %v1745, 63
        %vm1827 = vcmp.ne.s32.totalorder %v1746, 63
        %vm1828 = vcmp.ne.s32.totalorder %v1747, 63
        %vm1829 = vcmp.ne.s32.totalorder %v1748, 63
        %vm1830 = vcmp.ne.s32.totalorder %v1749, 63
        %vm1831 = vcmp.ne.s32.totalorder %v1750, 63
        %vm1832 = vcmp.ne.s32.totalorder %v1751, 63
        %vm1833 = vcmp.ne.s32.totalorder %v1752, 63
        %vm1834 = vcmp.ne.s32.totalorder %v1753, 63
        %vm1835 = vcmp.ne.s32.totalorder %v1754, 63
        %vm1836 = vcmp.ne.s32.totalorder %v1755, 63
        %vm1837 = vcmp.ne.s32.totalorder %v1756, 63
        %v1838 = vrot.slane %v1470, 1
        %v1839 = vrot.slane %v1475, 1
        %v1840 = vrot.slane %v1480, 1
        %v1841 = vrot.slane %v1485, 1
        %v1842 = vrot.slane %v1490, 1
        %v1843 = vrot.slane %v1495, 1
        %v1844 = vrot.slane %v1500, 1
        %v1845 = vrot.slane %v1505, 1
        %v1846 = vrot.slane %v1510, 1
        %v1847 = vrot.slane %v1515, 1
        %v1848 = vrot.slane %v1520, 1
        %v1849 = vrot.slane %v1525, 1
        %v1850 = vrot.slane %v1530, 1
        %v1851 = vrot.slane %v1535, 1
        %v1852 = vrot.slane %v1540, 1
        %v1853 = vrot.slane %v1545, 1
        %vm1854 = vcmp.lt.s32.totalorder %v1549, 7
        %v1855 = vsel %vm1854, %v1852, %v1853
        %v1856 = vsel %vm1854, %v1851, %v1852
        %v1857 = vsel %vm1854, %v1850, %v1851
        %v1858 = vsel %vm1854, %v1849, %v1850
        %v1859 = vsel %vm1854, %v1848, %v1849
        %v1860 = vsel %vm1854, %v1847, %v1848
        %v1861 = vsel %vm1854, %v1846, %v1847
        %v1862 = vsel %vm1854, %v1845, %v1846
        %v1863 = vsel %vm1854, %v1844, %v1845
        %v1864 = vsel %vm1854, %v1843, %v1844
        %v1865 = vsel %vm1854, %v1842, %v1843
        %v1866 = vsel %vm1854, %v1841, %v1842
        %v1867 = vsel %vm1854, %v1840, %v1841
        %v1868 = vsel %vm1854, %v1839, %v1840
        %v1869 = vsel %vm1854, %v1838, %v1839
        %v1870 = vsel %vm1854, %v1853, %v1838
        %v1871 = vsel %vm1822, %v1869, 0.0
        %v1872 = vsel %vm1823, %v1868, 0.0
        %v1873 = vsel %vm1824, %v1867, 0.0
        %v1874 = vsel %vm1825, %v1866, 0.0
        %v1875 = vsel %vm1826, %v1865, 0.0
        %v1876 = vsel %vm1827, %v1864, 0.0
        %v1877 = vsel %vm1828, %v1863, 0.0
        %v1878 = vsel %vm1829, %v1862, 0.0
        %v1879 = vsel %vm1830, %v1861, 0.0
        %v1880 = vsel %vm1831, %v1860, 0.0
        %v1881 = vsel %vm1832, %v1859, 0.0
        %v1882 = vsel %vm1833, %v1858, 0.0
        %v1883 = vsel %vm1834, %v1857, 0.0
        %v1884 = vsel %vm1835, %v1856, 0.0
        %v1885 = vsel %vm1836, %v1855, 0.0
        %v1886 = vsel %vm1837, %v1870, 0.0
        %v1887 = vpack.c.bf16 %v1807, %v1806
        %v1888 = vpack.c.bf16 %v1809, %v1808
        %v1889 = vpack.c.bf16 %v1811, %v1810
        %v1890 = vpack.c.bf16 %v1813, %v1812
        %v1891 = vpack.c.bf16 %v1815, %v1814
        %v1892 = vpack.c.bf16 %v1817, %v1816
        %v1893 = vpack.c.bf16 %v1819, %v1818
        %v1894 = vpack.c.bf16 %v1821, %v1820
        %v1895 = vld [vmem:[#allocation12] sm:$0xf]
        %v1896 = vld [vmem:[#allocation12 + $0x4] sm:$0xf]
        %v1897 = vld [vmem:[#allocation12 + $0x8] sm:$0xf]
        %v1898 = vld [vmem:[#allocation12 + $0xc] sm:$0xf]
        %v1899 = vld [vmem:[#allocation12 + $0x10] sm:$0xf]
        %v1900 = vld [vmem:[#allocation12 + $0x14] sm:$0xf]
        %v1901 = vld [vmem:[#allocation12 + $0x18] sm:$0xf]
        %v1902 = vld [vmem:[#allocation12 + $0x1c] sm:$0xf]
        %v1903 = vld [vmem:[#allocation12 + $0x20] sm:$0xf]
        %v1904 = vld [vmem:[#allocation12 + $0x24] sm:$0xf]
        %v1905 = vld [vmem:[#allocation12 + $0x28] sm:$0xf]
        %v1906 = vld [vmem:[#allocation12 + $0x2c] sm:$0xf]
        %v1907 = vld [vmem:[#allocation12 + $0x30] sm:$0xf]
        %v1908 = vld [vmem:[#allocation12 + $0x34] sm:$0xf]
        %v1909 = vld [vmem:[#allocation12 + $0x38] sm:$0xf]
        %v1910 = vld [vmem:[#allocation12 + $0x3c] sm:$0xf]
        %v1911 = vpack.c.bf16 %v1475, %v1470
        %v1912 = vpack.c.bf16 %v1485, %v1480
        %v1913 = vpack.c.bf16 %v1495, %v1490
        %v1914 = vpack.c.bf16 %v1505, %v1500
        %v1915 = vpack.c.bf16 %v1515, %v1510
        %v1916 = vpack.c.bf16 %v1525, %v1520
        %v1917 = vpack.c.bf16 %v1535, %v1530
        %v1918 = vpack.c.bf16 %v1545, %v1540
        %v1919 = vld [vmem:[#allocation14] sm:$0xf]
        %v1920 = vld [vmem:[#allocation14 + $0x4] sm:$0xf]
        %v1921 = vld [vmem:[#allocation14 + $0x8] sm:$0xf]
        %v1922 = vld [vmem:[#allocation14 + $0xc] sm:$0xf]
        %v1923 = vld [vmem:[#allocation14 + $0x10] sm:$0xf]
        %v1924 = vld [vmem:[#allocation14 + $0x14] sm:$0xf]
        %v1925 = vld [vmem:[#allocation14 + $0x18] sm:$0xf]
        %v1926 = vld [vmem:[#allocation14 + $0x1c] sm:$0xf]
        %v1927 = vld [vmem:[#allocation14 + $0x20] sm:$0xf]
        %v1928 = vld [vmem:[#allocation14 + $0x24] sm:$0xf]
        %v1929 = vld [vmem:[#allocation14 + $0x28] sm:$0xf]
        %v1930 = vld [vmem:[#allocation14 + $0x2c] sm:$0xf]
        %v1931 = vld [vmem:[#allocation14 + $0x30] sm:$0xf]
        %v1932 = vld [vmem:[#allocation14 + $0x34] sm:$0xf]
        %v1933 = vld [vmem:[#allocation14 + $0x38] sm:$0xf]
        %v1934 = vld [vmem:[#allocation14 + $0x3c] sm:$0xf]
        %v1951 = vunpack.c.l.b16 %v1919
        %v1952 = vunpack.c.l.b16 %v1920
        %v1953 = vunpack.c.l.b16 %v1921
        %v1954 = vunpack.c.l.b16 %v1922
        %v1955 = vunpack.c.l.b16 %v1923
        %v1956 = vunpack.c.l.b16 %v1924
        %v1957 = vunpack.c.l.b16 %v1925
        %v1958 = vunpack.c.l.b16 %v1926
        %v1959 = vunpack.c.l.b16 %v1927
        %v1960 = vunpack.c.l.b16 %v1928
        %v1961 = vunpack.c.l.b16 %v1929
        %v1962 = vunpack.c.l.b16 %v1930
        %v1963 = vunpack.c.l.b16 %v1931
        %v1964 = vunpack.c.l.b16 %v1932
        %v1965 = vunpack.c.l.b16 %v1933
        %v1966 = vunpack.c.l.b16 %v1934
        %v1967 = vpack.c.b16 %v1952, %v1951
        %v1968 = vpack.c.b16 %v1954, %v1953
        %v1969 = vpack.c.b16 %v1956, %v1955
        %v1970 = vpack.c.b16 %v1958, %v1957
        %v1971 = vpack.c.b16 %v1960, %v1959
        %v1972 = vpack.c.b16 %v1962, %v1961
        %v1973 = vpack.c.b16 %v1964, %v1963
        %v1974 = vpack.c.b16 %v1966, %v1965
        %1983 = vmatprep.subr.bf16.mxu0 0
        %1984 = vmatpush1.bf16.msra.mxu0 %v1974
        %1985 = vmatprep.subr.bf16.mxu0 0
        %1986 = vmatpush1.bf16.msra.mxu0 %v1973
        %1987 = vmatprep.subr.bf16.mxu0 0
        %1988 = vmatpush1.bf16.msra.mxu0 %v1972
        %1989 = vmatprep.subr.bf16.mxu0 0
        %1990 = vmatpush1.bf16.msra.mxu0 %v1971
        %1991 = vmatprep.subr.bf16.mxu0 0
        %1992 = vmatpush1.bf16.msra.mxu0 %v1970
        %1993 = vmatprep.subr.bf16.mxu0 0
        %1994 = vmatpush1.bf16.msra.mxu0 %v1969
        %1995 = vmatprep.subr.bf16.mxu0 0
        %1996 = vmatpush1.bf16.msra.mxu0 %v1968
        %1997 = vmatprep.subr.bf16.mxu0 0
        %1998 = vmatpush1.bf16.msra.mxu0 %v1967
        %1999 = vmatprep.subr.bf16.mxu0 0
        %2000 = vmatpush2.bf16.msra.mxu0 0
        %2001 = vmatprep.subr.bf16.mxu0 0
        %2002 = vmatpush2.bf16.msra.mxu0 0
        %2003 = vmatprep.subr.bf16.mxu0 0
        %2004 = vmatpush2.bf16.msra.mxu0 0
        %2005 = vmatprep.subr.bf16.mxu0 0
        %2006 = vmatpush2.bf16.msra.mxu0 0
        %2007 = vmatprep.subr.bf16.mxu0 0
        %2008 = vmatpush2.bf16.msra.mxu0 0
        %2009 = vmatprep.subr.bf16.mxu0 0
        %2010 = vmatpush2.bf16.msra.mxu0 0
        %2011 = vmatprep.subr.bf16.mxu0 0
        %2012 = vmatpush2.bf16.msra.mxu0 0
        %2013 = vmatprep.subr.bf16.mxu0 0
        %2014 = vmatpush2.bf16.msra.mxu0 0
        %2015 = vmatprep.mubr.bf16.mxu0 0
        %2016 = vmatmul.mubr.bf16.gmra.mxu0 %v1911
        %v2017 = vpop.f32.mrf.mxu0
        %v2018 = vadd.f32 0.0, %v2017
        %v2019 = vpop.f32.mrf.mxu0
        %v2020 = vpop.f32.mrf.mxu0
        %v2021 = vadd.f32 0.0, %v2020
        %v2022 = vpop.f32.mrf.mxu0
        %2023 = vmatprep.mubr.bf16.mxu0 0
        %2024 = vmatmul.mubr.bf16.gmra.mxu0 %v1912
        %v2025 = vpop.f32.mrf.mxu0
        %v2026 = vadd.f32 0.0, %v2025
        %v2027 = vpop.f32.mrf.mxu0
        %v2028 = vpop.f32.mrf.mxu0
        %v2029 = vadd.f32 0.0, %v2028
        %v2030 = vpop.f32.mrf.mxu0
        %2031 = vmatprep.mubr.bf16.mxu0 0
        %2032 = vmatmul.mubr.bf16.gmra.mxu0 %v1913
        %v2033 = vpop.f32.mrf.mxu0
        %v2034 = vadd.f32 0.0, %v2033
        %v2035 = vpop.f32.mrf.mxu0
        %v2036 = vpop.f32.mrf.mxu0
        %v2037 = vadd.f32 0.0, %v2036
        %v2038 = vpop.f32.mrf.mxu0
        %2039 = vmatprep.mubr.bf16.mxu0 0
        %2040 = vmatmul.mubr.bf16.gmra.mxu0 %v1914
        %v2041 = vpop.f32.mrf.mxu0
        %v2042 = vadd.f32 0.0, %v2041
        %v2043 = vpop.f32.mrf.mxu0
        %v2044 = vpop.f32.mrf.mxu0
        %v2045 = vadd.f32 0.0, %v2044
        %v2046 = vpop.f32.mrf.mxu0
        %2047 = vmatprep.mubr.bf16.mxu0 0
        %2048 = vmatmul.mubr.bf16.gmra.mxu0 %v1915
        %v2049 = vpop.f32.mrf.mxu0
        %v2050 = vadd.f32 0.0, %v2049
        %v2051 = vpop.f32.mrf.mxu0
        %v2052 = vpop.f32.mrf.mxu0
        %v2053 = vadd.f32 0.0, %v2052
        %v2054 = vpop.f32.mrf.mxu0
        %2055 = vmatprep.mubr.bf16.mxu0 0
        %2056 = vmatmul.mubr.bf16.gmra.mxu0 %v1916
        %v2057 = vpop.f32.mrf.mxu0
        %v2058 = vadd.f32 0.0, %v2057
        %v2059 = vpop.f32.mrf.mxu0
        %v2060 = vpop.f32.mrf.mxu0
        %v2061 = vadd.f32 0.0, %v2060
        %v2062 = vpop.f32.mrf.mxu0
        %2063 = vmatprep.mubr.bf16.mxu0 0
        %2064 = vmatmul.mubr.bf16.gmra.mxu0 %v1917
        %v2065 = vpop.f32.mrf.mxu0
        %v2066 = vadd.f32 0.0, %v2065
        %v2067 = vpop.f32.mrf.mxu0
        %v2068 = vpop.f32.mrf.mxu0
        %v2069 = vadd.f32 0.0, %v2068
        %v2070 = vpop.f32.mrf.mxu0
        %2071 = vmatprep.mubr.bf16.mxu0 0
        %2072 = vmatmul.mubr.bf16.gmra.mxu0 %v1918
        %v2073 = vpop.f32.mrf.mxu0
        %v2074 = vadd.f32 0.0, %v2073
        %v2075 = vpop.f32.mrf.mxu0
        %v2076 = vpop.f32.mrf.mxu0
        %v2077 = vadd.f32 0.0, %v2076
        %v2078 = vpop.f32.mrf.mxu0
        %2079 = vdwg.mxu0
        %v2096 = vunpack.c.l.b16 %v1895
        %v2097 = vunpack.c.l.b16 %v1896
        %v2098 = vunpack.c.l.b16 %v1897
        %v2099 = vunpack.c.l.b16 %v1898
        %v2100 = vunpack.c.l.b16 %v1899
        %v2101 = vunpack.c.l.b16 %v1900
        %v2102 = vunpack.c.l.b16 %v1901
        %v2103 = vunpack.c.l.b16 %v1902
        %v2104 = vunpack.c.l.b16 %v1903
        %v2105 = vunpack.c.l.b16 %v1904
        %v2106 = vunpack.c.l.b16 %v1905
        %v2107 = vunpack.c.l.b16 %v1906
        %v2108 = vunpack.c.l.b16 %v1907
        %v2109 = vunpack.c.l.b16 %v1908
        %v2110 = vunpack.c.l.b16 %v1909
        %v2111 = vunpack.c.l.b16 %v1910
        %v2112 = vpack.c.b16 %v2097, %v2096
        %v2113 = vpack.c.b16 %v2099, %v2098
        %v2114 = vpack.c.b16 %v2101, %v2100
        %v2115 = vpack.c.b16 %v2103, %v2102
        %v2116 = vpack.c.b16 %v2105, %v2104
        %v2117 = vpack.c.b16 %v2107, %v2106
        %v2118 = vpack.c.b16 %v2109, %v2108
        %v2119 = vpack.c.b16 %v2111, %v2110
        %2128 = vmatprep.subr.bf16.mxu0 0
        %2129 = vmatpush1.bf16.msra.mxu0 %v2119
        %2130 = vmatprep.subr.bf16.mxu0 0
        %2131 = vmatpush1.bf16.msra.mxu0 %v2118
        %2132 = vmatprep.subr.bf16.mxu0 0
        %2133 = vmatpush1.bf16.msra.mxu0 %v2117
        %2134 = vmatprep.subr.bf16.mxu0 0
        %2135 = vmatpush1.bf16.msra.mxu0 %v2116
        %2136 = vmatprep.subr.bf16.mxu0 0
        %2137 = vmatpush1.bf16.msra.mxu0 %v2115
        %2138 = vmatprep.subr.bf16.mxu0 0
        %2139 = vmatpush1.bf16.msra.mxu0 %v2114
        %2140 = vmatprep.subr.bf16.mxu0 0
        %2141 = vmatpush1.bf16.msra.mxu0 %v2113
        %2142 = vmatprep.subr.bf16.mxu0 0
        %2143 = vmatpush1.bf16.msra.mxu0 %v2112
        %2144 = vmatprep.subr.bf16.mxu0 0
        %2145 = vmatpush2.bf16.msra.mxu0 0
        %2146 = vmatprep.subr.bf16.mxu0 0
        %2147 = vmatpush2.bf16.msra.mxu0 0
        %2148 = vmatprep.subr.bf16.mxu0 0
        %2149 = vmatpush2.bf16.msra.mxu0 0
        %2150 = vmatprep.subr.bf16.mxu0 0
        %2151 = vmatpush2.bf16.msra.mxu0 0
        %2152 = vmatprep.subr.bf16.mxu0 0
        %2153 = vmatpush2.bf16.msra.mxu0 0
        %2154 = vmatprep.subr.bf16.mxu0 0
        %2155 = vmatpush2.bf16.msra.mxu0 0
        %2156 = vmatprep.subr.bf16.mxu0 0
        %2157 = vmatpush2.bf16.msra.mxu0 0
        %2158 = vmatprep.subr.bf16.mxu0 0
        %2159 = vmatpush2.bf16.msra.mxu0 0
        %2160 = vmatprep.mubr.bf16.mxu0 0
        %2161 = vmatmul.mubr.bf16.gmra.mxu0 %v1887
        %v2162 = vpop.f32.mrf.mxu0
        %v2163 = vadd.f32 %v2018, %v2162
        %v2164 = vpop.f32.mrf.mxu0
        %v2165 = vpop.f32.mrf.mxu0
        %v2166 = vadd.f32 %v2021, %v2165
        %v2167 = vpop.f32.mrf.mxu0
        %2168 = vmatprep.mubr.bf16.mxu0 0
        %2169 = vmatmul.mubr.bf16.gmra.mxu0 %v1888
        %v2170 = vpop.f32.mrf.mxu0
        %v2171 = vadd.f32 %v2026, %v2170
        %v2172 = vpop.f32.mrf.mxu0
        %v2173 = vpop.f32.mrf.mxu0
        %v2174 = vadd.f32 %v2029, %v2173
        %v2175 = vpop.f32.mrf.mxu0
        %2176 = vmatprep.mubr.bf16.mxu0 0
        %2177 = vmatmul.mubr.bf16.gmra.mxu0 %v1889
        %v2178 = vpop.f32.mrf.mxu0
        %v2179 = vadd.f32 %v2034, %v2178
        %v2180 = vpop.f32.mrf.mxu0
        %v2181 = vpop.f32.mrf.mxu0
        %v2182 = vadd.f32 %v2037, %v2181
        %v2183 = vpop.f32.mrf.mxu0
        %2184 = vmatprep.mubr.bf16.mxu0 0
        %2185 = vmatmul.mubr.bf16.gmra.mxu0 %v1890
        %v2186 = vpop.f32.mrf.mxu0
        %v2187 = vadd.f32 %v2042, %v2186
        %v2188 = vpop.f32.mrf.mxu0
        %v2189 = vpop.f32.mrf.mxu0
        %v2190 = vadd.f32 %v2045, %v2189
        %v2191 = vpop.f32.mrf.mxu0
        %2192 = vmatprep.mubr.bf16.mxu0 0
        %2193 = vmatmul.mubr.bf16.gmra.mxu0 %v1891
        %v2194 = vpop.f32.mrf.mxu0
        %v2195 = vadd.f32 %v2050, %v2194
        %v2196 = vpop.f32.mrf.mxu0
        %v2197 = vpop.f32.mrf.mxu0
        %v2198 = vadd.f32 %v2053, %v2197
        %v2199 = vpop.f32.mrf.mxu0
        %2200 = vmatprep.mubr.bf16.mxu0 0
        %2201 = vmatmul.mubr.bf16.gmra.mxu0 %v1892
        %v2202 = vpop.f32.mrf.mxu0
        %v2203 = vadd.f32 %v2058, %v2202
        %v2204 = vpop.f32.mrf.mxu0
        %v2205 = vpop.f32.mrf.mxu0
        %v2206 = vadd.f32 %v2061, %v2205
        %v2207 = vpop.f32.mrf.mxu0
        %2208 = vmatprep.mubr.bf16.mxu0 0
        %2209 = vmatmul.mubr.bf16.gmra.mxu0 %v1893
        %v2210 = vpop.f32.mrf.mxu0
        %v2211 = vadd.f32 %v2066, %v2210
        %v2212 = vpop.f32.mrf.mxu0
        %v2213 = vpop.f32.mrf.mxu0
        %v2214 = vadd.f32 %v2069, %v2213
        %v2215 = vpop.f32.mrf.mxu0
        %2216 = vmatprep.mubr.bf16.mxu0 0
        %2217 = vmatmul.mubr.bf16.gmra.mxu0 %v1894
        %v2218 = vpop.f32.mrf.mxu0
        %v2219 = vadd.f32 %v2074, %v2218
        %v2220 = vpop.f32.mrf.mxu0
        %v2221 = vpop.f32.mrf.mxu0
        %v2222 = vadd.f32 %v2077, %v2221
        %v2223 = vpop.f32.mrf.mxu0
        %2224 = vdwg.mxu0
        %v2225 = vpack.c.bf16 %v1872, %v1871
        %v2226 = vpack.c.bf16 %v1874, %v1873
        %v2227 = vpack.c.bf16 %v1876, %v1875
        %v2228 = vpack.c.bf16 %v1878, %v1877
        %v2229 = vpack.c.bf16 %v1880, %v1879
        %v2230 = vpack.c.bf16 %v1882, %v1881
        %v2231 = vpack.c.bf16 %v1884, %v1883
        %v2232 = vpack.c.bf16 %v1886, %v1885
        %v2233 = vld [vmem:[#allocation15] sm:$0xf]
        %v2234 = vld [vmem:[#allocation15 + $0x4] sm:$0xf]
        %v2235 = vld [vmem:[#allocation15 + $0x8] sm:$0xf]
        %v2236 = vld [vmem:[#allocation15 + $0xc] sm:$0xf]
        %v2237 = vld [vmem:[#allocation15 + $0x10] sm:$0xf]
        %v2238 = vld [vmem:[#allocation15 + $0x14] sm:$0xf]
        %v2239 = vld [vmem:[#allocation15 + $0x18] sm:$0xf]
        %v2240 = vld [vmem:[#allocation15 + $0x1c] sm:$0xf]
        %v2241 = vld [vmem:[#allocation15 + $0x20] sm:$0xf]
        %v2242 = vld [vmem:[#allocation15 + $0x24] sm:$0xf]
        %v2243 = vld [vmem:[#allocation15 + $0x28] sm:$0xf]
        %v2244 = vld [vmem:[#allocation15 + $0x2c] sm:$0xf]
        %v2245 = vld [vmem:[#allocation15 + $0x30] sm:$0xf]
        %v2246 = vld [vmem:[#allocation15 + $0x34] sm:$0xf]
        %v2247 = vld [vmem:[#allocation15 + $0x38] sm:$0xf]
        %v2248 = vld [vmem:[#allocation15 + $0x3c] sm:$0xf]
        %v2265 = vunpack.c.l.b16 %v2233
        %v2266 = vunpack.c.l.b16 %v2234
        %v2267 = vunpack.c.l.b16 %v2235
        %v2268 = vunpack.c.l.b16 %v2236
        %v2269 = vunpack.c.l.b16 %v2237
        %v2270 = vunpack.c.l.b16 %v2238
        %v2271 = vunpack.c.l.b16 %v2239
        %v2272 = vunpack.c.l.b16 %v2240
        %v2273 = vunpack.c.l.b16 %v2241
        %v2274 = vunpack.c.l.b16 %v2242
        %v2275 = vunpack.c.l.b16 %v2243
        %v2276 = vunpack.c.l.b16 %v2244
        %v2277 = vunpack.c.l.b16 %v2245
        %v2278 = vunpack.c.l.b16 %v2246
        %v2279 = vunpack.c.l.b16 %v2247
        %v2280 = vunpack.c.l.b16 %v2248
        %v2281 = vpack.c.b16 %v2266, %v2265
        %v2282 = vpack.c.b16 %v2268, %v2267
        %v2283 = vpack.c.b16 %v2270, %v2269
        %v2284 = vpack.c.b16 %v2272, %v2271
        %v2285 = vpack.c.b16 %v2274, %v2273
        %v2286 = vpack.c.b16 %v2276, %v2275
        %v2287 = vpack.c.b16 %v2278, %v2277
        %v2288 = vpack.c.b16 %v2280, %v2279
        %2297 = vmatprep.subr.bf16.mxu0 0
        %2298 = vmatpush1.bf16.msra.mxu0 %v2288
        %2299 = vmatprep.subr.bf16.mxu0 0
        %2300 = vmatpush1.bf16.msra.mxu0 %v2287
        %2301 = vmatprep.subr.bf16.mxu0 0
        %2302 = vmatpush1.bf16.msra.mxu0 %v2286
        %2303 = vmatprep.subr.bf16.mxu0 0
        %2304 = vmatpush1.bf16.msra.mxu0 %v2285
        %2305 = vmatprep.subr.bf16.mxu0 0
        %2306 = vmatpush1.bf16.msra.mxu0 %v2284
        %2307 = vmatprep.subr.bf16.mxu0 0
        %2308 = vmatpush1.bf16.msra.mxu0 %v2283
        %2309 = vmatprep.subr.bf16.mxu0 0
        %2310 = vmatpush1.bf16.msra.mxu0 %v2282
        %2311 = vmatprep.subr.bf16.mxu0 0
        %2312 = vmatpush1.bf16.msra.mxu0 %v2281
        %2313 = vmatprep.subr.bf16.mxu0 0
        %2314 = vmatpush2.bf16.msra.mxu0 0
        %2315 = vmatprep.subr.bf16.mxu0 0
        %2316 = vmatpush2.bf16.msra.mxu0 0
        %2317 = vmatprep.subr.bf16.mxu0 0
        %2318 = vmatpush2.bf16.msra.mxu0 0
        %2319 = vmatprep.subr.bf16.mxu0 0
        %2320 = vmatpush2.bf16.msra.mxu0 0
        %2321 = vmatprep.subr.bf16.mxu0 0
        %2322 = vmatpush2.bf16.msra.mxu0 0
        %2323 = vmatprep.subr.bf16.mxu0 0
        %2324 = vmatpush2.bf16.msra.mxu0 0
        %2325 = vmatprep.subr.bf16.mxu0 0
        %2326 = vmatpush2.bf16.msra.mxu0 0
        %2327 = vmatprep.subr.bf16.mxu0 0
        %2328 = vmatpush2.bf16.msra.mxu0 0
        %2329 = vmatprep.mubr.bf16.mxu0 0
        %2330 = vmatmul.mubr.bf16.gmra.mxu0 %v2225
        %v2331 = vpop.f32.mrf.mxu0
        %v2332 = vadd.f32 0.0, %v2331
        %v2333 = vpop.f32.mrf.mxu0
        %v2334 = vpop.f32.mrf.mxu0
        %v2335 = vadd.f32 0.0, %v2334
        %v2336 = vpop.f32.mrf.mxu0
        %2337 = vmatprep.mubr.bf16.mxu0 0
        %2338 = vmatmul.mubr.bf16.gmra.mxu0 %v2226
        %v2339 = vpop.f32.mrf.mxu0
        %v2340 = vadd.f32 0.0, %v2339
        %v2341 = vpop.f32.mrf.mxu0
        %v2342 = vpop.f32.mrf.mxu0
        %v2343 = vadd.f32 0.0, %v2342
        %v2344 = vpop.f32.mrf.mxu0
        %2345 = vmatprep.mubr.bf16.mxu0 0
        %2346 = vmatmul.mubr.bf16.gmra.mxu0 %v2227
        %v2347 = vpop.f32.mrf.mxu0
        %v2348 = vadd.f32 0.0, %v2347
        %v2349 = vpop.f32.mrf.mxu0
        %v2350 = vpop.f32.mrf.mxu0
        %v2351 = vadd.f32 0.0, %v2350
        %v2352 = vpop.f32.mrf.mxu0
        %2353 = vmatprep.mubr.bf16.mxu0 0
        %2354 = vmatmul.mubr.bf16.gmra.mxu0 %v2228
        %v2355 = vpop.f32.mrf.mxu0
        %v2356 = vadd.f32 0.0, %v2355
        %v2357 = vpop.f32.mrf.mxu0
        %v2358 = vpop.f32.mrf.mxu0
        %v2359 = vadd.f32 0.0, %v2358
        %v2360 = vpop.f32.mrf.mxu0
        %2361 = vmatprep.mubr.bf16.mxu0 0
        %2362 = vmatmul.mubr.bf16.gmra.mxu0 %v2229
        %v2363 = vpop.f32.mrf.mxu0
        %v2364 = vadd.f32 0.0, %v2363
        %v2365 = vpop.f32.mrf.mxu0
        %v2366 = vpop.f32.mrf.mxu0
        %v2367 = vadd.f32 0.0, %v2366
        %v2368 = vpop.f32.mrf.mxu0
        %2369 = vmatprep.mubr.bf16.mxu0 0
        %2370 = vmatmul.mubr.bf16.gmra.mxu0 %v2230
        %v2371 = vpop.f32.mrf.mxu0
        %v2372 = vadd.f32 0.0, %v2371
        %v2373 = vpop.f32.mrf.mxu0
        %v2374 = vpop.f32.mrf.mxu0
        %v2375 = vadd.f32 0.0, %v2374
        %v2376 = vpop.f32.mrf.mxu0
        %2377 = vmatprep.mubr.bf16.mxu0 0
        %2378 = vmatmul.mubr.bf16.gmra.mxu0 %v2231
        %v2379 = vpop.f32.mrf.mxu0
        %v2380 = vadd.f32 0.0, %v2379
        %v2381 = vpop.f32.mrf.mxu0
        %v2382 = vpop.f32.mrf.mxu0
        %v2383 = vadd.f32 0.0, %v2382
        %v2384 = vpop.f32.mrf.mxu0
        %2385 = vmatprep.mubr.bf16.mxu0 0
        %2386 = vmatmul.mubr.bf16.gmra.mxu0 %v2232
        %v2387 = vpop.f32.mrf.mxu0
        %v2388 = vadd.f32 0.0, %v2387
        %v2389 = vpop.f32.mrf.mxu0
        %v2390 = vpop.f32.mrf.mxu0
        %v2391 = vadd.f32 0.0, %v2390
        %v2392 = vpop.f32.mrf.mxu0
        %2393 = vdwg.mxu0
        %v2394 = vadd.f32 %v2163, %v2332
        %v2395 = vadd.f32 %v2166, %v2335
        %v2396 = vadd.f32 %v2171, %v2340
        %v2397 = vadd.f32 %v2174, %v2343
        %v2398 = vadd.f32 %v2179, %v2348
        %v2399 = vadd.f32 %v2182, %v2351
        %v2400 = vadd.f32 %v2187, %v2356
        %v2401 = vadd.f32 %v2190, %v2359
        %v2402 = vadd.f32 %v2195, %v2364
        %v2403 = vadd.f32 %v2198, %v2367
        %v2404 = vadd.f32 %v2203, %v2372
        %v2405 = vadd.f32 %v2206, %v2375
        %v2406 = vadd.f32 %v2211, %v2380
        %v2407 = vadd.f32 %v2214, %v2383
        %v2408 = vadd.f32 %v2219, %v2388
        %v2409 = vadd.f32 %v2222, %v2391
        %v2410 = vld [vmem:[#allocation17] sm:$0x1]
        %v2412 = vlaneseq
        %v2413 = vshrl.u32 %v2412, 7
        %v2414 = vsub.s32 0, %v2413
        %v2415 = vrot.slane %v2410, %v2414
        %v2417 = vadd.f32 %v2394, %v2415
        %v2418 = vadd.f32 %v2395, %v2415
        %v2419 = vadd.f32 %v2396, %v2415
        %v2420 = vadd.f32 %v2397, %v2415
        %v2421 = vadd.f32 %v2398, %v2415
        %v2422 = vadd.f32 %v2399, %v2415
        %v2423 = vadd.f32 %v2400, %v2415
        %v2424 = vadd.f32 %v2401, %v2415
        %v2425 = vadd.f32 %v2402, %v2415
        %v2426 = vadd.f32 %v2403, %v2415
        %v2427 = vadd.f32 %v2404, %v2415
        %v2428 = vadd.f32 %v2405, %v2415
        %v2429 = vadd.f32 %v2406, %v2415
        %v2430 = vadd.f32 %v2407, %v2415
        %v2431 = vadd.f32 %v2408, %v2415
        %v2432 = vadd.f32 %v2409, %v2415
        %vm2433 = vcmp.gt.f32.partialorder %v2417, 0.0
        %vm2434 = vcmp.gt.f32.partialorder %v2418, 0.0
        %vm2435 = vcmp.gt.f32.partialorder %v2419, 0.0
        %vm2436 = vcmp.gt.f32.partialorder %v2420, 0.0
        %vm2437 = vcmp.gt.f32.partialorder %v2421, 0.0
        %vm2438 = vcmp.gt.f32.partialorder %v2422, 0.0
        %vm2439 = vcmp.gt.f32.partialorder %v2423, 0.0
        %vm2440 = vcmp.gt.f32.partialorder %v2424, 0.0
        %vm2441 = vcmp.gt.f32.partialorder %v2425, 0.0
        %vm2442 = vcmp.gt.f32.partialorder %v2426, 0.0
        %vm2443 = vcmp.gt.f32.partialorder %v2427, 0.0
        %vm2444 = vcmp.gt.f32.partialorder %v2428, 0.0
        %vm2445 = vcmp.gt.f32.partialorder %v2429, 0.0
        %vm2446 = vcmp.gt.f32.partialorder %v2430, 0.0
        %vm2447 = vcmp.gt.f32.partialorder %v2431, 0.0
        %vm2448 = vcmp.gt.f32.partialorder %v2432, 0.0
        %v2449 = vmul.f32 %v2417, 0.1
        %v2450 = vmul.f32 %v2418, 0.1
        %v2451 = vmul.f32 %v2419, 0.1
        %v2452 = vmul.f32 %v2420, 0.1
        %v2453 = vmul.f32 %v2421, 0.1
        %v2454 = vmul.f32 %v2422, 0.1
        %v2455 = vmul.f32 %v2423, 0.1
        %v2456 = vmul.f32 %v2424, 0.1
        %v2457 = vmul.f32 %v2425, 0.1
        %v2458 = vmul.f32 %v2426, 0.1
        %v2459 = vmul.f32 %v2427, 0.1
        %v2460 = vmul.f32 %v2428, 0.1
        %v2461 = vmul.f32 %v2429, 0.1
        %v2462 = vmul.f32 %v2430, 0.1
        %v2463 = vmul.f32 %v2431, 0.1
        %v2464 = vmul.f32 %v2432, 0.1
        %v2465 = vsel %vm2433, %v2417, %v2449
        %v2466 = vsel %vm2434, %v2418, %v2450
        %v2467 = vsel %vm2435, %v2419, %v2451
        %v2468 = vsel %vm2436, %v2420, %v2452
        %v2469 = vsel %vm2437, %v2421, %v2453
        %v2470 = vsel %vm2438, %v2422, %v2454
        %v2471 = vsel %vm2439, %v2423, %v2455
        %v2472 = vsel %vm2440, %v2424, %v2456
        %v2473 = vsel %vm2441, %v2425, %v2457
        %v2474 = vsel %vm2442, %v2426, %v2458
        %v2475 = vsel %vm2443, %v2427, %v2459
        %v2476 = vsel %vm2444, %v2428, %v2460
        %v2477 = vsel %vm2445, %v2429, %v2461
        %v2478 = vsel %vm2446, %v2430, %v2462
        %v2479 = vsel %vm2447, %v2431, %v2463
        %v2480 = vsel %vm2448, %v2432, %v2464
        %v2481 = vld [vmem:[%s9] sm:$0xff]
        %v2482 = vld [vmem:[%s9 + $0x8] sm:$0xff]
        %v2483 = vld [vmem:[%s9 + $0x10] sm:$0xff]
        %v2484 = vld [vmem:[%s9 + $0x18] sm:$0xff]
        %v2485 = vld [vmem:[%s9 + $0x20] sm:$0xff]
        %v2486 = vld [vmem:[%s9 + $0x28] sm:$0xff]
        %v2487 = vld [vmem:[%s9 + $0x30] sm:$0xff]
        %v2488 = vld [vmem:[%s9 + $0x38] sm:$0xff]
        %v2489 = vld [vmem:[%s9 + $0x40] sm:$0xff]
        %v2490 = vld [vmem:[%s9 + $0x48] sm:$0xff]
        %v2491 = vld [vmem:[%s9 + $0x50] sm:$0xff]
        %v2492 = vld [vmem:[%s9 + $0x58] sm:$0xff]
        %v2493 = vld [vmem:[%s9 + $0x60] sm:$0xff]
        %v2494 = vld [vmem:[%s9 + $0x68] sm:$0xff]
        %v2495 = vld [vmem:[%s9 + $0x70] sm:$0xff]
        %v2496 = vld [vmem:[%s9 + $0x78] sm:$0xff]
        %v2497 = vld [vmem:[%s9 + $0x80] sm:$0xff]
        %v2498 = vld [vmem:[%s9 + $0x88] sm:$0xff]
        %v2499 = vld [vmem:[%s9 + $0x90] sm:$0xff]
        %v2500 = vld [vmem:[%s9 + $0x98] sm:$0xff]
        %v2501 = vld [vmem:[%s9 + $0xa0] sm:$0xff]
        %v2502 = vld [vmem:[%s9 + $0xa8] sm:$0xff]
        %v2503 = vld [vmem:[%s9 + $0xb0] sm:$0xff]
        %v2504 = vld [vmem:[%s9 + $0xb8] sm:$0xff]
        %v2505 = vld [vmem:[%s9 + $0xc0] sm:$0xff]
        %v2506 = vld [vmem:[%s9 + $0xc8] sm:$0xff]
        %v2507 = vld [vmem:[%s9 + $0xd0] sm:$0xff]
        %v2508 = vld [vmem:[%s9 + $0xd8] sm:$0xff]
        %v2509 = vld [vmem:[%s9 + $0xe0] sm:$0xff]
        %v2510 = vld [vmem:[%s9 + $0xe8] sm:$0xff]
        %v2511 = vld [vmem:[%s9 + $0xf0] sm:$0xff]
        %v2512 = vld [vmem:[%s9 + $0xf8] sm:$0xff]
        %2513 = vmatprep.subr.mxu0 0.0
        %2514 = vmatpush1.msra.mxu0 %v2480
        %2515 = vmatprep.subr.mxu0 0.0
        %2516 = vmatpush1.msra.mxu0 %v2479
        %2517 = vmatprep.subr.mxu0 0.0
        %2518 = vmatpush1.msra.mxu0 %v2478
        %2519 = vmatprep.subr.mxu0 0.0
        %2520 = vmatpush1.msra.mxu0 %v2477
        %2521 = vmatprep.subr.mxu0 0.0
        %2522 = vmatpush1.msra.mxu0 %v2476
        %2523 = vmatprep.subr.mxu0 0.0
        %2524 = vmatpush1.msra.mxu0 %v2475
        %2525 = vmatprep.subr.mxu0 0.0
        %2526 = vmatpush1.msra.mxu0 %v2474
        %2527 = vmatprep.subr.mxu0 0.0
        %2528 = vmatpush1.msra.mxu0 %v2473
        %2529 = vmatprep.subr.mxu0 0.0
        %2530 = vmatpush1.msra.mxu0 %v2472
        %2531 = vmatprep.subr.mxu0 0.0
        %2532 = vmatpush1.msra.mxu0 %v2471
        %2533 = vmatprep.subr.mxu0 0.0
        %2534 = vmatpush1.msra.mxu0 %v2470
        %2535 = vmatprep.subr.mxu0 0.0
        %2536 = vmatpush1.msra.mxu0 %v2469
        %2537 = vmatprep.subr.mxu0 0.0
        %2538 = vmatpush1.msra.mxu0 %v2468
        %2539 = vmatprep.subr.mxu0 0.0
        %2540 = vmatpush1.msra.mxu0 %v2467
        %2541 = vmatprep.subr.mxu0 0.0
        %2542 = vmatpush1.msra.mxu0 %v2466
        %2543 = vmatprep.subr.mxu0 0.0
        %2544 = vmatpush1.msra.mxu0 %v2465
        %2545 = vmatprep.subr.mxu0 0.0
        %2546 = vmatpush2.msra.mxu0 0.0
        %2547 = vmatprep.subr.mxu0 0.0
        %2548 = vmatpush2.msra.mxu0 0.0
        %2549 = vmatprep.subr.mxu0 0.0
        %2550 = vmatpush2.msra.mxu0 0.0
        %2551 = vmatprep.subr.mxu0 0.0
        %2552 = vmatpush2.msra.mxu0 0.0
        %2553 = vmatprep.subr.mxu0 0.0
        %2554 = vmatpush2.msra.mxu0 0.0
        %2555 = vmatprep.subr.mxu0 0.0
        %2556 = vmatpush2.msra.mxu0 0.0
        %2557 = vmatprep.subr.mxu0 0.0
        %2558 = vmatpush2.msra.mxu0 0.0
        %2559 = vmatprep.subr.mxu0 0.0
        %2560 = vmatpush2.msra.mxu0 0.0
        %2561 = vmatprep.subr.mxu0 0.0
        %2562 = vmatpush2.msra.mxu0 0.0
        %2563 = vmatprep.subr.mxu0 0.0
        %2564 = vmatpush2.msra.mxu0 0.0
        %2565 = vmatprep.subr.mxu0 0.0
        %2566 = vmatpush2.msra.mxu0 0.0
        %2567 = vmatprep.subr.mxu0 0.0
        %2568 = vmatpush2.msra.mxu0 0.0
        %2569 = vmatprep.subr.mxu0 0.0
        %2570 = vmatpush2.msra.mxu0 0.0
        %2571 = vmatprep.subr.mxu0 0.0
        %2572 = vmatpush2.msra.mxu0 0.0
        %2573 = vmatprep.subr.mxu0 0.0
        %2574 = vmatpush2.msra.mxu0 0.0
        %2575 = vmatprep.subr.mxu0 0.0
        %2576 = vmatpush2.msra.mxu0 0.0
        %2577 = vmatprep.mubr.f32.mxu0 0.0
        %2578 = vmatmul.mubr.f32.gmra.mxu0 %v2481
        %v2579 = vpop.f32.mrf.mxu0
        %v2580 = vadd.f32 0.0, %v2579
        %v2581 = vpop.f32.mrf.mxu0
        %2582 = vmatprep.mubr.f32.mxu0 0.0
        %2583 = vmatmul.mubr.f32.gmra.mxu0 %v2482
        %v2584 = vpop.f32.mrf.mxu0
        %v2585 = vadd.f32 0.0, %v2584
        %v2586 = vpop.f32.mrf.mxu0
        %2587 = vmatprep.mubr.f32.mxu0 0.0
        %2588 = vmatmul.mubr.f32.gmra.mxu0 %v2483
        %v2589 = vpop.f32.mrf.mxu0
        %v2590 = vadd.f32 0.0, %v2589
        %v2591 = vpop.f32.mrf.mxu0
        %2592 = vmatprep.mubr.f32.mxu0 0.0
        %2593 = vmatmul.mubr.f32.gmra.mxu0 %v2484
        %v2594 = vpop.f32.mrf.mxu0
        %v2595 = vadd.f32 0.0, %v2594
        %v2596 = vpop.f32.mrf.mxu0
        %2597 = vmatprep.mubr.f32.mxu0 0.0
        %2598 = vmatmul.mubr.f32.gmra.mxu0 %v2485
        %v2599 = vpop.f32.mrf.mxu0
        %v2600 = vadd.f32 0.0, %v2599
        %v2601 = vpop.f32.mrf.mxu0
        %2602 = vmatprep.mubr.f32.mxu0 0.0
        %2603 = vmatmul.mubr.f32.gmra.mxu0 %v2486
        %v2604 = vpop.f32.mrf.mxu0
        %v2605 = vadd.f32 0.0, %v2604
        %v2606 = vpop.f32.mrf.mxu0
        %2607 = vmatprep.mubr.f32.mxu0 0.0
        %2608 = vmatmul.mubr.f32.gmra.mxu0 %v2487
        %v2609 = vpop.f32.mrf.mxu0
        %v2610 = vadd.f32 0.0, %v2609
        %v2611 = vpop.f32.mrf.mxu0
        %2612 = vmatprep.mubr.f32.mxu0 0.0
        %2613 = vmatmul.mubr.f32.gmra.mxu0 %v2488
        %v2614 = vpop.f32.mrf.mxu0
        %v2615 = vadd.f32 0.0, %v2614
        %v2616 = vpop.f32.mrf.mxu0
        %2617 = vmatprep.mubr.f32.mxu0 0.0
        %2618 = vmatmul.mubr.f32.gmra.mxu0 %v2489
        %v2619 = vpop.f32.mrf.mxu0
        %v2620 = vadd.f32 0.0, %v2619
        %v2621 = vpop.f32.mrf.mxu0
        %2622 = vmatprep.mubr.f32.mxu0 0.0
        %2623 = vmatmul.mubr.f32.gmra.mxu0 %v2490
        %v2624 = vpop.f32.mrf.mxu0
        %v2625 = vadd.f32 0.0, %v2624
        %v2626 = vpop.f32.mrf.mxu0
        %2627 = vmatprep.mubr.f32.mxu0 0.0
        %2628 = vmatmul.mubr.f32.gmra.mxu0 %v2491
        %v2629 = vpop.f32.mrf.mxu0
        %v2630 = vadd.f32 0.0, %v2629
        %v2631 = vpop.f32.mrf.mxu0
        %2632 = vmatprep.mubr.f32.mxu0 0.0
        %2633 = vmatmul.mubr.f32.gmra.mxu0 %v2492
        %v2634 = vpop.f32.mrf.mxu0
        %v2635 = vadd.f32 0.0, %v2634
        %v2636 = vpop.f32.mrf.mxu0
        %2637 = vmatprep.mubr.f32.mxu0 0.0
        %2638 = vmatmul.mubr.f32.gmra.mxu0 %v2493
        %v2639 = vpop.f32.mrf.mxu0
        %v2640 = vadd.f32 0.0, %v2639
        %v2641 = vpop.f32.mrf.mxu0
        %2642 = vmatprep.mubr.f32.mxu0 0.0
        %2643 = vmatmul.mubr.f32.gmra.mxu0 %v2494
        %v2644 = vpop.f32.mrf.mxu0
        %v2645 = vadd.f32 0.0, %v2644
        %v2646 = vpop.f32.mrf.mxu0
        %2647 = vmatprep.mubr.f32.mxu0 0.0
        %2648 = vmatmul.mubr.f32.gmra.mxu0 %v2495
        %v2649 = vpop.f32.mrf.mxu0
        %v2650 = vadd.f32 0.0, %v2649
        %v2651 = vpop.f32.mrf.mxu0
        %2652 = vmatprep.mubr.f32.mxu0 0.0
        %2653 = vmatmul.mubr.f32.gmra.mxu0 %v2496
        %v2654 = vpop.f32.mrf.mxu0
        %v2655 = vadd.f32 0.0, %v2654
        %v2656 = vpop.f32.mrf.mxu0
        %2657 = vmatprep.mubr.f32.mxu0 0.0
        %2658 = vmatmul.mubr.f32.gmra.mxu0 %v2497
        %v2659 = vpop.f32.mrf.mxu0
        %v2660 = vadd.f32 0.0, %v2659
        %v2661 = vpop.f32.mrf.mxu0
        %2662 = vmatprep.mubr.f32.mxu0 0.0
        %2663 = vmatmul.mubr.f32.gmra.mxu0 %v2498
        %v2664 = vpop.f32.mrf.mxu0
        %v2665 = vadd.f32 0.0, %v2664
        %v2666 = vpop.f32.mrf.mxu0
        %2667 = vmatprep.mubr.f32.mxu0 0.0
        %2668 = vmatmul.mubr.f32.gmra.mxu0 %v2499
        %v2669 = vpop.f32.mrf.mxu0
        %v2670 = vadd.f32 0.0, %v2669
        %v2671 = vpop.f32.mrf.mxu0
        %2672 = vmatprep.mubr.f32.mxu0 0.0
        %2673 = vmatmul.mubr.f32.gmra.mxu0 %v2500
        %v2674 = vpop.f32.mrf.mxu0
        %v2675 = vadd.f32 0.0, %v2674
        %v2676 = vpop.f32.mrf.mxu0
        %2677 = vmatprep.mubr.f32.mxu0 0.0
        %2678 = vmatmul.mubr.f32.gmra.mxu0 %v2501
        %v2679 = vpop.f32.mrf.mxu0
        %v2680 = vadd.f32 0.0, %v2679
        %v2681 = vpop.f32.mrf.mxu0
        %2682 = vmatprep.mubr.f32.mxu0 0.0
        %2683 = vmatmul.mubr.f32.gmra.mxu0 %v2502
        %v2684 = vpop.f32.mrf.mxu0
        %v2685 = vadd.f32 0.0, %v2684
        %v2686 = vpop.f32.mrf.mxu0
        %2687 = vmatprep.mubr.f32.mxu0 0.0
        %2688 = vmatmul.mubr.f32.gmra.mxu0 %v2503
        %v2689 = vpop.f32.mrf.mxu0
        %v2690 = vadd.f32 0.0, %v2689
        %v2691 = vpop.f32.mrf.mxu0
        %2692 = vmatprep.mubr.f32.mxu0 0.0
        %2693 = vmatmul.mubr.f32.gmra.mxu0 %v2504
        %v2694 = vpop.f32.mrf.mxu0
        %v2695 = vadd.f32 0.0, %v2694
        %v2696 = vpop.f32.mrf.mxu0
        %2697 = vmatprep.mubr.f32.mxu0 0.0
        %2698 = vmatmul.mubr.f32.gmra.mxu0 %v2505
        %v2699 = vpop.f32.mrf.mxu0
        %v2700 = vadd.f32 0.0, %v2699
        %v2701 = vpop.f32.mrf.mxu0
        %2702 = vmatprep.mubr.f32.mxu0 0.0
        %2703 = vmatmul.mubr.f32.gmra.mxu0 %v2506
        %v2704 = vpop.f32.mrf.mxu0
        %v2705 = vadd.f32 0.0, %v2704
        %v2706 = vpop.f32.mrf.mxu0
        %2707 = vmatprep.mubr.f32.mxu0 0.0
        %2708 = vmatmul.mubr.f32.gmra.mxu0 %v2507
        %v2709 = vpop.f32.mrf.mxu0
        %v2710 = vadd.f32 0.0, %v2709
        %v2711 = vpop.f32.mrf.mxu0
        %2712 = vmatprep.mubr.f32.mxu0 0.0
        %2713 = vmatmul.mubr.f32.gmra.mxu0 %v2508
        %v2714 = vpop.f32.mrf.mxu0
        %v2715 = vadd.f32 0.0, %v2714
        %v2716 = vpop.f32.mrf.mxu0
        %2717 = vmatprep.mubr.f32.mxu0 0.0
        %2718 = vmatmul.mubr.f32.gmra.mxu0 %v2509
        %v2719 = vpop.f32.mrf.mxu0
        %v2720 = vadd.f32 0.0, %v2719
        %v2721 = vpop.f32.mrf.mxu0
        %2722 = vmatprep.mubr.f32.mxu0 0.0
        %2723 = vmatmul.mubr.f32.gmra.mxu0 %v2510
        %v2724 = vpop.f32.mrf.mxu0
        %v2725 = vadd.f32 0.0, %v2724
        %v2726 = vpop.f32.mrf.mxu0
        %2727 = vmatprep.mubr.f32.mxu0 0.0
        %2728 = vmatmul.mubr.f32.gmra.mxu0 %v2511
        %v2729 = vpop.f32.mrf.mxu0
        %v2730 = vadd.f32 0.0, %v2729
        %v2731 = vpop.f32.mrf.mxu0
        %2732 = vmatprep.mubr.f32.mxu0 0.0
        %2733 = vmatmul.mubr.f32.gmra.mxu0 %v2512
        %v2734 = vpop.f32.mrf.mxu0
        %v2735 = vadd.f32 0.0, %v2734
        %v2736 = vpop.f32.mrf.mxu0
        %2737 = vdwg.mxu0
        %v2738 = vadd.s32 %v1549, 128
        %v2739 = vadd.s32 %v1549, 136
        %v2740 = vadd.s32 %v1549, 144
        %v2741 = vadd.s32 %v1549, 152
        %v2742 = vadd.s32 %v1549, 160
        %v2743 = vadd.s32 %v1549, 168
        %v2744 = vadd.s32 %v1549, 176
        %v2745 = vadd.s32 %v1549, 184
        %v2746 = vadd.s32 %v1549, 192
        %v2747 = vadd.s32 %v1549, 200
        %v2748 = vadd.s32 %v1549, 208
        %v2749 = vadd.s32 %v1549, 216
        %v2750 = vadd.s32 %v1549, 224
        %v2751 = vadd.s32 %v1549, 232
        %v2752 = vadd.s32 %v1549, 240
        %v2753 = vadd.s32 %v1549, 248
        %vm2754 = vcmp.lt.s32.totalorder %v1549, 0
        %v2755 = vsub.s32 0, %v1549
        %v2756 = vsel %vm2754, %v2755, %v1549
        %v2757 = vshrl.u32 %v2756, 7
        %v2758 = vand.u32 %v2756, 127
        %v2759 = vsub.s32 0, %v2758
        %v2760 = vsel %vm2754, %v2759, %v2758
        %vm2761 = vcmp.lt.s32.totalorder %v1550, 0
        %v2762 = vsub.s32 0, %v1550
        %v2763 = vsel %vm2761, %v2762, %v1550
        %v2764 = vshrl.u32 %v2763, 7
        %v2765 = vand.u32 %v2763, 127
        %v2766 = vsub.s32 0, %v2765
        %v2767 = vsel %vm2761, %v2766, %v2765
        %vm2768 = vcmp.lt.s32.totalorder %v1551, 0
        %v2769 = vsub.s32 0, %v1551
        %v2770 = vsel %vm2768, %v2769, %v1551
        %v2771 = vshrl.u32 %v2770, 7
        %v2772 = vand.u32 %v2770, 127
        %v2773 = vsub.s32 0, %v2772
        %v2774 = vsel %vm2768, %v2773, %v2772
        %vm2775 = vcmp.lt.s32.totalorder %v1552, 0
        %v2776 = vsub.s32 0, %v1552
        %v2777 = vsel %vm2775, %v2776, %v1552
        %v2778 = vshrl.u32 %v2777, 7
        %v2779 = vand.u32 %v2777, 127
        %v2780 = vsub.s32 0, %v2779
        %v2781 = vsel %vm2775, %v2780, %v2779
        %vm2782 = vcmp.lt.s32.totalorder %v1553, 0
        %v2783 = vsub.s32 0, %v1553
        %v2784 = vsel %vm2782, %v2783, %v1553
        %v2785 = vshrl.u32 %v2784, 7
        %v2786 = vand.u32 %v2784, 127
        %v2787 = vsub.s32 0, %v2786
        %v2788 = vsel %vm2782, %v2787, %v2786
        %vm2789 = vcmp.lt.s32.totalorder %v1554, 0
        %v2790 = vsub.s32 0, %v1554
        %v2791 = vsel %vm2789, %v2790, %v1554
        %v2792 = vshrl.u32 %v2791, 7
        %v2793 = vand.u32 %v2791, 127
        %v2794 = vsub.s32 0, %v2793
        %v2795 = vsel %vm2789, %v2794, %v2793
        %vm2796 = vcmp.lt.s32.totalorder %v1555, 0
        %v2797 = vsub.s32 0, %v1555
        %v2798 = vsel %vm2796, %v2797, %v1555
        %v2799 = vshrl.u32 %v2798, 7
        %v2800 = vand.u32 %v2798, 127
        %v2801 = vsub.s32 0, %v2800
        %v2802 = vsel %vm2796, %v2801, %v2800
        %vm2803 = vcmp.lt.s32.totalorder %v1556, 0
        %v2804 = vsub.s32 0, %v1556
        %v2805 = vsel %vm2803, %v2804, %v1556
        %v2806 = vshrl.u32 %v2805, 7
        %v2807 = vand.u32 %v2805, 127
        %v2808 = vsub.s32 0, %v2807
        %v2809 = vsel %vm2803, %v2808, %v2807
        %vm2810 = vcmp.lt.s32.totalorder %v1557, 0
        %v2811 = vsub.s32 0, %v1557
        %v2812 = vsel %vm2810, %v2811, %v1557
        %v2813 = vshrl.u32 %v2812, 7
        %v2814 = vand.u32 %v2812, 127
        %v2815 = vsub.s32 0, %v2814
        %v2816 = vsel %vm2810, %v2815, %v2814
        %vm2817 = vcmp.lt.s32.totalorder %v1558, 0
        %v2818 = vsub.s32 0, %v1558
        %v2819 = vsel %vm2817, %v2818, %v1558
        %v2820 = vshrl.u32 %v2819, 7
        %v2821 = vand.u32 %v2819, 127
        %v2822 = vsub.s32 0, %v2821
        %v2823 = vsel %vm2817, %v2822, %v2821
        %vm2824 = vcmp.lt.s32.totalorder %v1559, 0
        %v2825 = vsub.s32 0, %v1559
        %v2826 = vsel %vm2824, %v2825, %v1559
        %v2827 = vshrl.u32 %v2826, 7
        %v2828 = vand.u32 %v2826, 127
        %v2829 = vsub.s32 0, %v2828
        %v2830 = vsel %vm2824, %v2829, %v2828
        %vm2831 = vcmp.lt.s32.totalorder %v1560, 0
        %v2832 = vsub.s32 0, %v1560
        %v2833 = vsel %vm2831, %v2832, %v1560
        %v2834 = vshrl.u32 %v2833, 7
        %v2835 = vand.u32 %v2833, 127
        %v2836 = vsub.s32 0, %v2835
        %v2837 = vsel %vm2831, %v2836, %v2835
        %vm2838 = vcmp.lt.s32.totalorder %v1561, 0
        %v2839 = vsub.s32 0, %v1561
        %v2840 = vsel %vm2838, %v2839, %v1561
        %v2841 = vshrl.u32 %v2840, 7
        %v2842 = vand.u32 %v2840, 127
        %v2843 = vsub.s32 0, %v2842
        %v2844 = vsel %vm2838, %v2843, %v2842
        %vm2845 = vcmp.lt.s32.totalorder %v1562, 0
        %v2846 = vsub.s32 0, %v1562
        %v2847 = vsel %vm2845, %v2846, %v1562
        %v2848 = vshrl.u32 %v2847, 7
        %v2849 = vand.u32 %v2847, 127
        %v2850 = vsub.s32 0, %v2849
        %v2851 = vsel %vm2845, %v2850, %v2849
        %vm2852 = vcmp.lt.s32.totalorder %v1563, 0
        %v2853 = vsub.s32 0, %v1563
        %v2854 = vsel %vm2852, %v2853, %v1563
        %v2855 = vshrl.u32 %v2854, 7
        %v2856 = vand.u32 %v2854, 127
        %v2857 = vsub.s32 0, %v2856
        %v2858 = vsel %vm2852, %v2857, %v2856
        %vm2859 = vcmp.lt.s32.totalorder %v1564, 0
        %v2860 = vsub.s32 0, %v1564
        %v2861 = vsel %vm2859, %v2860, %v1564
        %v2862 = vshrl.u32 %v2861, 7
        %v2863 = vand.u32 %v2861, 127
        %v2864 = vsub.s32 0, %v2863
        %v2865 = vsel %vm2859, %v2864, %v2863
        %vm2866 = vcmp.lt.s32.totalorder %v2738, 0
        %v2867 = vsub.s32 0, %v2738
        %v2868 = vsel %vm2866, %v2867, %v2738
        %v2869 = vshrl.u32 %v2868, 7
        %v2870 = vand.u32 %v2868, 127
        %v2871 = vsub.s32 0, %v2870
        %v2872 = vsel %vm2866, %v2871, %v2870
        %vm2873 = vcmp.lt.s32.totalorder %v2739, 0
        %v2874 = vsub.s32 0, %v2739
        %v2875 = vsel %vm2873, %v2874, %v2739
        %v2876 = vshrl.u32 %v2875, 7
        %v2877 = vand.u32 %v2875, 127
        %v2878 = vsub.s32 0, %v2877
        %v2879 = vsel %vm2873, %v2878, %v2877
        %vm2880 = vcmp.lt.s32.totalorder %v2740, 0
        %v2881 = vsub.s32 0, %v2740
        %v2882 = vsel %vm2880, %v2881, %v2740
        %v2883 = vshrl.u32 %v2882, 7
        %v2884 = vand.u32 %v2882, 127
        %v2885 = vsub.s32 0, %v2884
        %v2886 = vsel %vm2880, %v2885, %v2884
        %vm2887 = vcmp.lt.s32.totalorder %v2741, 0
        %v2888 = vsub.s32 0, %v2741
        %v2889 = vsel %vm2887, %v2888, %v2741
        %v2890 = vshrl.u32 %v2889, 7
        %v2891 = vand.u32 %v2889, 127
        %v2892 = vsub.s32 0, %v2891
        %v2893 = vsel %vm2887, %v2892, %v2891
        %vm2894 = vcmp.lt.s32.totalorder %v2742, 0
        %v2895 = vsub.s32 0, %v2742
        %v2896 = vsel %vm2894, %v2895, %v2742
        %v2897 = vshrl.u32 %v2896, 7
        %v2898 = vand.u32 %v2896, 127
        %v2899 = vsub.s32 0, %v2898
        %v2900 = vsel %vm2894, %v2899, %v2898
        %vm2901 = vcmp.lt.s32.totalorder %v2743, 0
        %v2902 = vsub.s32 0, %v2743
        %v2903 = vsel %vm2901, %v2902, %v2743
        %v2904 = vshrl.u32 %v2903, 7
        %v2905 = vand.u32 %v2903, 127
        %v2906 = vsub.s32 0, %v2905
        %v2907 = vsel %vm2901, %v2906, %v2905
        %vm2908 = vcmp.lt.s32.totalorder %v2744, 0
        %v2909 = vsub.s32 0, %v2744
        %v2910 = vsel %vm2908, %v2909, %v2744
        %v2911 = vshrl.u32 %v2910, 7
        %v2912 = vand.u32 %v2910, 127
        %v2913 = vsub.s32 0, %v2912
        %v2914 = vsel %vm2908, %v2913, %v2912
        %vm2915 = vcmp.lt.s32.totalorder %v2745, 0
        %v2916 = vsub.s32 0, %v2745
        %v2917 = vsel %vm2915, %v2916, %v2745
        %v2918 = vshrl.u32 %v2917, 7
        %v2919 = vand.u32 %v2917, 127
        %v2920 = vsub.s32 0, %v2919
        %v2921 = vsel %vm2915, %v2920, %v2919
        %vm2922 = vcmp.lt.s32.totalorder %v2746, 0
        %v2923 = vsub.s32 0, %v2746
        %v2924 = vsel %vm2922, %v2923, %v2746
        %v2925 = vshrl.u32 %v2924, 7
        %v2926 = vand.u32 %v2924, 127
        %v2927 = vsub.s32 0, %v2926
        %v2928 = vsel %vm2922, %v2927, %v2926
        %vm2929 = vcmp.lt.s32.totalorder %v2747, 0
        %v2930 = vsub.s32 0, %v2747
        %v2931 = vsel %vm2929, %v2930, %v2747
        %v2932 = vshrl.u32 %v2931, 7
        %v2933 = vand.u32 %v2931, 127
        %v2934 = vsub.s32 0, %v2933
        %v2935 = vsel %vm2929, %v2934, %v2933
        %vm2936 = vcmp.lt.s32.totalorder %v2748, 0
        %v2937 = vsub.s32 0, %v2748
        %v2938 = vsel %vm2936, %v2937, %v2748
        %v2939 = vshrl.u32 %v2938, 7
        %v2940 = vand.u32 %v2938, 127
        %v2941 = vsub.s32 0, %v2940
        %v2942 = vsel %vm2936, %v2941, %v2940
        %vm2943 = vcmp.lt.s32.totalorder %v2749, 0
        %v2944 = vsub.s32 0, %v2749
        %v2945 = vsel %vm2943, %v2944, %v2749
        %v2946 = vshrl.u32 %v2945, 7
        %v2947 = vand.u32 %v2945, 127
        %v2948 = vsub.s32 0, %v2947
        %v2949 = vsel %vm2943, %v2948, %v2947
        %vm2950 = vcmp.lt.s32.totalorder %v2750, 0
        %v2951 = vsub.s32 0, %v2750
        %v2952 = vsel %vm2950, %v2951, %v2750
        %v2953 = vshrl.u32 %v2952, 7
        %v2954 = vand.u32 %v2952, 127
        %v2955 = vsub.s32 0, %v2954
        %v2956 = vsel %vm2950, %v2955, %v2954
        %vm2957 = vcmp.lt.s32.totalorder %v2751, 0
        %v2958 = vsub.s32 0, %v2751
        %v2959 = vsel %vm2957, %v2958, %v2751
        %v2960 = vshrl.u32 %v2959, 7
        %v2961 = vand.u32 %v2959, 127
        %v2962 = vsub.s32 0, %v2961
        %v2963 = vsel %vm2957, %v2962, %v2961
        %vm2964 = vcmp.lt.s32.totalorder %v2752, 0
        %v2965 = vsub.s32 0, %v2752
        %v2966 = vsel %vm2964, %v2965, %v2752
        %v2967 = vshrl.u32 %v2966, 7
        %v2968 = vand.u32 %v2966, 127
        %v2969 = vsub.s32 0, %v2968
        %v2970 = vsel %vm2964, %v2969, %v2968
        %vm2971 = vcmp.lt.s32.totalorder %v2753, 0
        %v2972 = vsub.s32 0, %v2753
        %v2973 = vsel %vm2971, %v2972, %v2753
        %v2974 = vshrl.u32 %v2973, 7
        %v2975 = vand.u32 %v2973, 127
        %v2976 = vsub.s32 0, %v2975
        %v2977 = vsel %vm2971, %v2976, %v2975
        %vm2978 = vcmp.ne.s32.totalorder %v2760, 0
        %vm2979 = vcmp.ne.s32.totalorder %v2767, 0
        %vm2980 = vcmp.ne.s32.totalorder %v2774, 0
        %vm2981 = vcmp.ne.s32.totalorder %v2781, 0
        %vm2982 = vcmp.ne.s32.totalorder %v2788, 0
        %vm2983 = vcmp.ne.s32.totalorder %v2795, 0
        %vm2984 = vcmp.ne.s32.totalorder %v2802, 0
        %vm2985 = vcmp.ne.s32.totalorder %v2809, 0
        %vm2986 = vcmp.ne.s32.totalorder %v2816, 0
        %vm2987 = vcmp.ne.s32.totalorder %v2823, 0
        %vm2988 = vcmp.ne.s32.totalorder %v2830, 0
        %vm2989 = vcmp.ne.s32.totalorder %v2837, 0
        %vm2990 = vcmp.ne.s32.totalorder %v2844, 0
        %vm2991 = vcmp.ne.s32.totalorder %v2851, 0
        %vm2992 = vcmp.ne.s32.totalorder %v2858, 0
        %vm2993 = vcmp.ne.s32.totalorder %v2865, 0
        %vm2994 = vcmp.ne.s32.totalorder %v2872, 0
        %vm2995 = vcmp.ne.s32.totalorder %v2879, 0
        %vm2996 = vcmp.ne.s32.totalorder %v2886, 0
        %vm2997 = vcmp.ne.s32.totalorder %v2893, 0
        %vm2998 = vcmp.ne.s32.totalorder %v2900, 0
        %vm2999 = vcmp.ne.s32.totalorder %v2907, 0
        %vm3000 = vcmp.ne.s32.totalorder %v2914, 0
        %vm3001 = vcmp.ne.s32.totalorder %v2921, 0
        %vm3002 = vcmp.ne.s32.totalorder %v2928, 0
        %vm3003 = vcmp.ne.s32.totalorder %v2935, 0
        %vm3004 = vcmp.ne.s32.totalorder %v2942, 0
        %vm3005 = vcmp.ne.s32.totalorder %v2949, 0
        %vm3006 = vcmp.ne.s32.totalorder %v2956, 0
        %vm3007 = vcmp.ne.s32.totalorder %v2963, 0
        %vm3008 = vcmp.ne.s32.totalorder %v2970, 0
        %vm3009 = vcmp.ne.s32.totalorder %v2977, 0
        %vm3010 = vcmp.lt.s32.totalorder %v2760, 0
        %vm3011 = vcmp.lt.s32.totalorder %v2767, 0
        %vm3012 = vcmp.lt.s32.totalorder %v2774, 0
        %vm3013 = vcmp.lt.s32.totalorder %v2781, 0
        %vm3014 = vcmp.lt.s32.totalorder %v2788, 0
        %vm3015 = vcmp.lt.s32.totalorder %v2795, 0
        %vm3016 = vcmp.lt.s32.totalorder %v2802, 0
        %vm3017 = vcmp.lt.s32.totalorder %v2809, 0
        %vm3018 = vcmp.lt.s32.totalorder %v2816, 0
        %vm3019 = vcmp.lt.s32.totalorder %v2823, 0
        %vm3020 = vcmp.lt.s32.totalorder %v2830, 0
        %vm3021 = vcmp.lt.s32.totalorder %v2837, 0
        %vm3022 = vcmp.lt.s32.totalorder %v2844, 0
        %vm3023 = vcmp.lt.s32.totalorder %v2851, 0
        %vm3024 = vcmp.lt.s32.totalorder %v2858, 0
        %vm3025 = vcmp.lt.s32.totalorder %v2865, 0
        %vm3026 = vcmp.lt.s32.totalorder %v2872, 0
        %vm3027 = vcmp.lt.s32.totalorder %v2879, 0
        %vm3028 = vcmp.lt.s32.totalorder %v2886, 0
        %vm3029 = vcmp.lt.s32.totalorder %v2893, 0
        %vm3030 = vcmp.lt.s32.totalorder %v2900, 0
        %vm3031 = vcmp.lt.s32.totalorder %v2907, 0
        %vm3032 = vcmp.lt.s32.totalorder %v2914, 0
        %vm3033 = vcmp.lt.s32.totalorder %v2921, 0
        %vm3034 = vcmp.lt.s32.totalorder %v2928, 0
        %vm3035 = vcmp.lt.s32.totalorder %v2935, 0
        %vm3036 = vcmp.lt.s32.totalorder %v2942, 0
        %vm3037 = vcmp.lt.s32.totalorder %v2949, 0
        %vm3038 = vcmp.lt.s32.totalorder %v2956, 0
        %vm3039 = vcmp.lt.s32.totalorder %v2963, 0
        %vm3040 = vcmp.lt.s32.totalorder %v2970, 0
        %vm3041 = vcmp.lt.s32.totalorder %v2977, 0
        %vm3042 = vmand %vm3010, %vm2978
        %vm3043 = vmand %vm3011, %vm2979
        %vm3044 = vmand %vm3012, %vm2980
        %vm3045 = vmand %vm3013, %vm2981
        %vm3046 = vmand %vm3014, %vm2982
        %vm3047 = vmand %vm3015, %vm2983
        %vm3048 = vmand %vm3016, %vm2984
        %vm3049 = vmand %vm3017, %vm2985
        %vm3050 = vmand %vm3018, %vm2986
        %vm3051 = vmand %vm3019, %vm2987
        %vm3052 = vmand %vm3020, %vm2988
        %vm3053 = vmand %vm3021, %vm2989
        %vm3054 = vmand %vm3022, %vm2990
        %vm3055 = vmand %vm3023, %vm2991
        %vm3056 = vmand %vm3024, %vm2992
        %vm3057 = vmand %vm3025, %vm2993
        %vm3058 = vmand %vm3026, %vm2994
        %vm3059 = vmand %vm3027, %vm2995
        %vm3060 = vmand %vm3028, %vm2996
        %vm3061 = vmand %vm3029, %vm2997
        %vm3062 = vmand %vm3030, %vm2998
        %vm3063 = vmand %vm3031, %vm2999
        %vm3064 = vmand %vm3032, %vm3000
        %vm3065 = vmand %vm3033, %vm3001
        %vm3066 = vmand %vm3034, %vm3002
        %vm3067 = vmand %vm3035, %vm3003
        %vm3068 = vmand %vm3036, %vm3004
        %vm3069 = vmand %vm3037, %vm3005
        %vm3070 = vmand %vm3038, %vm3006
        %vm3071 = vmand %vm3039, %vm3007
        %vm3072 = vmand %vm3040, %vm3008
        %vm3073 = vmand %vm3041, %vm3009
        %v3074 = vadd.s32 %v2760, 128
        %v3075 = vadd.s32 %v2767, 128
        %v3076 = vadd.s32 %v2774, 128
        %v3077 = vadd.s32 %v2781, 128
        %v3078 = vadd.s32 %v2788, 128
        %v3079 = vadd.s32 %v2795, 128
        %v3080 = vadd.s32 %v2802, 128
        %v3081 = vadd.s32 %v2809, 128
        %v3082 = vadd.s32 %v2816, 128
        %v3083 = vadd.s32 %v2823, 128
        %v3084 = vadd.s32 %v2830, 128
        %v3085 = vadd.s32 %v2837, 128
        %v3086 = vadd.s32 %v2844, 128
        %v3087 = vadd.s32 %v2851, 128
        %v3088 = vadd.s32 %v2858, 128
        %v3089 = vadd.s32 %v2865, 128
        %v3090 = vadd.s32 %v2872, 128
        %v3091 = vadd.s32 %v2879, 128
        %v3092 = vadd.s32 %v2886, 128
        %v3093 = vadd.s32 %v2893, 128
        %v3094 = vadd.s32 %v2900, 128
        %v3095 = vadd.s32 %v2907, 128
        %v3096 = vadd.s32 %v2914, 128
        %v3097 = vadd.s32 %v2921, 128
        %v3098 = vadd.s32 %v2928, 128
        %v3099 = vadd.s32 %v2935, 128
        %v3100 = vadd.s32 %v2942, 128
        %v3101 = vadd.s32 %v2949, 128
        %v3102 = vadd.s32 %v2956, 128
        %v3103 = vadd.s32 %v2963, 128
        %v3104 = vadd.s32 %v2970, 128
        %v3105 = vadd.s32 %v2977, 128
        %v3106 = vsel %vm3042, %v3074, %v2760
        %v3107 = vsel %vm3043, %v3075, %v2767
        %v3108 = vsel %vm3044, %v3076, %v2774
        %v3109 = vsel %vm3045, %v3077, %v2781
        %v3110 = vsel %vm3046, %v3078, %v2788
        %v3111 = vsel %vm3047, %v3079, %v2795
        %v3112 = vsel %vm3048, %v3080, %v2802
        %v3113 = vsel %vm3049, %v3081, %v2809
        %v3114 = vsel %vm3050, %v3082, %v2816
        %v3115 = vsel %vm3051, %v3083, %v2823
        %v3116 = vsel %vm3052, %v3084, %v2830
        %v3117 = vsel %vm3053, %v3085, %v2837
        %v3118 = vsel %vm3054, %v3086, %v2844
        %v3119 = vsel %vm3055, %v3087, %v2851
        %v3120 = vsel %vm3056, %v3088, %v2858
        %v3121 = vsel %vm3057, %v3089, %v2865
        %v3122 = vsel %vm3058, %v3090, %v2872
        %v3123 = vsel %vm3059, %v3091, %v2879
        %v3124 = vsel %vm3060, %v3092, %v2886
        %v3125 = vsel %vm3061, %v3093, %v2893
        %v3126 = vsel %vm3062, %v3094, %v2900
        %v3127 = vsel %vm3063, %v3095, %v2907
        %v3128 = vsel %vm3064, %v3096, %v2914
        %v3129 = vsel %vm3065, %v3097, %v2921
        %v3130 = vsel %vm3066, %v3098, %v2928
        %v3131 = vsel %vm3067, %v3099, %v2935
        %v3132 = vsel %vm3068, %v3100, %v2942
        %v3133 = vsel %vm3069, %v3101, %v2949
        %v3134 = vsel %vm3070, %v3102, %v2956
        %v3135 = vsel %vm3071, %v3103, %v2963
        %v3136 = vsel %vm3072, %v3104, %v2970
        %v3137 = vsel %vm3073, %v3105, %v2977
        %vm3138 = vcmp.ne.s32.totalorder %v3106, 0
        %vm3139 = vcmp.ne.s32.totalorder %v3107, 0
        %vm3140 = vcmp.ne.s32.totalorder %v3108, 0
        %vm3141 = vcmp.ne.s32.totalorder %v3109, 0
        %vm3142 = vcmp.ne.s32.totalorder %v3110, 0
        %vm3143 = vcmp.ne.s32.totalorder %v3111, 0
        %vm3144 = vcmp.ne.s32.totalorder %v3112, 0
        %vm3145 = vcmp.ne.s32.totalorder %v3113, 0
        %vm3146 = vcmp.ne.s32.totalorder %v3114, 0
        %vm3147 = vcmp.ne.s32.totalorder %v3115, 0
        %vm3148 = vcmp.ne.s32.totalorder %v3116, 0
        %vm3149 = vcmp.ne.s32.totalorder %v3117, 0
        %vm3150 = vcmp.ne.s32.totalorder %v3118, 0
        %vm3151 = vcmp.ne.s32.totalorder %v3119, 0
        %vm3152 = vcmp.ne.s32.totalorder %v3120, 0
        %vm3153 = vcmp.ne.s32.totalorder %v3121, 0
        %vm3154 = vcmp.ne.s32.totalorder %v3122, 0
        %vm3155 = vcmp.ne.s32.totalorder %v3123, 0
        %vm3156 = vcmp.ne.s32.totalorder %v3124, 0
        %vm3157 = vcmp.ne.s32.totalorder %v3125, 0
        %vm3158 = vcmp.ne.s32.totalorder %v3126, 0
        %vm3159 = vcmp.ne.s32.totalorder %v3127, 0
        %vm3160 = vcmp.ne.s32.totalorder %v3128, 0
        %vm3161 = vcmp.ne.s32.totalorder %v3129, 0
        %vm3162 = vcmp.ne.s32.totalorder %v3130, 0
        %vm3163 = vcmp.ne.s32.totalorder %v3131, 0
        %vm3164 = vcmp.ne.s32.totalorder %v3132, 0
        %vm3165 = vcmp.ne.s32.totalorder %v3133, 0
        %vm3166 = vcmp.ne.s32.totalorder %v3134, 0
        %vm3167 = vcmp.ne.s32.totalorder %v3135, 0
        %vm3168 = vcmp.ne.s32.totalorder %v3136, 0
        %vm3169 = vcmp.ne.s32.totalorder %v3137, 0
        %v3170 = vrot.slane %v2580, 7
        %v3171 = vrot.slane %v2585, 7
        %v3172 = vrot.slane %v2590, 7
        %v3173 = vrot.slane %v2595, 7
        %v3174 = vrot.slane %v2600, 7
        %v3175 = vrot.slane %v2605, 7
        %v3176 = vrot.slane %v2610, 7
        %v3177 = vrot.slane %v2615, 7
        %v3178 = vrot.slane %v2620, 7
        %v3179 = vrot.slane %v2625, 7
        %v3180 = vrot.slane %v2630, 7
        %v3181 = vrot.slane %v2635, 7
        %v3182 = vrot.slane %v2640, 7
        %v3183 = vrot.slane %v2645, 7
        %v3184 = vrot.slane %v2650, 7
        %v3185 = vrot.slane %v2655, 7
        %v3186 = vrot.slane %v2660, 7
        %v3187 = vrot.slane %v2665, 7
        %v3188 = vrot.slane %v2670, 7
        %v3189 = vrot.slane %v2675, 7
        %v3190 = vrot.slane %v2680, 7
        %v3191 = vrot.slane %v2685, 7
        %v3192 = vrot.slane %v2690, 7
        %v3193 = vrot.slane %v2695, 7
        %v3194 = vrot.slane %v2700, 7
        %v3195 = vrot.slane %v2705, 7
        %v3196 = vrot.slane %v2710, 7
        %v3197 = vrot.slane %v2715, 7
        %v3198 = vrot.slane %v2720, 7
        %v3199 = vrot.slane %v2725, 7
        %v3200 = vrot.slane %v2730, 7
        %v3201 = vrot.slane %v2735, 7
        %v3202 = vsel %vm1789, %v3200, %v3201
        %v3203 = vsel %vm1789, %v3199, %v3200
        %v3204 = vsel %vm1789, %v3198, %v3199
        %v3205 = vsel %vm1789, %v3197, %v3198
        %v3206 = vsel %vm1789, %v3196, %v3197
        %v3207 = vsel %vm1789, %v3195, %v3196
        %v3208 = vsel %vm1789, %v3194, %v3195
        %v3209 = vsel %vm1789, %v3193, %v3194
        %v3210 = vsel %vm1789, %v3192, %v3193
        %v3211 = vsel %vm1789, %v3191, %v3192
        %v3212 = vsel %vm1789, %v3190, %v3191
        %v3213 = vsel %vm1789, %v3189, %v3190
        %v3214 = vsel %vm1789, %v3188, %v3189
        %v3215 = vsel %vm1789, %v3187, %v3188
        %v3216 = vsel %vm1789, %v3186, %v3187
        %v3217 = vsel %vm1789, %v3185, %v3186
        %v3218 = vsel %vm1789, %v3184, %v3185
        %v3219 = vsel %vm1789, %v3183, %v3184
        %v3220 = vsel %vm1789, %v3182, %v3183
        %v3221 = vsel %vm1789, %v3181, %v3182
        %v3222 = vsel %vm1789, %v3180, %v3181
        %v3223 = vsel %vm1789, %v3179, %v3180
        %v3224 = vsel %vm1789, %v3178, %v3179
        %v3225 = vsel %vm1789, %v3177, %v3178
        %v3226 = vsel %vm1789, %v3176, %v3177
        %v3227 = vsel %vm1789, %v3175, %v3176
        %v3228 = vsel %vm1789, %v3174, %v3175
        %v3229 = vsel %vm1789, %v3173, %v3174
        %v3230 = vsel %vm1789, %v3172, %v3173
        %v3231 = vsel %vm1789, %v3171, %v3172
        %v3232 = vsel %vm1789, %v3170, %v3171
        %v3233 = vsel %vm1789, %v3201, %v3170
        %v3234 = vsel %vm3138, %v3233, 0.0
        %v3235 = vsel %vm3139, %v3232, 0.0
        %v3236 = vsel %vm3140, %v3231, 0.0
        %v3237 = vsel %vm3141, %v3230, 0.0
        %v3238 = vsel %vm3142, %v3229, 0.0
        %v3239 = vsel %vm3143, %v3228, 0.0
        %v3240 = vsel %vm3144, %v3227, 0.0
        %v3241 = vsel %vm3145, %v3226, 0.0
        %v3242 = vsel %vm3146, %v3225, 0.0
        %v3243 = vsel %vm3147, %v3224, 0.0
        %v3244 = vsel %vm3148, %v3223, 0.0
        %v3245 = vsel %vm3149, %v3222, 0.0
        %v3246 = vsel %vm3150, %v3221, 0.0
        %v3247 = vsel %vm3151, %v3220, 0.0
        %v3248 = vsel %vm3152, %v3219, 0.0
        %v3249 = vsel %vm3153, %v3218, 0.0
        %v3250 = vsel %vm3154, %v3217, 0.0
        %v3251 = vsel %vm3155, %v3216, 0.0
        %v3252 = vsel %vm3156, %v3215, 0.0
        %v3253 = vsel %vm3157, %v3214, 0.0
        %v3254 = vsel %vm3158, %v3213, 0.0
        %v3255 = vsel %vm3159, %v3212, 0.0
        %v3256 = vsel %vm3160, %v3211, 0.0
        %v3257 = vsel %vm3161, %v3210, 0.0
        %v3258 = vsel %vm3162, %v3209, 0.0
        %v3259 = vsel %vm3163, %v3208, 0.0
        %v3260 = vsel %vm3164, %v3207, 0.0
        %v3261 = vsel %vm3165, %v3206, 0.0
        %v3262 = vsel %vm3166, %v3205, 0.0
        %v3263 = vsel %vm3167, %v3204, 0.0
        %v3264 = vsel %vm3168, %v3203, 0.0
        %v3265 = vsel %vm3169, %v3202, 0.0
        %vm3266 = vcmp.ne.s32.totalorder %v3106, 127
        %vm3267 = vcmp.ne.s32.totalorder %v3107, 127
        %vm3268 = vcmp.ne.s32.totalorder %v3108, 127
        %vm3269 = vcmp.ne.s32.totalorder %v3109, 127
        %vm3270 = vcmp.ne.s32.totalorder %v3110, 127
        %vm3271 = vcmp.ne.s32.totalorder %v3111, 127
        %vm3272 = vcmp.ne.s32.totalorder %v3112, 127
        %vm3273 = vcmp.ne.s32.totalorder %v3113, 127
        %vm3274 = vcmp.ne.s32.totalorder %v3114, 127
        %vm3275 = vcmp.ne.s32.totalorder %v3115, 127
        %vm3276 = vcmp.ne.s32.totalorder %v3116, 127
        %vm3277 = vcmp.ne.s32.totalorder %v3117, 127
        %vm3278 = vcmp.ne.s32.totalorder %v3118, 127
        %vm3279 = vcmp.ne.s32.totalorder %v3119, 127
        %vm3280 = vcmp.ne.s32.totalorder %v3120, 127
        %vm3281 = vcmp.ne.s32.totalorder %v3121, 127
        %vm3282 = vcmp.ne.s32.totalorder %v3122, 127
        %vm3283 = vcmp.ne.s32.totalorder %v3123, 127
        %vm3284 = vcmp.ne.s32.totalorder %v3124, 127
        %vm3285 = vcmp.ne.s32.totalorder %v3125, 127
        %vm3286 = vcmp.ne.s32.totalorder %v3126, 127
        %vm3287 = vcmp.ne.s32.totalorder %v3127, 127
        %vm3288 = vcmp.ne.s32.totalorder %v3128, 127
        %vm3289 = vcmp.ne.s32.totalorder %v3129, 127
        %vm3290 = vcmp.ne.s32.totalorder %v3130, 127
        %vm3291 = vcmp.ne.s32.totalorder %v3131, 127
        %vm3292 = vcmp.ne.s32.totalorder %v3132, 127
        %vm3293 = vcmp.ne.s32.totalorder %v3133, 127
        %vm3294 = vcmp.ne.s32.totalorder %v3134, 127
        %vm3295 = vcmp.ne.s32.totalorder %v3135, 127
        %vm3296 = vcmp.ne.s32.totalorder %v3136, 127
        %vm3297 = vcmp.ne.s32.totalorder %v3137, 127
        %v3298 = vrot.slane %v2580, 1
        %v3299 = vrot.slane %v2585, 1
        %v3300 = vrot.slane %v2590, 1
        %v3301 = vrot.slane %v2595, 1
        %v3302 = vrot.slane %v2600, 1
        %v3303 = vrot.slane %v2605, 1
        %v3304 = vrot.slane %v2610, 1
        %v3305 = vrot.slane %v2615, 1
        %v3306 = vrot.slane %v2620, 1
        %v3307 = vrot.slane %v2625, 1
        %v3308 = vrot.slane %v2630, 1
        %v3309 = vrot.slane %v2635, 1
        %v3310 = vrot.slane %v2640, 1
        %v3311 = vrot.slane %v2645, 1
        %v3312 = vrot.slane %v2650, 1
        %v3313 = vrot.slane %v2655, 1
        %v3314 = vrot.slane %v2660, 1
        %v3315 = vrot.slane %v2665, 1
        %v3316 = vrot.slane %v2670, 1
        %v3317 = vrot.slane %v2675, 1
        %v3318 = vrot.slane %v2680, 1
        %v3319 = vrot.slane %v2685, 1
        %v3320 = vrot.slane %v2690, 1
        %v3321 = vrot.slane %v2695, 1
        %v3322 = vrot.slane %v2700, 1
        %v3323 = vrot.slane %v2705, 1
        %v3324 = vrot.slane %v2710, 1
        %v3325 = vrot.slane %v2715, 1
        %v3326 = vrot.slane %v2720, 1
        %v3327 = vrot.slane %v2725, 1
        %v3328 = vrot.slane %v2730, 1
        %v3329 = vrot.slane %v2735, 1
        %v3330 = vsel %vm1854, %v3328, %v3329
        %v3331 = vsel %vm1854, %v3327, %v3328
        %v3332 = vsel %vm1854, %v3326, %v3327
        %v3333 = vsel %vm1854, %v3325, %v3326
        %v3334 = vsel %vm1854, %v3324, %v3325
        %v3335 = vsel %vm1854, %v3323, %v3324
        %v3336 = vsel %vm1854, %v3322, %v3323
        %v3337 = vsel %vm1854, %v3321, %v3322
        %v3338 = vsel %vm1854, %v3320, %v3321
        %v3339 = vsel %vm1854, %v3319, %v3320
        %v3340 = vsel %vm1854, %v3318, %v3319
        %v3341 = vsel %vm1854, %v3317, %v3318
        %v3342 = vsel %vm1854, %v3316, %v3317
        %v3343 = vsel %vm1854, %v3315, %v3316
        %v3344 = vsel %vm1854, %v3314, %v3315
        %v3345 = vsel %vm1854, %v3313, %v3314
        %v3346 = vsel %vm1854, %v3312, %v3313
        %v3347 = vsel %vm1854, %v3311, %v3312
        %v3348 = vsel %vm1854, %v3310, %v3311
        %v3349 = vsel %vm1854, %v3309, %v3310
        %v3350 = vsel %vm1854, %v3308, %v3309
        %v3351 = vsel %vm1854, %v3307, %v3308
        %v3352 = vsel %vm1854, %v3306, %v3307
        %v3353 = vsel %vm1854, %v3305, %v3306
        %v3354 = vsel %vm1854, %v3304, %v3305
        %v3355 = vsel %vm1854, %v3303, %v3304
        %v3356 = vsel %vm1854, %v3302, %v3303
        %v3357 = vsel %vm1854, %v3301, %v3302
        %v3358 = vsel %vm1854, %v3300, %v3301
        %v3359 = vsel %vm1854, %v3299, %v3300
        %v3360 = vsel %vm1854, %v3298, %v3299
        %v3361 = vsel %vm1854, %v3329, %v3298
        %v3362 = vsel %vm3266, %v3360, 0.0
        %v3363 = vsel %vm3267, %v3359, 0.0
        %v3364 = vsel %vm3268, %v3358, 0.0
        %v3365 = vsel %vm3269, %v3357, 0.0
        %v3366 = vsel %vm3270, %v3356, 0.0
        %v3367 = vsel %vm3271, %v3355, 0.0
        %v3368 = vsel %vm3272, %v3354, 0.0
        %v3369 = vsel %vm3273, %v3353, 0.0
        %v3370 = vsel %vm3274, %v3352, 0.0
        %v3371 = vsel %vm3275, %v3351, 0.0
        %v3372 = vsel %vm3276, %v3350, 0.0
        %v3373 = vsel %vm3277, %v3349, 0.0
        %v3374 = vsel %vm3278, %v3348, 0.0
        %v3375 = vsel %vm3279, %v3347, 0.0
        %v3376 = vsel %vm3280, %v3346, 0.0
        %v3377 = vsel %vm3281, %v3345, 0.0
        %v3378 = vsel %vm3282, %v3344, 0.0
        %v3379 = vsel %vm3283, %v3343, 0.0
        %v3380 = vsel %vm3284, %v3342, 0.0
        %v3381 = vsel %vm3285, %v3341, 0.0
        %v3382 = vsel %vm3286, %v3340, 0.0
        %v3383 = vsel %vm3287, %v3339, 0.0
        %v3384 = vsel %vm3288, %v3338, 0.0
        %v3385 = vsel %vm3289, %v3337, 0.0
        %v3386 = vsel %vm3290, %v3336, 0.0
        %v3387 = vsel %vm3291, %v3335, 0.0
        %v3388 = vsel %vm3292, %v3334, 0.0
        %v3389 = vsel %vm3293, %v3333, 0.0
        %v3390 = vsel %vm3294, %v3332, 0.0
        %v3391 = vsel %vm3295, %v3331, 0.0
        %v3392 = vsel %vm3296, %v3330, 0.0
        %v3393 = vsel %vm3297, %v3361, 0.0
        %v3394 = vpack.c.bf16 %v3235, %v3234
        %v3395 = vpack.c.bf16 %v3237, %v3236
        %v3396 = vpack.c.bf16 %v3239, %v3238
        %v3397 = vpack.c.bf16 %v3241, %v3240
        %v3398 = vpack.c.bf16 %v3243, %v3242
        %v3399 = vpack.c.bf16 %v3245, %v3244
        %v3400 = vpack.c.bf16 %v3247, %v3246
        %v3401 = vpack.c.bf16 %v3249, %v3248
        %v3402 = vpack.c.bf16 %v3251, %v3250
        %v3403 = vpack.c.bf16 %v3253, %v3252
        %v3404 = vpack.c.bf16 %v3255, %v3254
        %v3405 = vpack.c.bf16 %v3257, %v3256
        %v3406 = vpack.c.bf16 %v3259, %v3258
        %v3407 = vpack.c.bf16 %v3261, %v3260
        %v3408 = vpack.c.bf16 %v3263, %v3262
        %v3409 = vpack.c.bf16 %v3265, %v3264
        %v3410 = vld [vmem:[#allocation18] sm:$0xf]
        %v3411 = vld [vmem:[#allocation18 + $0x4] sm:$0xf]
        %v3412 = vld [vmem:[#allocation18 + $0x8] sm:$0xf]
        %v3413 = vld [vmem:[#allocation18 + $0xc] sm:$0xf]
        %v3414 = vld [vmem:[#allocation18 + $0x10] sm:$0xf]
        %v3415 = vld [vmem:[#allocation18 + $0x14] sm:$0xf]
        %v3416 = vld [vmem:[#allocation18 + $0x18] sm:$0xf]
        %v3417 = vld [vmem:[#allocation18 + $0x1c] sm:$0xf]
        %v3418 = vld [vmem:[#allocation18 + $0x20] sm:$0xf]
        %v3419 = vld [vmem:[#allocation18 + $0x24] sm:$0xf]
        %v3420 = vld [vmem:[#allocation18 + $0x28] sm:$0xf]
        %v3421 = vld [vmem:[#allocation18 + $0x2c] sm:$0xf]
        %v3422 = vld [vmem:[#allocation18 + $0x30] sm:$0xf]
        %v3423 = vld [vmem:[#allocation18 + $0x34] sm:$0xf]
        %v3424 = vld [vmem:[#allocation18 + $0x38] sm:$0xf]
        %v3425 = vld [vmem:[#allocation18 + $0x3c] sm:$0xf]
        %v3426 = vpack.c.bf16 %v2585, %v2580
        %v3427 = vpack.c.bf16 %v2595, %v2590
        %v3428 = vpack.c.bf16 %v2605, %v2600
        %v3429 = vpack.c.bf16 %v2615, %v2610
        %v3430 = vpack.c.bf16 %v2625, %v2620
        %v3431 = vpack.c.bf16 %v2635, %v2630
        %v3432 = vpack.c.bf16 %v2645, %v2640
        %v3433 = vpack.c.bf16 %v2655, %v2650
        %v3434 = vpack.c.bf16 %v2665, %v2660
        %v3435 = vpack.c.bf16 %v2675, %v2670
        %v3436 = vpack.c.bf16 %v2685, %v2680
        %v3437 = vpack.c.bf16 %v2695, %v2690
        %v3438 = vpack.c.bf16 %v2705, %v2700
        %v3439 = vpack.c.bf16 %v2715, %v2710
        %v3440 = vpack.c.bf16 %v2725, %v2720
        %v3441 = vpack.c.bf16 %v2735, %v2730
        %v3442 = vld [vmem:[#allocation20] sm:$0xf]
        %v3443 = vld [vmem:[#allocation20 + $0x4] sm:$0xf]
        %v3444 = vld [vmem:[#allocation20 + $0x8] sm:$0xf]
        %v3445 = vld [vmem:[#allocation20 + $0xc] sm:$0xf]
        %v3446 = vld [vmem:[#allocation20 + $0x10] sm:$0xf]
        %v3447 = vld [vmem:[#allocation20 + $0x14] sm:$0xf]
        %v3448 = vld [vmem:[#allocation20 + $0x18] sm:$0xf]
        %v3449 = vld [vmem:[#allocation20 + $0x1c] sm:$0xf]
        %v3450 = vld [vmem:[#allocation20 + $0x20] sm:$0xf]
        %v3451 = vld [vmem:[#allocation20 + $0x24] sm:$0xf]
        %v3452 = vld [vmem:[#allocation20 + $0x28] sm:$0xf]
        %v3453 = vld [vmem:[#allocation20 + $0x2c] sm:$0xf]
        %v3454 = vld [vmem:[#allocation20 + $0x30] sm:$0xf]
        %v3455 = vld [vmem:[#allocation20 + $0x34] sm:$0xf]
        %v3456 = vld [vmem:[#allocation20 + $0x38] sm:$0xf]
        %v3457 = vld [vmem:[#allocation20 + $0x3c] sm:$0xf]
        %v3474 = vunpack.c.l.b16 %v3442
        %v3475 = vunpack.c.l.b16 %v3443
        %v3476 = vunpack.c.l.b16 %v3444
        %v3477 = vunpack.c.l.b16 %v3445
        %v3478 = vunpack.c.l.b16 %v3446
        %v3479 = vunpack.c.l.b16 %v3447
        %v3480 = vunpack.c.l.b16 %v3448
        %v3481 = vunpack.c.l.b16 %v3449
        %v3482 = vunpack.c.l.b16 %v3450
        %v3483 = vunpack.c.l.b16 %v3451
        %v3484 = vunpack.c.l.b16 %v3452
        %v3485 = vunpack.c.l.b16 %v3453
        %v3486 = vunpack.c.l.b16 %v3454
        %v3487 = vunpack.c.l.b16 %v3455
        %v3488 = vunpack.c.l.b16 %v3456
        %v3489 = vunpack.c.l.b16 %v3457
        %v3490 = vpack.c.b16 %v3475, %v3474
        %v3491 = vpack.c.b16 %v3477, %v3476
        %v3492 = vpack.c.b16 %v3479, %v3478
        %v3493 = vpack.c.b16 %v3481, %v3480
        %v3494 = vpack.c.b16 %v3483, %v3482
        %v3495 = vpack.c.b16 %v3485, %v3484
        %v3496 = vpack.c.b16 %v3487, %v3486
        %v3497 = vpack.c.b16 %v3489, %v3488
        %3506 = vmatprep.subr.bf16.mxu0 0
        %3507 = vmatpush1.bf16.msra.mxu0 %v3497
        %3508 = vmatprep.subr.bf16.mxu0 0
        %3509 = vmatpush1.bf16.msra.mxu0 %v3496
        %3510 = vmatprep.subr.bf16.mxu0 0
        %3511 = vmatpush1.bf16.msra.mxu0 %v3495
        %3512 = vmatprep.subr.bf16.mxu0 0
        %3513 = vmatpush1.bf16.msra.mxu0 %v3494
        %3514 = vmatprep.subr.bf16.mxu0 0
        %3515 = vmatpush1.bf16.msra.mxu0 %v3493
        %3516 = vmatprep.subr.bf16.mxu0 0
        %3517 = vmatpush1.bf16.msra.mxu0 %v3492
        %3518 = vmatprep.subr.bf16.mxu0 0
        %3519 = vmatpush1.bf16.msra.mxu0 %v3491
        %3520 = vmatprep.subr.bf16.mxu0 0
        %3521 = vmatpush1.bf16.msra.mxu0 %v3490
        %3522 = vmatprep.subr.bf16.mxu0 0
        %3523 = vmatpush2.bf16.msra.mxu0 0
        %3524 = vmatprep.subr.bf16.mxu0 0
        %3525 = vmatpush2.bf16.msra.mxu0 0
        %3526 = vmatprep.subr.bf16.mxu0 0
        %3527 = vmatpush2.bf16.msra.mxu0 0
        %3528 = vmatprep.subr.bf16.mxu0 0
        %3529 = vmatpush2.bf16.msra.mxu0 0
        %3530 = vmatprep.subr.bf16.mxu0 0
        %3531 = vmatpush2.bf16.msra.mxu0 0
        %3532 = vmatprep.subr.bf16.mxu0 0
        %3533 = vmatpush2.bf16.msra.mxu0 0
        %3534 = vmatprep.subr.bf16.mxu0 0
        %3535 = vmatpush2.bf16.msra.mxu0 0
        %3536 = vmatprep.subr.bf16.mxu0 0
        %3537 = vmatpush2.bf16.msra.mxu0 0
        %3538 = vmatprep.mubr.bf16.mxu0 0
        %3539 = vmatmul.mubr.bf16.gmra.mxu0 %v3426
        %v3540 = vpop.f32.mrf.mxu0
        %v3541 = vadd.f32 0.0, %v3540
        %v3542 = vpop.f32.mrf.mxu0
        %v3543 = vpop.f32.mrf.mxu0
        %v3544 = vadd.f32 0.0, %v3543
        %v3545 = vpop.f32.mrf.mxu0
        %3546 = vmatprep.mubr.bf16.mxu0 0
        %3547 = vmatmul.mubr.bf16.gmra.mxu0 %v3427
        %v3548 = vpop.f32.mrf.mxu0
        %v3549 = vadd.f32 0.0, %v3548
        %v3550 = vpop.f32.mrf.mxu0
        %v3551 = vpop.f32.mrf.mxu0
        %v3552 = vadd.f32 0.0, %v3551
        %v3553 = vpop.f32.mrf.mxu0
        %3554 = vmatprep.mubr.bf16.mxu0 0
        %3555 = vmatmul.mubr.bf16.gmra.mxu0 %v3428
        %v3556 = vpop.f32.mrf.mxu0
        %v3557 = vadd.f32 0.0, %v3556
        %v3558 = vpop.f32.mrf.mxu0
        %v3559 = vpop.f32.mrf.mxu0
        %v3560 = vadd.f32 0.0, %v3559
        %v3561 = vpop.f32.mrf.mxu0
        %3562 = vmatprep.mubr.bf16.mxu0 0
        %3563 = vmatmul.mubr.bf16.gmra.mxu0 %v3429
        %v3564 = vpop.f32.mrf.mxu0
        %v3565 = vadd.f32 0.0, %v3564
        %v3566 = vpop.f32.mrf.mxu0
        %v3567 = vpop.f32.mrf.mxu0
        %v3568 = vadd.f32 0.0, %v3567
        %v3569 = vpop.f32.mrf.mxu0
        %3570 = vmatprep.mubr.bf16.mxu0 0
        %3571 = vmatmul.mubr.bf16.gmra.mxu0 %v3430
        %v3572 = vpop.f32.mrf.mxu0
        %v3573 = vadd.f32 0.0, %v3572
        %v3574 = vpop.f32.mrf.mxu0
        %v3575 = vpop.f32.mrf.mxu0
        %v3576 = vadd.f32 0.0, %v3575
        %v3577 = vpop.f32.mrf.mxu0
        %3578 = vmatprep.mubr.bf16.mxu0 0
        %3579 = vmatmul.mubr.bf16.gmra.mxu0 %v3431
        %v3580 = vpop.f32.mrf.mxu0
        %v3581 = vadd.f32 0.0, %v3580
        %v3582 = vpop.f32.mrf.mxu0
        %v3583 = vpop.f32.mrf.mxu0
        %v3584 = vadd.f32 0.0, %v3583
        %v3585 = vpop.f32.mrf.mxu0
        %3586 = vmatprep.mubr.bf16.mxu0 0
        %3587 = vmatmul.mubr.bf16.gmra.mxu0 %v3432
        %v3588 = vpop.f32.mrf.mxu0
        %v3589 = vadd.f32 0.0, %v3588
        %v3590 = vpop.f32.mrf.mxu0
        %v3591 = vpop.f32.mrf.mxu0
        %v3592 = vadd.f32 0.0, %v3591
        %v3593 = vpop.f32.mrf.mxu0
        %3594 = vmatprep.mubr.bf16.mxu0 0
        %3595 = vmatmul.mubr.bf16.gmra.mxu0 %v3433
        %v3596 = vpop.f32.mrf.mxu0
        %v3597 = vadd.f32 0.0, %v3596
        %v3598 = vpop.f32.mrf.mxu0
        %v3599 = vpop.f32.mrf.mxu0
        %v3600 = vadd.f32 0.0, %v3599
        %v3601 = vpop.f32.mrf.mxu0
        %3602 = vmatprep.mubr.bf16.mxu0 0
        %3603 = vmatmul.mubr.bf16.gmra.mxu0 %v3434
        %v3604 = vpop.f32.mrf.mxu0
        %v3605 = vadd.f32 0.0, %v3604
        %v3606 = vpop.f32.mrf.mxu0
        %v3607 = vpop.f32.mrf.mxu0
        %v3608 = vadd.f32 0.0, %v3607
        %v3609 = vpop.f32.mrf.mxu0
        %3610 = vmatprep.mubr.bf16.mxu0 0
        %3611 = vmatmul.mubr.bf16.gmra.mxu0 %v3435
        %v3612 = vpop.f32.mrf.mxu0
        %v3613 = vadd.f32 0.0, %v3612
        %v3614 = vpop.f32.mrf.mxu0
        %v3615 = vpop.f32.mrf.mxu0
        %v3616 = vadd.f32 0.0, %v3615
        %v3617 = vpop.f32.mrf.mxu0
        %3618 = vmatprep.mubr.bf16.mxu0 0
        %3619 = vmatmul.mubr.bf16.gmra.mxu0 %v3436
        %v3620 = vpop.f32.mrf.mxu0
        %v3621 = vadd.f32 0.0, %v3620
        %v3622 = vpop.f32.mrf.mxu0
        %v3623 = vpop.f32.mrf.mxu0
        %v3624 = vadd.f32 0.0, %v3623
        %v3625 = vpop.f32.mrf.mxu0
        %3626 = vmatprep.mubr.bf16.mxu0 0
        %3627 = vmatmul.mubr.bf16.gmra.mxu0 %v3437
        %v3628 = vpop.f32.mrf.mxu0
        %v3629 = vadd.f32 0.0, %v3628
        %v3630 = vpop.f32.mrf.mxu0
        %v3631 = vpop.f32.mrf.mxu0
        %v3632 = vadd.f32 0.0, %v3631
        %v3633 = vpop.f32.mrf.mxu0
        %3634 = vmatprep.mubr.bf16.mxu0 0
        %3635 = vmatmul.mubr.bf16.gmra.mxu0 %v3438
        %v3636 = vpop.f32.mrf.mxu0
        %v3637 = vadd.f32 0.0, %v3636
        %v3638 = vpop.f32.mrf.mxu0
        %v3639 = vpop.f32.mrf.mxu0
        %v3640 = vadd.f32 0.0, %v3639
        %v3641 = vpop.f32.mrf.mxu0
        %3642 = vmatprep.mubr.bf16.mxu0 0
        %3643 = vmatmul.mubr.bf16.gmra.mxu0 %v3439
        %v3644 = vpop.f32.mrf.mxu0
        %v3645 = vadd.f32 0.0, %v3644
        %v3646 = vpop.f32.mrf.mxu0
        %v3647 = vpop.f32.mrf.mxu0
        %v3648 = vadd.f32 0.0, %v3647
        %v3649 = vpop.f32.mrf.mxu0
        %3650 = vmatprep.mubr.bf16.mxu0 0
        %3651 = vmatmul.mubr.bf16.gmra.mxu0 %v3440
        %v3652 = vpop.f32.mrf.mxu0
        %v3653 = vadd.f32 0.0, %v3652
        %v3654 = vpop.f32.mrf.mxu0
        %v3655 = vpop.f32.mrf.mxu0
        %v3656 = vadd.f32 0.0, %v3655
        %v3657 = vpop.f32.mrf.mxu0
        %3658 = vmatprep.mubr.bf16.mxu0 0
        %3659 = vmatmul.mubr.bf16.gmra.mxu0 %v3441
        %v3660 = vpop.f32.mrf.mxu0
        %v3661 = vadd.f32 0.0, %v3660
        %v3662 = vpop.f32.mrf.mxu0
        %v3663 = vpop.f32.mrf.mxu0
        %v3664 = vadd.f32 0.0, %v3663
        %v3665 = vpop.f32.mrf.mxu0
        %3666 = vdwg.mxu0
        %v3683 = vunpack.c.l.b16 %v3410
        %v3684 = vunpack.c.l.b16 %v3411
        %v3685 = vunpack.c.l.b16 %v3412
        %v3686 = vunpack.c.l.b16 %v3413
        %v3687 = vunpack.c.l.b16 %v3414
        %v3688 = vunpack.c.l.b16 %v3415
        %v3689 = vunpack.c.l.b16 %v3416
        %v3690 = vunpack.c.l.b16 %v3417
        %v3691 = vunpack.c.l.b16 %v3418
        %v3692 = vunpack.c.l.b16 %v3419
        %v3693 = vunpack.c.l.b16 %v3420
        %v3694 = vunpack.c.l.b16 %v3421
        %v3695 = vunpack.c.l.b16 %v3422
        %v3696 = vunpack.c.l.b16 %v3423
        %v3697 = vunpack.c.l.b16 %v3424
        %v3698 = vunpack.c.l.b16 %v3425
        %v3699 = vpack.c.b16 %v3684, %v3683
        %v3700 = vpack.c.b16 %v3686, %v3685
        %v3701 = vpack.c.b16 %v3688, %v3687
        %v3702 = vpack.c.b16 %v3690, %v3689
        %v3703 = vpack.c.b16 %v3692, %v3691
        %v3704 = vpack.c.b16 %v3694, %v3693
        %v3705 = vpack.c.b16 %v3696, %v3695
        %v3706 = vpack.c.b16 %v3698, %v3697
        %3715 = vmatprep.subr.bf16.mxu0 0
        %3716 = vmatpush1.bf16.msra.mxu0 %v3706
        %3717 = vmatprep.subr.bf16.mxu0 0
        %3718 = vmatpush1.bf16.msra.mxu0 %v3705
        %3719 = vmatprep.subr.bf16.mxu0 0
        %3720 = vmatpush1.bf16.msra.mxu0 %v3704
        %3721 = vmatprep.subr.bf16.mxu0 0
        %3722 = vmatpush1.bf16.msra.mxu0 %v3703
        %3723 = vmatprep.subr.bf16.mxu0 0
        %3724 = vmatpush1.bf16.msra.mxu0 %v3702
        %3725 = vmatprep.subr.bf16.mxu0 0
        %3726 = vmatpush1.bf16.msra.mxu0 %v3701
        %3727 = vmatprep.subr.bf16.mxu0 0
        %3728 = vmatpush1.bf16.msra.mxu0 %v3700
        %3729 = vmatprep.subr.bf16.mxu0 0
        %3730 = vmatpush1.bf16.msra.mxu0 %v3699
        %3731 = vmatprep.subr.bf16.mxu0 0
        %3732 = vmatpush2.bf16.msra.mxu0 0
        %3733 = vmatprep.subr.bf16.mxu0 0
        %3734 = vmatpush2.bf16.msra.mxu0 0
        %3735 = vmatprep.subr.bf16.mxu0 0
        %3736 = vmatpush2.bf16.msra.mxu0 0
        %3737 = vmatprep.subr.bf16.mxu0 0
        %3738 = vmatpush2.bf16.msra.mxu0 0
        %3739 = vmatprep.subr.bf16.mxu0 0
        %3740 = vmatpush2.bf16.msra.mxu0 0
        %3741 = vmatprep.subr.bf16.mxu0 0
        %3742 = vmatpush2.bf16.msra.mxu0 0
        %3743 = vmatprep.subr.bf16.mxu0 0
        %3744 = vmatpush2.bf16.msra.mxu0 0
        %3745 = vmatprep.subr.bf16.mxu0 0
        %3746 = vmatpush2.bf16.msra.mxu0 0
        %3747 = vmatprep.mubr.bf16.mxu0 0
        %3748 = vmatmul.mubr.bf16.gmra.mxu0 %v3394
        %v3749 = vpop.f32.mrf.mxu0
        %v3750 = vadd.f32 %v3541, %v3749
        %v3751 = vpop.f32.mrf.mxu0
        %v3752 = vpop.f32.mrf.mxu0
        %v3753 = vadd.f32 %v3544, %v3752
        %v3754 = vpop.f32.mrf.mxu0
        %3755 = vmatprep.mubr.bf16.mxu0 0
        %3756 = vmatmul.mubr.bf16.gmra.mxu0 %v3395
        %v3757 = vpop.f32.mrf.mxu0
        %v3758 = vadd.f32 %v3549, %v3757
        %v3759 = vpop.f32.mrf.mxu0
        %v3760 = vpop.f32.mrf.mxu0
        %v3761 = vadd.f32 %v3552, %v3760
        %v3762 = vpop.f32.mrf.mxu0
        %3763 = vmatprep.mubr.bf16.mxu0 0
        %3764 = vmatmul.mubr.bf16.gmra.mxu0 %v3396
        %v3765 = vpop.f32.mrf.mxu0
        %v3766 = vadd.f32 %v3557, %v3765
        %v3767 = vpop.f32.mrf.mxu0
        %v3768 = vpop.f32.mrf.mxu0
        %v3769 = vadd.f32 %v3560, %v3768
        %v3770 = vpop.f32.mrf.mxu0
        %3771 = vmatprep.mubr.bf16.mxu0 0
        %3772 = vmatmul.mubr.bf16.gmra.mxu0 %v3397
        %v3773 = vpop.f32.mrf.mxu0
        %v3774 = vadd.f32 %v3565, %v3773
        %v3775 = vpop.f32.mrf.mxu0
        %v3776 = vpop.f32.mrf.mxu0
        %v3777 = vadd.f32 %v3568, %v3776
        %v3778 = vpop.f32.mrf.mxu0
        %3779 = vmatprep.mubr.bf16.mxu0 0
        %3780 = vmatmul.mubr.bf16.gmra.mxu0 %v3398
        %v3781 = vpop.f32.mrf.mxu0
        %v3782 = vadd.f32 %v3573, %v3781
        %v3783 = vpop.f32.mrf.mxu0
        %v3784 = vpop.f32.mrf.mxu0
        %v3785 = vadd.f32 %v3576, %v3784
        %v3786 = vpop.f32.mrf.mxu0
        %3787 = vmatprep.mubr.bf16.mxu0 0
        %3788 = vmatmul.mubr.bf16.gmra.mxu0 %v3399
        %v3789 = vpop.f32.mrf.mxu0
        %v3790 = vadd.f32 %v3581, %v3789
        %v3791 = vpop.f32.mrf.mxu0
        %v3792 = vpop.f32.mrf.mxu0
        %v3793 = vadd.f32 %v3584, %v3792
        %v3794 = vpop.f32.mrf.mxu0
        %3795 = vmatprep.mubr.bf16.mxu0 0
        %3796 = vmatmul.mubr.bf16.gmra.mxu0 %v3400
        %v3797 = vpop.f32.mrf.mxu0
        %v3798 = vadd.f32 %v3589, %v3797
        %v3799 = vpop.f32.mrf.mxu0
        %v3800 = vpop.f32.mrf.mxu0
        %v3801 = vadd.f32 %v3592, %v3800
        %v3802 = vpop.f32.mrf.mxu0
        %3803 = vmatprep.mubr.bf16.mxu0 0
        %3804 = vmatmul.mubr.bf16.gmra.mxu0 %v3401
        %v3805 = vpop.f32.mrf.mxu0
        %v3806 = vadd.f32 %v3597, %v3805
        %v3807 = vpop.f32.mrf.mxu0
        %v3808 = vpop.f32.mrf.mxu0
        %v3809 = vadd.f32 %v3600, %v3808
        %v3810 = vpop.f32.mrf.mxu0
        %3811 = vmatprep.mubr.bf16.mxu0 0
        %3812 = vmatmul.mubr.bf16.gmra.mxu0 %v3402
        %v3813 = vpop.f32.mrf.mxu0
        %v3814 = vadd.f32 %v3605, %v3813
        %v3815 = vpop.f32.mrf.mxu0
        %v3816 = vpop.f32.mrf.mxu0
        %v3817 = vadd.f32 %v3608, %v3816
        %v3818 = vpop.f32.mrf.mxu0
        %3819 = vmatprep.mubr.bf16.mxu0 0
        %3820 = vmatmul.mubr.bf16.gmra.mxu0 %v3403
        %v3821 = vpop.f32.mrf.mxu0
        %v3822 = vadd.f32 %v3613, %v3821
        %v3823 = vpop.f32.mrf.mxu0
        %v3824 = vpop.f32.mrf.mxu0
        %v3825 = vadd.f32 %v3616, %v3824
        %v3826 = vpop.f32.mrf.mxu0
        %3827 = vmatprep.mubr.bf16.mxu0 0
        %3828 = vmatmul.mubr.bf16.gmra.mxu0 %v3404
        %v3829 = vpop.f32.mrf.mxu0
        %v3830 = vadd.f32 %v3621, %v3829
        %v3831 = vpop.f32.mrf.mxu0
        %v3832 = vpop.f32.mrf.mxu0
        %v3833 = vadd.f32 %v3624, %v3832
        %v3834 = vpop.f32.mrf.mxu0
        %3835 = vmatprep.mubr.bf16.mxu0 0
        %3836 = vmatmul.mubr.bf16.gmra.mxu0 %v3405
        %v3837 = vpop.f32.mrf.mxu0
        %v3838 = vadd.f32 %v3629, %v3837
        %v3839 = vpop.f32.mrf.mxu0
        %v3840 = vpop.f32.mrf.mxu0
        %v3841 = vadd.f32 %v3632, %v3840
        %v3842 = vpop.f32.mrf.mxu0
        %3843 = vmatprep.mubr.bf16.mxu0 0
        %3844 = vmatmul.mubr.bf16.gmra.mxu0 %v3406
        %v3845 = vpop.f32.mrf.mxu0
        %v3846 = vadd.f32 %v3637, %v3845
        %v3847 = vpop.f32.mrf.mxu0
        %v3848 = vpop.f32.mrf.mxu0
        %v3849 = vadd.f32 %v3640, %v3848
        %v3850 = vpop.f32.mrf.mxu0
        %3851 = vmatprep.mubr.bf16.mxu0 0
        %3852 = vmatmul.mubr.bf16.gmra.mxu0 %v3407
        %v3853 = vpop.f32.mrf.mxu0
        %v3854 = vadd.f32 %v3645, %v3853
        %v3855 = vpop.f32.mrf.mxu0
        %v3856 = vpop.f32.mrf.mxu0
        %v3857 = vadd.f32 %v3648, %v3856
        %v3858 = vpop.f32.mrf.mxu0
        %3859 = vmatprep.mubr.bf16.mxu0 0
        %3860 = vmatmul.mubr.bf16.gmra.mxu0 %v3408
        %v3861 = vpop.f32.mrf.mxu0
        %v3862 = vadd.f32 %v3653, %v3861
        %v3863 = vpop.f32.mrf.mxu0
        %v3864 = vpop.f32.mrf.mxu0
        %v3865 = vadd.f32 %v3656, %v3864
        %v3866 = vpop.f32.mrf.mxu0
        %3867 = vmatprep.mubr.bf16.mxu0 0
        %3868 = vmatmul.mubr.bf16.gmra.mxu0 %v3409
        %v3869 = vpop.f32.mrf.mxu0
        %v3870 = vadd.f32 %v3661, %v3869
        %v3871 = vpop.f32.mrf.mxu0
        %v3872 = vpop.f32.mrf.mxu0
        %v3873 = vadd.f32 %v3664, %v3872
        %v3874 = vpop.f32.mrf.mxu0
        %3875 = vdwg.mxu0
        %v3876 = vpack.c.bf16 %v3363, %v3362
        %v3877 = vpack.c.bf16 %v3365, %v3364
        %v3878 = vpack.c.bf16 %v3367, %v3366
        %v3879 = vpack.c.bf16 %v3369, %v3368
        %v3880 = vpack.c.bf16 %v3371, %v3370
        %v3881 = vpack.c.bf16 %v3373, %v3372
        %v3882 = vpack.c.bf16 %v3375, %v3374
        %v3883 = vpack.c.bf16 %v3377, %v3376
        %v3884 = vpack.c.bf16 %v3379, %v3378
        %v3885 = vpack.c.bf16 %v3381, %v3380
        %v3886 = vpack.c.bf16 %v3383, %v3382
        %v3887 = vpack.c.bf16 %v3385, %v3384
        %v3888 = vpack.c.bf16 %v3387, %v3386
        %v3889 = vpack.c.bf16 %v3389, %v3388
        %v3890 = vpack.c.bf16 %v3391, %v3390
        %v3891 = vpack.c.bf16 %v3393, %v3392
        %v3892 = vld [vmem:[#allocation21] sm:$0xf]
        %v3893 = vld [vmem:[#allocation21 + $0x4] sm:$0xf]
        %v3894 = vld [vmem:[#allocation21 + $0x8] sm:$0xf]
        %v3895 = vld [vmem:[#allocation21 + $0xc] sm:$0xf]
        %v3896 = vld [vmem:[#allocation21 + $0x10] sm:$0xf]
        %v3897 = vld [vmem:[#allocation21 + $0x14] sm:$0xf]
        %v3898 = vld [vmem:[#allocation21 + $0x18] sm:$0xf]
        %v3899 = vld [vmem:[#allocation21 + $0x1c] sm:$0xf]
        %v3900 = vld [vmem:[#allocation21 + $0x20] sm:$0xf]
        %v3901 = vld [vmem:[#allocation21 + $0x24] sm:$0xf]
        %v3902 = vld [vmem:[#allocation21 + $0x28] sm:$0xf]
        %v3903 = vld [vmem:[#allocation21 + $0x2c] sm:$0xf]
        %v3904 = vld [vmem:[#allocation21 + $0x30] sm:$0xf]
        %v3905 = vld [vmem:[#allocation21 + $0x34] sm:$0xf]
        %v3906 = vld [vmem:[#allocation21 + $0x38] sm:$0xf]
        %v3907 = vld [vmem:[#allocation21 + $0x3c] sm:$0xf]
        %v3924 = vunpack.c.l.b16 %v3892
        %v3925 = vunpack.c.l.b16 %v3893
        %v3926 = vunpack.c.l.b16 %v3894
        %v3927 = vunpack.c.l.b16 %v3895
        %v3928 = vunpack.c.l.b16 %v3896
        %v3929 = vunpack.c.l.b16 %v3897
        %v3930 = vunpack.c.l.b16 %v3898
        %v3931 = vunpack.c.l.b16 %v3899
        %v3932 = vunpack.c.l.b16 %v3900
        %v3933 = vunpack.c.l.b16 %v3901
        %v3934 = vunpack.c.l.b16 %v3902
        %v3935 = vunpack.c.l.b16 %v3903
        %v3936 = vunpack.c.l.b16 %v3904
        %v3937 = vunpack.c.l.b16 %v3905
        %v3938 = vunpack.c.l.b16 %v3906
        %v3939 = vunpack.c.l.b16 %v3907
        %v3940 = vpack.c.b16 %v3925, %v3924
        %v3941 = vpack.c.b16 %v3927, %v3926
        %v3942 = vpack.c.b16 %v3929, %v3928
        %v3943 = vpack.c.b16 %v3931, %v3930
        %v3944 = vpack.c.b16 %v3933, %v3932
        %v3945 = vpack.c.b16 %v3935, %v3934
        %v3946 = vpack.c.b16 %v3937, %v3936
        %v3947 = vpack.c.b16 %v3939, %v3938
        %3956 = vmatprep.subr.bf16.mxu0 0
        %3957 = vmatpush1.bf16.msra.mxu0 %v3947
        %3958 = vmatprep.subr.bf16.mxu0 0
        %3959 = vmatpush1.bf16.msra.mxu0 %v3946
        %3960 = vmatprep.subr.bf16.mxu0 0
        %3961 = vmatpush1.bf16.msra.mxu0 %v3945
        %3962 = vmatprep.subr.bf16.mxu0 0
        %3963 = vmatpush1.bf16.msra.mxu0 %v3944
        %3964 = vmatprep.subr.bf16.mxu0 0
        %3965 = vmatpush1.bf16.msra.mxu0 %v3943
        %3966 = vmatprep.subr.bf16.mxu0 0
        %3967 = vmatpush1.bf16.msra.mxu0 %v3942
        %3968 = vmatprep.subr.bf16.mxu0 0
        %3969 = vmatpush1.bf16.msra.mxu0 %v3941
        %3970 = vmatprep.subr.bf16.mxu0 0
        %3971 = vmatpush1.bf16.msra.mxu0 %v3940
        %3972 = vmatprep.subr.bf16.mxu0 0
        %3973 = vmatpush2.bf16.msra.mxu0 0
        %3974 = vmatprep.subr.bf16.mxu0 0
        %3975 = vmatpush2.bf16.msra.mxu0 0
        %3976 = vmatprep.subr.bf16.mxu0 0
        %3977 = vmatpush2.bf16.msra.mxu0 0
        %3978 = vmatprep.subr.bf16.mxu0 0
        %3979 = vmatpush2.bf16.msra.mxu0 0
        %3980 = vmatprep.subr.bf16.mxu0 0
        %3981 = vmatpush2.bf16.msra.mxu0 0
        %3982 = vmatprep.subr.bf16.mxu0 0
        %3983 = vmatpush2.bf16.msra.mxu0 0
        %3984 = vmatprep.subr.bf16.mxu0 0
        %3985 = vmatpush2.bf16.msra.mxu0 0
        %3986 = vmatprep.subr.bf16.mxu0 0
        %3987 = vmatpush2.bf16.msra.mxu0 0
        %3988 = vmatprep.mubr.bf16.mxu0 0
        %3989 = vmatmul.mubr.bf16.gmra.mxu0 %v3876
        %v3990 = vpop.f32.mrf.mxu0
        %v3991 = vadd.f32 0.0, %v3990
        %v3992 = vpop.f32.mrf.mxu0
        %v3993 = vpop.f32.mrf.mxu0
        %v3994 = vadd.f32 0.0, %v3993
        %v3995 = vpop.f32.mrf.mxu0
        %3996 = vmatprep.mubr.bf16.mxu0 0
        %3997 = vmatmul.mubr.bf16.gmra.mxu0 %v3877
        %v3998 = vpop.f32.mrf.mxu0
        %v3999 = vadd.f32 0.0, %v3998
        %v4000 = vpop.f32.mrf.mxu0
        %v4001 = vpop.f32.mrf.mxu0
        %v4002 = vadd.f32 0.0, %v4001
        %v4003 = vpop.f32.mrf.mxu0
        %4004 = vmatprep.mubr.bf16.mxu0 0
        %4005 = vmatmul.mubr.bf16.gmra.mxu0 %v3878
        %v4006 = vpop.f32.mrf.mxu0
        %v4007 = vadd.f32 0.0, %v4006
        %v4008 = vpop.f32.mrf.mxu0
        %v4009 = vpop.f32.mrf.mxu0
        %v4010 = vadd.f32 0.0, %v4009
        %v4011 = vpop.f32.mrf.mxu0
        %4012 = vmatprep.mubr.bf16.mxu0 0
        %4013 = vmatmul.mubr.bf16.gmra.mxu0 %v3879
        %v4014 = vpop.f32.mrf.mxu0
        %v4015 = vadd.f32 0.0, %v4014
        %v4016 = vpop.f32.mrf.mxu0
        %v4017 = vpop.f32.mrf.mxu0
        %v4018 = vadd.f32 0.0, %v4017
        %v4019 = vpop.f32.mrf.mxu0
        %4020 = vmatprep.mubr.bf16.mxu0 0
        %4021 = vmatmul.mubr.bf16.gmra.mxu0 %v3880
        %v4022 = vpop.f32.mrf.mxu0
        %v4023 = vadd.f32 0.0, %v4022
        %v4024 = vpop.f32.mrf.mxu0
        %v4025 = vpop.f32.mrf.mxu0
        %v4026 = vadd.f32 0.0, %v4025
        %v4027 = vpop.f32.mrf.mxu0
        %4028 = vmatprep.mubr.bf16.mxu0 0
        %4029 = vmatmul.mubr.bf16.gmra.mxu0 %v3881
        %v4030 = vpop.f32.mrf.mxu0
        %v4031 = vadd.f32 0.0, %v4030
        %v4032 = vpop.f32.mrf.mxu0
        %v4033 = vpop.f32.mrf.mxu0
        %v4034 = vadd.f32 0.0, %v4033
        %v4035 = vpop.f32.mrf.mxu0
        %4036 = vmatprep.mubr.bf16.mxu0 0
        %4037 = vmatmul.mubr.bf16.gmra.mxu0 %v3882
        %v4038 = vpop.f32.mrf.mxu0
        %v4039 = vadd.f32 0.0, %v4038
        %v4040 = vpop.f32.mrf.mxu0
        %v4041 = vpop.f32.mrf.mxu0
        %v4042 = vadd.f32 0.0, %v4041
        %v4043 = vpop.f32.mrf.mxu0
        %4044 = vmatprep.mubr.bf16.mxu0 0
        %4045 = vmatmul.mubr.bf16.gmra.mxu0 %v3883
        %v4046 = vpop.f32.mrf.mxu0
        %v4047 = vadd.f32 0.0, %v4046
        %v4048 = vpop.f32.mrf.mxu0
        %v4049 = vpop.f32.mrf.mxu0
        %v4050 = vadd.f32 0.0, %v4049
        %v4051 = vpop.f32.mrf.mxu0
        %4052 = vmatprep.mubr.bf16.mxu0 0
        %4053 = vmatmul.mubr.bf16.gmra.mxu0 %v3884
        %v4054 = vpop.f32.mrf.mxu0
        %v4055 = vadd.f32 0.0, %v4054
        %v4056 = vpop.f32.mrf.mxu0
        %v4057 = vpop.f32.mrf.mxu0
        %v4058 = vadd.f32 0.0, %v4057
        %v4059 = vpop.f32.mrf.mxu0
        %4060 = vmatprep.mubr.bf16.mxu0 0
        %4061 = vmatmul.mubr.bf16.gmra.mxu0 %v3885
        %v4062 = vpop.f32.mrf.mxu0
        %v4063 = vadd.f32 0.0, %v4062
        %v4064 = vpop.f32.mrf.mxu0
        %v4065 = vpop.f32.mrf.mxu0
        %v4066 = vadd.f32 0.0, %v4065
        %v4067 = vpop.f32.mrf.mxu0
        %4068 = vmatprep.mubr.bf16.mxu0 0
        %4069 = vmatmul.mubr.bf16.gmra.mxu0 %v3886
        %v4070 = vpop.f32.mrf.mxu0
        %v4071 = vadd.f32 0.0, %v4070
        %v4072 = vpop.f32.mrf.mxu0
        %v4073 = vpop.f32.mrf.mxu0
        %v4074 = vadd.f32 0.0, %v4073
        %v4075 = vpop.f32.mrf.mxu0
        %4076 = vmatprep.mubr.bf16.mxu0 0
        %4077 = vmatmul.mubr.bf16.gmra.mxu0 %v3887
        %v4078 = vpop.f32.mrf.mxu0
        %v4079 = vadd.f32 0.0, %v4078
        %v4080 = vpop.f32.mrf.mxu0
        %v4081 = vpop.f32.mrf.mxu0
        %v4082 = vadd.f32 0.0, %v4081
        %v4083 = vpop.f32.mrf.mxu0
        %4084 = vmatprep.mubr.bf16.mxu0 0
        %4085 = vmatmul.mubr.bf16.gmra.mxu0 %v3888
        %v4086 = vpop.f32.mrf.mxu0
        %v4087 = vadd.f32 0.0, %v4086
        %v4088 = vpop.f32.mrf.mxu0
        %v4089 = vpop.f32.mrf.mxu0
        %v4090 = vadd.f32 0.0, %v4089
        %v4091 = vpop.f32.mrf.mxu0
        %4092 = vmatprep.mubr.bf16.mxu0 0
        %4093 = vmatmul.mubr.bf16.gmra.mxu0 %v3889
        %v4094 = vpop.f32.mrf.mxu0
        %v4095 = vadd.f32 0.0, %v4094
        %v4096 = vpop.f32.mrf.mxu0
        %v4097 = vpop.f32.mrf.mxu0
        %v4098 = vadd.f32 0.0, %v4097
        %v4099 = vpop.f32.mrf.mxu0
        %4100 = vmatprep.mubr.bf16.mxu0 0
        %4101 = vmatmul.mubr.bf16.gmra.mxu0 %v3890
        %v4102 = vpop.f32.mrf.mxu0
        %v4103 = vadd.f32 0.0, %v4102
        %v4104 = vpop.f32.mrf.mxu0
        %v4105 = vpop.f32.mrf.mxu0
        %v4106 = vadd.f32 0.0, %v4105
        %v4107 = vpop.f32.mrf.mxu0
        %4108 = vmatprep.mubr.bf16.mxu0 0
        %4109 = vmatmul.mubr.bf16.gmra.mxu0 %v3891
        %v4110 = vpop.f32.mrf.mxu0
        %v4111 = vadd.f32 0.0, %v4110
        %v4112 = vpop.f32.mrf.mxu0
        %v4113 = vpop.f32.mrf.mxu0
        %v4114 = vadd.f32 0.0, %v4113
        %v4115 = vpop.f32.mrf.mxu0
        %4116 = vdwg.mxu0
        %v4117 = vadd.f32 %v3750, %v3991
        %v4118 = vadd.f32 %v3753, %v3994
        %v4119 = vadd.f32 %v3758, %v3999
        %v4120 = vadd.f32 %v3761, %v4002
        %v4121 = vadd.f32 %v3766, %v4007
        %v4122 = vadd.f32 %v3769, %v4010
        %v4123 = vadd.f32 %v3774, %v4015
        %v4124 = vadd.f32 %v3777, %v4018
        %v4125 = vadd.f32 %v3782, %v4023
        %v4126 = vadd.f32 %v3785, %v4026
        %v4127 = vadd.f32 %v3790, %v4031
        %v4128 = vadd.f32 %v3793, %v4034
        %v4129 = vadd.f32 %v3798, %v4039
        %v4130 = vadd.f32 %v3801, %v4042
        %v4131 = vadd.f32 %v3806, %v4047
        %v4132 = vadd.f32 %v3809, %v4050
        %v4133 = vadd.f32 %v3814, %v4055
        %v4134 = vadd.f32 %v3817, %v4058
        %v4135 = vadd.f32 %v3822, %v4063
        %v4136 = vadd.f32 %v3825, %v4066
        %v4137 = vadd.f32 %v3830, %v4071
        %v4138 = vadd.f32 %v3833, %v4074
        %v4139 = vadd.f32 %v3838, %v4079
        %v4140 = vadd.f32 %v3841, %v4082
        %v4141 = vadd.f32 %v3846, %v4087
        %v4142 = vadd.f32 %v3849, %v4090
        %v4143 = vadd.f32 %v3854, %v4095
        %v4144 = vadd.f32 %v3857, %v4098
        %v4145 = vadd.f32 %v3862, %v4103
        %v4146 = vadd.f32 %v3865, %v4106
        %v4147 = vadd.f32 %v3870, %v4111
        %v4148 = vadd.f32 %v3873, %v4114
        %v4149 = vld [vmem:[%s17] sm:$0x1]
        %v4151 = vlaneseq
        %v4152 = vshrl.u32 %v4151, 7
        %v4153 = vsub.s32 0, %v4152
        %v4154 = vrot.slane %v4149, %v4153
        %v4156 = vadd.f32 %v4117, %v4154
        %v4157 = vadd.f32 %v4118, %v4154
        %v4158 = vadd.f32 %v4119, %v4154
        %v4159 = vadd.f32 %v4120, %v4154
        %v4160 = vadd.f32 %v4121, %v4154
        %v4161 = vadd.f32 %v4122, %v4154
        %v4162 = vadd.f32 %v4123, %v4154
        %v4163 = vadd.f32 %v4124, %v4154
        %v4164 = vadd.f32 %v4125, %v4154
        %v4165 = vadd.f32 %v4126, %v4154
        %v4166 = vadd.f32 %v4127, %v4154
        %v4167 = vadd.f32 %v4128, %v4154
        %v4168 = vadd.f32 %v4129, %v4154
        %v4169 = vadd.f32 %v4130, %v4154
        %v4170 = vadd.f32 %v4131, %v4154
        %v4171 = vadd.f32 %v4132, %v4154
        %v4172 = vadd.f32 %v4133, %v4154
        %v4173 = vadd.f32 %v4134, %v4154
        %v4174 = vadd.f32 %v4135, %v4154
        %v4175 = vadd.f32 %v4136, %v4154
        %v4176 = vadd.f32 %v4137, %v4154
        %v4177 = vadd.f32 %v4138, %v4154
        %v4178 = vadd.f32 %v4139, %v4154
        %v4179 = vadd.f32 %v4140, %v4154
        %v4180 = vadd.f32 %v4141, %v4154
        %v4181 = vadd.f32 %v4142, %v4154
        %v4182 = vadd.f32 %v4143, %v4154
        %v4183 = vadd.f32 %v4144, %v4154
        %v4184 = vadd.f32 %v4145, %v4154
        %v4185 = vadd.f32 %v4146, %v4154
        %v4186 = vadd.f32 %v4147, %v4154
        %v4187 = vadd.f32 %v4148, %v4154
        %vm4188 = vcmp.gt.f32.partialorder %v4156, 0.0
        %vm4189 = vcmp.gt.f32.partialorder %v4157, 0.0
        %vm4190 = vcmp.gt.f32.partialorder %v4158, 0.0
        %vm4191 = vcmp.gt.f32.partialorder %v4159, 0.0
        %vm4192 = vcmp.gt.f32.partialorder %v4160, 0.0
        %vm4193 = vcmp.gt.f32.partialorder %v4161, 0.0
        %vm4194 = vcmp.gt.f32.partialorder %v4162, 0.0
        %vm4195 = vcmp.gt.f32.partialorder %v4163, 0.0
        %vm4196 = vcmp.gt.f32.partialorder %v4164, 0.0
        %vm4197 = vcmp.gt.f32.partialorder %v4165, 0.0
        %vm4198 = vcmp.gt.f32.partialorder %v4166, 0.0
        %vm4199 = vcmp.gt.f32.partialorder %v4167, 0.0
        %vm4200 = vcmp.gt.f32.partialorder %v4168, 0.0
        %vm4201 = vcmp.gt.f32.partialorder %v4169, 0.0
        %vm4202 = vcmp.gt.f32.partialorder %v4170, 0.0
        %vm4203 = vcmp.gt.f32.partialorder %v4171, 0.0
        %vm4204 = vcmp.gt.f32.partialorder %v4172, 0.0
        %vm4205 = vcmp.gt.f32.partialorder %v4173, 0.0
        %vm4206 = vcmp.gt.f32.partialorder %v4174, 0.0
        %vm4207 = vcmp.gt.f32.partialorder %v4175, 0.0
        %vm4208 = vcmp.gt.f32.partialorder %v4176, 0.0
        %vm4209 = vcmp.gt.f32.partialorder %v4177, 0.0
        %vm4210 = vcmp.gt.f32.partialorder %v4178, 0.0
        %vm4211 = vcmp.gt.f32.partialorder %v4179, 0.0
        %vm4212 = vcmp.gt.f32.partialorder %v4180, 0.0
        %vm4213 = vcmp.gt.f32.partialorder %v4181, 0.0
        %vm4214 = vcmp.gt.f32.partialorder %v4182, 0.0
        %vm4215 = vcmp.gt.f32.partialorder %v4183, 0.0
        %vm4216 = vcmp.gt.f32.partialorder %v4184, 0.0
        %vm4217 = vcmp.gt.f32.partialorder %v4185, 0.0
        %vm4218 = vcmp.gt.f32.partialorder %v4186, 0.0
        %vm4219 = vcmp.gt.f32.partialorder %v4187, 0.0
        %v4220 = vmul.f32 %v4156, 0.1
        %v4221 = vmul.f32 %v4157, 0.1
        %v4222 = vmul.f32 %v4158, 0.1
        %v4223 = vmul.f32 %v4159, 0.1
        %v4224 = vmul.f32 %v4160, 0.1
        %v4225 = vmul.f32 %v4161, 0.1
        %v4226 = vmul.f32 %v4162, 0.1
        %v4227 = vmul.f32 %v4163, 0.1
        %v4228 = vmul.f32 %v4164, 0.1
        %v4229 = vmul.f32 %v4165, 0.1
        %v4230 = vmul.f32 %v4166, 0.1
        %v4231 = vmul.f32 %v4167, 0.1
        %v4232 = vmul.f32 %v4168, 0.1
        %v4233 = vmul.f32 %v4169, 0.1
        %v4234 = vmul.f32 %v4170, 0.1
        %v4235 = vmul.f32 %v4171, 0.1
        %v4236 = vmul.f32 %v4172, 0.1
        %v4237 = vmul.f32 %v4173, 0.1
        %v4238 = vmul.f32 %v4174, 0.1
        %v4239 = vmul.f32 %v4175, 0.1
        %v4240 = vmul.f32 %v4176, 0.1
        %v4241 = vmul.f32 %v4177, 0.1
        %v4242 = vmul.f32 %v4178, 0.1
        %v4243 = vmul.f32 %v4179, 0.1
        %v4244 = vmul.f32 %v4180, 0.1
        %v4245 = vmul.f32 %v4181, 0.1
        %v4246 = vmul.f32 %v4182, 0.1
        %v4247 = vmul.f32 %v4183, 0.1
        %v4248 = vmul.f32 %v4184, 0.1
        %v4249 = vmul.f32 %v4185, 0.1
        %v4250 = vmul.f32 %v4186, 0.1
        %v4251 = vmul.f32 %v4187, 0.1
        %v4252 = vsel %vm4188, %v4156, %v4220
        %v4253 = vsel %vm4189, %v4157, %v4221
        %v4254 = vsel %vm4190, %v4158, %v4222
        %v4255 = vsel %vm4191, %v4159, %v4223
        %v4256 = vsel %vm4192, %v4160, %v4224
        %v4257 = vsel %vm4193, %v4161, %v4225
        %v4258 = vsel %vm4194, %v4162, %v4226
        %v4259 = vsel %vm4195, %v4163, %v4227
        %v4260 = vsel %vm4196, %v4164, %v4228
        %v4261 = vsel %vm4197, %v4165, %v4229
        %v4262 = vsel %vm4198, %v4166, %v4230
        %v4263 = vsel %vm4199, %v4167, %v4231
        %v4264 = vsel %vm4200, %v4168, %v4232
        %v4265 = vsel %vm4201, %v4169, %v4233
        %v4266 = vsel %vm4202, %v4170, %v4234
        %v4267 = vsel %vm4203, %v4171, %v4235
        %v4268 = vsel %vm4204, %v4172, %v4236
        %v4269 = vsel %vm4205, %v4173, %v4237
        %v4270 = vsel %vm4206, %v4174, %v4238
        %v4271 = vsel %vm4207, %v4175, %v4239
        %v4272 = vsel %vm4208, %v4176, %v4240
        %v4273 = vsel %vm4209, %v4177, %v4241
        %v4274 = vsel %vm4210, %v4178, %v4242
        %v4275 = vsel %vm4211, %v4179, %v4243
        %v4276 = vsel %vm4212, %v4180, %v4244
        %v4277 = vsel %vm4213, %v4181, %v4245
        %v4278 = vsel %vm4214, %v4182, %v4246
        %v4279 = vsel %vm4215, %v4183, %v4247
        %v4280 = vsel %vm4216, %v4184, %v4248
        %v4281 = vsel %vm4217, %v4185, %v4249
        %v4282 = vsel %vm4218, %v4186, %v4250
        %v4283 = vsel %vm4219, %v4187, %v4251
        %v4284 = vrot.slane %v4252, 7
        %v4285 = vrot.slane %v4253, 7
        %v4286 = vrot.slane %v4254, 7
        %v4287 = vrot.slane %v4255, 7
        %v4288 = vrot.slane %v4256, 7
        %v4289 = vrot.slane %v4257, 7
        %v4290 = vrot.slane %v4258, 7
        %v4291 = vrot.slane %v4259, 7
        %v4292 = vrot.slane %v4260, 7
        %v4293 = vrot.slane %v4261, 7
        %v4294 = vrot.slane %v4262, 7
        %v4295 = vrot.slane %v4263, 7
        %v4296 = vrot.slane %v4264, 7
        %v4297 = vrot.slane %v4265, 7
        %v4298 = vrot.slane %v4266, 7
        %v4299 = vrot.slane %v4267, 7
        %v4300 = vrot.slane %v4268, 7
        %v4301 = vrot.slane %v4269, 7
        %v4302 = vrot.slane %v4270, 7
        %v4303 = vrot.slane %v4271, 7
        %v4304 = vrot.slane %v4272, 7
        %v4305 = vrot.slane %v4273, 7
        %v4306 = vrot.slane %v4274, 7
        %v4307 = vrot.slane %v4275, 7
        %v4308 = vrot.slane %v4276, 7
        %v4309 = vrot.slane %v4277, 7
        %v4310 = vrot.slane %v4278, 7
        %v4311 = vrot.slane %v4279, 7
        %v4312 = vrot.slane %v4280, 7
        %v4313 = vrot.slane %v4281, 7
        %v4314 = vrot.slane %v4282, 7
        %v4315 = vrot.slane %v4283, 7
        %v4316 = vsel %vm1789, %v4314, %v4315
        %v4317 = vsel %vm1789, %v4313, %v4314
        %v4318 = vsel %vm1789, %v4312, %v4313
        %v4319 = vsel %vm1789, %v4311, %v4312
        %v4320 = vsel %vm1789, %v4310, %v4311
        %v4321 = vsel %vm1789, %v4309, %v4310
        %v4322 = vsel %vm1789, %v4308, %v4309
        %v4323 = vsel %vm1789, %v4307, %v4308
        %v4324 = vsel %vm1789, %v4306, %v4307
        %v4325 = vsel %vm1789, %v4305, %v4306
        %v4326 = vsel %vm1789, %v4304, %v4305
        %v4327 = vsel %vm1789, %v4303, %v4304
        %v4328 = vsel %vm1789, %v4302, %v4303
        %v4329 = vsel %vm1789, %v4301, %v4302
        %v4330 = vsel %vm1789, %v4300, %v4301
        %v4331 = vsel %vm1789, %v4299, %v4300
        %v4332 = vsel %vm1789, %v4298, %v4299
        %v4333 = vsel %vm1789, %v4297, %v4298
        %v4334 = vsel %vm1789, %v4296, %v4297
        %v4335 = vsel %vm1789, %v4295, %v4296
        %v4336 = vsel %vm1789, %v4294, %v4295
        %v4337 = vsel %vm1789, %v4293, %v4294
        %v4338 = vsel %vm1789, %v4292, %v4293
        %v4339 = vsel %vm1789, %v4291, %v4292
        %v4340 = vsel %vm1789, %v4290, %v4291
        %v4341 = vsel %vm1789, %v4289, %v4290
        %v4342 = vsel %vm1789, %v4288, %v4289
        %v4343 = vsel %vm1789, %v4287, %v4288
        %v4344 = vsel %vm1789, %v4286, %v4287
        %v4345 = vsel %vm1789, %v4285, %v4286
        %v4346 = vsel %vm1789, %v4284, %v4285
        %v4347 = vsel %vm1789, %v4315, %v4284
        %v4348 = vsel %vm3138, %v4347, 0.0
        %v4349 = vsel %vm3139, %v4346, 0.0
        %v4350 = vsel %vm3140, %v4345, 0.0
        %v4351 = vsel %vm3141, %v4344, 0.0
        %v4352 = vsel %vm3142, %v4343, 0.0
        %v4353 = vsel %vm3143, %v4342, 0.0
        %v4354 = vsel %vm3144, %v4341, 0.0
        %v4355 = vsel %vm3145, %v4340, 0.0
        %v4356 = vsel %vm3146, %v4339, 0.0
        %v4357 = vsel %vm3147, %v4338, 0.0
        %v4358 = vsel %vm3148, %v4337, 0.0
        %v4359 = vsel %vm3149, %v4336, 0.0
        %v4360 = vsel %vm3150, %v4335, 0.0
        %v4361 = vsel %vm3151, %v4334, 0.0
        %v4362 = vsel %vm3152, %v4333, 0.0
        %v4363 = vsel %vm3153, %v4332, 0.0
        %v4364 = vsel %vm3154, %v4331, 0.0
        %v4365 = vsel %vm3155, %v4330, 0.0
        %v4366 = vsel %vm3156, %v4329, 0.0
        %v4367 = vsel %vm3157, %v4328, 0.0
        %v4368 = vsel %vm3158, %v4327, 0.0
        %v4369 = vsel %vm3159, %v4326, 0.0
        %v4370 = vsel %vm3160, %v4325, 0.0
        %v4371 = vsel %vm3161, %v4324, 0.0
        %v4372 = vsel %vm3162, %v4323, 0.0
        %v4373 = vsel %vm3163, %v4322, 0.0
        %v4374 = vsel %vm3164, %v4321, 0.0
        %v4375 = vsel %vm3165, %v4320, 0.0
        %v4376 = vsel %vm3166, %v4319, 0.0
        %v4377 = vsel %vm3167, %v4318, 0.0
        %v4378 = vsel %vm3168, %v4317, 0.0
        %v4379 = vsel %vm3169, %v4316, 0.0
        %v4380 = vrot.slane %v4252, 1
        %v4381 = vrot.slane %v4253, 1
        %v4382 = vrot.slane %v4254, 1
        %v4383 = vrot.slane %v4255, 1
        %v4384 = vrot.slane %v4256, 1
        %v4385 = vrot.slane %v4257, 1
        %v4386 = vrot.slane %v4258, 1
        %v4387 = vrot.slane %v4259, 1
        %v4388 = vrot.slane %v4260, 1
        %v4389 = vrot.slane %v4261, 1
        %v4390 = vrot.slane %v4262, 1
        %v4391 = vrot.slane %v4263, 1
        %v4392 = vrot.slane %v4264, 1
        %v4393 = vrot.slane %v4265, 1
        %v4394 = vrot.slane %v4266, 1
        %v4395 = vrot.slane %v4267, 1
        %v4396 = vrot.slane %v4268, 1
        %v4397 = vrot.slane %v4269, 1
        %v4398 = vrot.slane %v4270, 1
        %v4399 = vrot.slane %v4271, 1
        %v4400 = vrot.slane %v4272, 1
        %v4401 = vrot.slane %v4273, 1
        %v4402 = vrot.slane %v4274, 1
        %v4403 = vrot.slane %v4275, 1
        %v4404 = vrot.slane %v4276, 1
        %v4405 = vrot.slane %v4277, 1
        %v4406 = vrot.slane %v4278, 1
        %v4407 = vrot.slane %v4279, 1
        %v4408 = vrot.slane %v4280, 1
        %v4409 = vrot.slane %v4281, 1
        %v4410 = vrot.slane %v4282, 1
        %v4411 = vrot.slane %v4283, 1
        %v4412 = vsel %vm1854, %v4410, %v4411
        %v4413 = vsel %vm1854, %v4409, %v4410
        %v4414 = vsel %vm1854, %v4408, %v4409
        %v4415 = vsel %vm1854, %v4407, %v4408
        %v4416 = vsel %vm1854, %v4406, %v4407
        %v4417 = vsel %vm1854, %v4405, %v4406
        %v4418 = vsel %vm1854, %v4404, %v4405
        %v4419 = vsel %vm1854, %v4403, %v4404
        %v4420 = vsel %vm1854, %v4402, %v4403
        %v4421 = vsel %vm1854, %v4401, %v4402
        %v4422 = vsel %vm1854, %v4400, %v4401
        %v4423 = vsel %vm1854, %v4399, %v4400
        %v4424 = vsel %vm1854, %v4398, %v4399
        %v4425 = vsel %vm1854, %v4397, %v4398
        %v4426 = vsel %vm1854, %v4396, %v4397
        %v4427 = vsel %vm1854, %v4395, %v4396
        %v4428 = vsel %vm1854, %v4394, %v4395
        %v4429 = vsel %vm1854, %v4393, %v4394
        %v4430 = vsel %vm1854, %v4392, %v4393
        %v4431 = vsel %vm1854, %v4391, %v4392
        %v4432 = vsel %vm1854, %v4390, %v4391
        %v4433 = vsel %vm1854, %v4389, %v4390
        %v4434 = vsel %vm1854, %v4388, %v4389
        %v4435 = vsel %vm1854, %v4387, %v4388
        %v4436 = vsel %vm1854, %v4386, %v4387
        %v4437 = vsel %vm1854, %v4385, %v4386
        %v4438 = vsel %vm1854, %v4384, %v4385
        %v4439 = vsel %vm1854, %v4383, %v4384
        %v4440 = vsel %vm1854, %v4382, %v4383
        %v4441 = vsel %vm1854, %v4381, %v4382
        %v4442 = vsel %vm1854, %v4380, %v4381
        %v4443 = vsel %vm1854, %v4411, %v4380
        %v4444 = vsel %vm3266, %v4442, 0.0
        %v4445 = vsel %vm3267, %v4441, 0.0
        %v4446 = vsel %vm3268, %v4440, 0.0
        %v4447 = vsel %vm3269, %v4439, 0.0
        %v4448 = vsel %vm3270, %v4438, 0.0
        %v4449 = vsel %vm3271, %v4437, 0.0
        %v4450 = vsel %vm3272, %v4436, 0.0
        %v4451 = vsel %vm3273, %v4435, 0.0
        %v4452 = vsel %vm3274, %v4434, 0.0
        %v4453 = vsel %vm3275, %v4433, 0.0
        %v4454 = vsel %vm3276, %v4432, 0.0
        %v4455 = vsel %vm3277, %v4431, 0.0
        %v4456 = vsel %vm3278, %v4430, 0.0
        %v4457 = vsel %vm3279, %v4429, 0.0
        %v4458 = vsel %vm3280, %v4428, 0.0
        %v4459 = vsel %vm3281, %v4427, 0.0
        %v4460 = vsel %vm3282, %v4426, 0.0
        %v4461 = vsel %vm3283, %v4425, 0.0
        %v4462 = vsel %vm3284, %v4424, 0.0
        %v4463 = vsel %vm3285, %v4423, 0.0
        %v4464 = vsel %vm3286, %v4422, 0.0
        %v4465 = vsel %vm3287, %v4421, 0.0
        %v4466 = vsel %vm3288, %v4420, 0.0
        %v4467 = vsel %vm3289, %v4419, 0.0
        %v4468 = vsel %vm3290, %v4418, 0.0
        %v4469 = vsel %vm3291, %v4417, 0.0
        %v4470 = vsel %vm3292, %v4416, 0.0
        %v4471 = vsel %vm3293, %v4415, 0.0
        %v4472 = vsel %vm3294, %v4414, 0.0
        %v4473 = vsel %vm3295, %v4413, 0.0
        %v4474 = vsel %vm3296, %v4412, 0.0
        %v4475 = vsel %vm3297, %v4443, 0.0
        %v4476 = vld [vmem:[%s18] sm:$0xf]
        %v4477 = vpack.c.bf16 %v4349, %v4348
        %v4478 = vpack.c.bf16 %v4351, %v4350
        %v4479 = vpack.c.bf16 %v4353, %v4352
        %v4480 = vpack.c.bf16 %v4355, %v4354
        %v4481 = vpack.c.bf16 %v4357, %v4356
        %v4482 = vpack.c.bf16 %v4359, %v4358
        %v4483 = vpack.c.bf16 %v4361, %v4360
        %v4484 = vpack.c.bf16 %v4363, %v4362
        %v4485 = vpack.c.bf16 %v4365, %v4364
        %v4486 = vpack.c.bf16 %v4367, %v4366
        %v4487 = vpack.c.bf16 %v4369, %v4368
        %v4488 = vpack.c.bf16 %v4371, %v4370
        %v4489 = vpack.c.bf16 %v4373, %v4372
        %v4490 = vpack.c.bf16 %v4375, %v4374
        %v4491 = vpack.c.bf16 %v4377, %v4376
        %v4492 = vpack.c.bf16 %v4379, %v4378
        %v4493 = vld [vmem:[%s19] sm:$0xf]
        %v4494 = vpack.c.bf16 %v4253, %v4252
        %v4495 = vpack.c.bf16 %v4255, %v4254
        %v4496 = vpack.c.bf16 %v4257, %v4256
        %v4497 = vpack.c.bf16 %v4259, %v4258
        %v4498 = vpack.c.bf16 %v4261, %v4260
        %v4499 = vpack.c.bf16 %v4263, %v4262
        %v4500 = vpack.c.bf16 %v4265, %v4264
        %v4501 = vpack.c.bf16 %v4267, %v4266
        %v4502 = vpack.c.bf16 %v4269, %v4268
        %v4503 = vpack.c.bf16 %v4271, %v4270
        %v4504 = vpack.c.bf16 %v4273, %v4272
        %v4505 = vpack.c.bf16 %v4275, %v4274
        %v4506 = vpack.c.bf16 %v4277, %v4276
        %v4507 = vpack.c.bf16 %v4279, %v4278
        %v4508 = vpack.c.bf16 %v4281, %v4280
        %v4509 = vpack.c.bf16 %v4283, %v4282
        %4510 = vmatprep.subr.bf16.mxu0 0
        %4511 = vmatpush1.bf16.xpose.msra.mxu0 %v4501
        %4512 = vmatprep.subr.bf16.mxu0 0
        %4513 = vmatpush1.bf16.xpose.msra.mxu0 %v4500
        %4514 = vmatprep.subr.bf16.mxu0 0
        %4515 = vmatpush1.bf16.xpose.msra.mxu0 %v4499
        %4516 = vmatprep.subr.bf16.mxu0 0
        %4517 = vmatpush1.bf16.xpose.msra.mxu0 %v4498
        %4518 = vmatprep.subr.bf16.mxu0 0
        %4519 = vmatpush1.bf16.xpose.msra.mxu0 %v4497
        %4520 = vmatprep.subr.bf16.mxu0 0
        %4521 = vmatpush1.bf16.xpose.msra.mxu0 %v4496
        %4522 = vmatprep.subr.bf16.mxu0 0
        %4523 = vmatpush1.bf16.xpose.msra.mxu0 %v4495
        %4524 = vmatprep.subr.bf16.mxu0 0
        %4525 = vmatpush1.bf16.xpose.msra.mxu0 %v4494
        %4526 = vmatprep.subr.bf16.mxu0 0
        %4527 = vmatpush2.bf16.xpose.msra.mxu0 %v4509
        %4528 = vmatprep.subr.bf16.mxu0 0
        %4529 = vmatpush2.bf16.xpose.msra.mxu0 %v4508
        %4530 = vmatprep.subr.bf16.mxu0 0
        %4531 = vmatpush2.bf16.xpose.msra.mxu0 %v4507
        %4532 = vmatprep.subr.bf16.mxu0 0
        %4533 = vmatpush2.bf16.xpose.msra.mxu0 %v4506
        %4534 = vmatprep.subr.bf16.mxu0 0
        %4535 = vmatpush2.bf16.xpose.msra.mxu0 %v4505
        %4536 = vmatprep.subr.bf16.mxu0 0
        %4537 = vmatpush2.bf16.xpose.msra.mxu0 %v4504
        %4538 = vmatprep.subr.bf16.mxu0 0
        %4539 = vmatpush2.bf16.xpose.msra.mxu0 %v4503
        %4540 = vmatprep.subr.bf16.mxu0 0
        %4541 = vmatpush2.bf16.xpose.msra.mxu0 %v4502
        %4542 = vmatprep.mubr.bf16.mxu0 0
        %4543 = vmatmul.mubr.bf16.gmra.mxu0 %v4493
        %v4544 = vpop.f32.mrf.mxu0
        %v4545 = vadd.f32 0.0, %v4544
        %v4546 = vpop.f32.mrf.mxu0
        %v4547 = vadd.f32 0.0, %v4546
        %v4548 = vpop.f32.mrf.mxu0
        %v4549 = vpop.f32.mrf.mxu0
        %4550 = vdwg.mxu0
        %4551 = vmatprep.subr.bf16.mxu0 0
        %4552 = vmatpush1.bf16.xpose.msra.mxu0 %v4484
        %4553 = vmatprep.subr.bf16.mxu0 0
        %4554 = vmatpush1.bf16.xpose.msra.mxu0 %v4483
        %4555 = vmatprep.subr.bf16.mxu0 0
        %4556 = vmatpush1.bf16.xpose.msra.mxu0 %v4482
        %4557 = vmatprep.subr.bf16.mxu0 0
        %4558 = vmatpush1.bf16.xpose.msra.mxu0 %v4481
        %4559 = vmatprep.subr.bf16.mxu0 0
        %4560 = vmatpush1.bf16.xpose.msra.mxu0 %v4480
        %4561 = vmatprep.subr.bf16.mxu0 0
        %4562 = vmatpush1.bf16.xpose.msra.mxu0 %v4479
        %4563 = vmatprep.subr.bf16.mxu0 0
        %4564 = vmatpush1.bf16.xpose.msra.mxu0 %v4478
        %4565 = vmatprep.subr.bf16.mxu0 0
        %4566 = vmatpush1.bf16.xpose.msra.mxu0 %v4477
        %4567 = vmatprep.subr.bf16.mxu0 0
        %4568 = vmatpush2.bf16.xpose.msra.mxu0 %v4492
        %4569 = vmatprep.subr.bf16.mxu0 0
        %4570 = vmatpush2.bf16.xpose.msra.mxu0 %v4491
        %4571 = vmatprep.subr.bf16.mxu0 0
        %4572 = vmatpush2.bf16.xpose.msra.mxu0 %v4490
        %4573 = vmatprep.subr.bf16.mxu0 0
        %4574 = vmatpush2.bf16.xpose.msra.mxu0 %v4489
        %4575 = vmatprep.subr.bf16.mxu0 0
        %4576 = vmatpush2.bf16.xpose.msra.mxu0 %v4488
        %4577 = vmatprep.subr.bf16.mxu0 0
        %4578 = vmatpush2.bf16.xpose.msra.mxu0 %v4487
        %4579 = vmatprep.subr.bf16.mxu0 0
        %4580 = vmatpush2.bf16.xpose.msra.mxu0 %v4486
        %4581 = vmatprep.subr.bf16.mxu0 0
        %4582 = vmatpush2.bf16.xpose.msra.mxu0 %v4485
        %4583 = vmatprep.mubr.bf16.mxu0 0
        %4584 = vmatmul.mubr.bf16.gmra.mxu0 %v4476
        %v4585 = vpop.f32.mrf.mxu0
        %v4586 = vadd.f32 %v4545, %v4585
        %v4587 = vpop.f32.mrf.mxu0
        %v4588 = vadd.f32 %v4547, %v4587
        %v4589 = vpop.f32.mrf.mxu0
        %v4590 = vpop.f32.mrf.mxu0
        %4591 = vdwg.mxu0
        %v4592 = vld [vmem:[%s20] sm:$0xf]
        %v4593 = vpack.c.bf16 %v4445, %v4444
        %v4594 = vpack.c.bf16 %v4447, %v4446
        %v4595 = vpack.c.bf16 %v4449, %v4448
        %v4596 = vpack.c.bf16 %v4451, %v4450
        %v4597 = vpack.c.bf16 %v4453, %v4452
        %v4598 = vpack.c.bf16 %v4455, %v4454
        %v4599 = vpack.c.bf16 %v4457, %v4456
        %v4600 = vpack.c.bf16 %v4459, %v4458
        %v4601 = vpack.c.bf16 %v4461, %v4460
        %v4602 = vpack.c.bf16 %v4463, %v4462
        %v4603 = vpack.c.bf16 %v4465, %v4464
        %v4604 = vpack.c.bf16 %v4467, %v4466
        %v4605 = vpack.c.bf16 %v4469, %v4468
        %v4606 = vpack.c.bf16 %v4471, %v4470
        %v4607 = vpack.c.bf16 %v4473, %v4472
        %v4608 = vpack.c.bf16 %v4475, %v4474
        %4609 = vmatprep.subr.bf16.mxu0 0
        %4610 = vmatpush1.bf16.xpose.msra.mxu0 %v4600
        %4611 = vmatprep.subr.bf16.mxu0 0
        %4612 = vmatpush1.bf16.xpose.msra.mxu0 %v4599
        %4613 = vmatprep.subr.bf16.mxu0 0
        %4614 = vmatpush1.bf16.xpose.msra.mxu0 %v4598
        %4615 = vmatprep.subr.bf16.mxu0 0
        %4616 = vmatpush1.bf16.xpose.msra.mxu0 %v4597
        %4617 = vmatprep.subr.bf16.mxu0 0
        %4618 = vmatpush1.bf16.xpose.msra.mxu0 %v4596
        %4619 = vmatprep.subr.bf16.mxu0 0
        %4620 = vmatpush1.bf16.xpose.msra.mxu0 %v4595
        %4621 = vmatprep.subr.bf16.mxu0 0
        %4622 = vmatpush1.bf16.xpose.msra.mxu0 %v4594
        %4623 = vmatprep.subr.bf16.mxu0 0
        %4624 = vmatpush1.bf16.xpose.msra.mxu0 %v4593
        %4625 = vmatprep.subr.bf16.mxu0 0
        %4626 = vmatpush2.bf16.xpose.msra.mxu0 %v4608
        %4627 = vmatprep.subr.bf16.mxu0 0
        %4628 = vmatpush2.bf16.xpose.msra.mxu0 %v4607
        %4629 = vmatprep.subr.bf16.mxu0 0
        %4630 = vmatpush2.bf16.xpose.msra.mxu0 %v4606
        %4631 = vmatprep.subr.bf16.mxu0 0
        %4632 = vmatpush2.bf16.xpose.msra.mxu0 %v4605
        %4633 = vmatprep.subr.bf16.mxu0 0
        %4634 = vmatpush2.bf16.xpose.msra.mxu0 %v4604
        %4635 = vmatprep.subr.bf16.mxu0 0
        %4636 = vmatpush2.bf16.xpose.msra.mxu0 %v4603
        %4637 = vmatprep.subr.bf16.mxu0 0
        %4638 = vmatpush2.bf16.xpose.msra.mxu0 %v4602
        %4639 = vmatprep.subr.bf16.mxu0 0
        %4640 = vmatpush2.bf16.xpose.msra.mxu0 %v4601
        %4641 = vmatprep.mubr.bf16.mxu0 0
        %4642 = vmatmul.mubr.bf16.gmra.mxu0 %v4592
        %v4643 = vpop.f32.mrf.mxu0
        %v4644 = vadd.f32 0.0, %v4643
        %v4645 = vpop.f32.mrf.mxu0
        %v4646 = vadd.f32 0.0, %v4645
        %v4647 = vpop.f32.mrf.mxu0
        %v4648 = vpop.f32.mrf.mxu0
        %4649 = vdwg.mxu0
        %v4650 = vadd.f32 %v4586, %v4644
        %v4651 = vadd.f32 %v4588, %v4646
        %s4652 = sld [smem:[#allocation2]]
        %v4653 = vstv %s4652
        %v4654 = vadd.f32 %v4650, %v4653
        %v4655 = vadd.f32 %v4651, %v4653
        %v4656 = vtanh.pop %v4654
        %v4657 = vtanh.pop %v4655
        %v4660 = vcombine.low %v4656, %v4657
        %v4662 = vunpack.c.l.s4 1966171168
        %v4663 = vunpack.c.0.s8 %v4662
        %v4664 = vlaneseq
        %v4665 = vshrl.u32 %v4664, 7
        %v4666 = vsub.s32 %v4663, %v4665
        %v4667 = vrot.slane %v4660, %v4666
        %v4669 = vunpack.c.l.s4 1966171168
        %v4670 = vunpack.c.0.s8 %v4669
        %v4671 = vlaneseq
        %v4672 = vshrl.u32 %v4671, 7
        %v4673 = vsub.s32 %v4670, %v4672
        %v4674 = vrot.slane %v4667, %v4673
        %v4676 = vlaneseq
        %vm4677 = vcmp.ge.s32.totalorder %v4676, 0
        %vm4678 = vcmp.lt.s32.totalorder %v4676, 256
        %vm4679 = vmand %vm4677, %vm4678
        %4680 = vst.msk [vmem:[%s847] sm:$0x3] %vm4679, %v4674
        %s4681 = sand.u32 %s519, 1
        %s4682 = scalar_lea.sflag [#allocation5], %s4681
        %s4683 = sand.u32 %s519, 1
        %s4684 = smul.addr %s4683, 2
        %s4685 = scalar_lea.vmem [#allocation23], %s4684
        // Predicated region
        $region157: #{tpu_custom_call.1} parent=107 // pred_check
          %p4686 = pneg %p529
        $region158: #{tpu_custom_call.1} parent=107 // pred_check_branch
          %4688 = sbr.rel (%p4686) target = $region160
        $region159: #{tpu_custom_call.1} parent=107 // pred_region
          %s4690 = ssub.s32 32, 32
          %4691 = vsyncadd %s4682, %s4690
          %s4692 = smul.addr %s44, 2
          %s4693 = smul.addr %s4692, 16
          %s4694 = scalar_lea.hbm %s22, %s4693
          %s4696 = sshll.u32 %s4685, 4
          %s4697 = int_to_ptr.vmem [resolvable:$true] %s4696
          %4699 = dma.vmem_to_hbm [thread:$0]  %s4697, 32, %s4694, %s4682
        $region160: #{tpu_custom_call.1} parent=107 // pred_fallthru
          _
      $region108: #{tpu_custom_call.1} parent=5 // pred_fallthru
        _
      %p4700 = scmp.le.s32.totalorder 2, %s39
      // Predicated region
      $region161: #{tpu_custom_call.1} parent=5 // pred_check
        %p4701 = pneg %p4700
      $region162: #{tpu_custom_call.1} parent=5 // pred_check_branch
        %4703 = sbr.rel (%p4701) target = $region164
      $region163: #{tpu_custom_call.1} parent=5 // pred_region
        %s4704 = ssub.s32 %s39, 2
        // Predicated region
        $region165: #{tpu_custom_call.1} parent=163 // pred_check
          %p4705 = pneg %p535
        $region166: #{tpu_custom_call.1} parent=163 // pred_check_branch
          %4707 = sbr.rel (%p4705) target = $region168
        $region167: #{tpu_custom_call.1} parent=163 // pred_region
          %s4708 = sand.u32 %s520, 1
          %s4709 = scalar_lea.sflag [#allocation5], %s4708
          %s4710 = sand.u32 %s520, 1
          %s4711 = smul.addr %s4710, 2
          %s4712 = scalar_lea.vmem [#allocation23], %s4711
          %4713 = dma.done %s4709, 32
        $region168: #{tpu_custom_call.1} parent=163 // pred_fallthru
          _
      $region164: #{tpu_custom_call.1} parent=5 // pred_fallthru
        _
    $region6: #{tpu_custom_call.1} parent=1 // loop_footer
      %s43 = sadd.s32 1, %s39
    $region7: #{tpu_custom_call.1} parent=1 // loop_footer_branch
      %38 = sbr.rel target = $region3
    $region8: #{tpu_custom_call.1} parent=1 // loop_exit
      _
    %4714 = vsyncpa [#allocation4], 1
    %s4715 = scalar_lea.sflag [#allocation4], 1
    %4716 = vsyncpa %s4715, 1
    %4717 = vsyncpa [#allocation7], 1
    %4718 = vsyncpa [#allocation10], 1
    %4719 = vsyncpa [#allocation13], 1
    %4720 = vsyncpa [#allocation16], 1
    %4721 = vsyncpa [#allocation19], 1
    %4722 = vsyncpa [#allocation22], 1
    %4723 = vsyncpa [#allocation5], 1
    %s4724 = scalar_lea.sflag [#allocation5], 1
    %4725 = vsyncpa %s4724, 1

</llo_original>
